<compile_context>
chip_gen: v7x
topology: tpu7x:2x2x1
jax: 0.10.0
libtpu: 0.0.40
codegen_flags: <defaults>
</compile_context>

<pallas_src>
import functools

import jax
import jax.numpy as jnp
from jax.experimental import pallas as pl
from jax.experimental.pallas import tpu as pltpu

K = 3          # kernel size of both ConvTranspose2d layers
P = K - 1      # "full" padding per side for a stride-1/pad-0 transposed conv


def _fused_decoder_kernel(x_ref, mask_ref, w1_ref, b1_ref, w2_ref, b2_ref,
                          o_ref, mid_ref, *, c_in, c1, c2, wbuf, r1, ho2):
    """Both ConvTranspose+ReLU layers for one batch element (implicit GEMM).

    x_ref   : (1, c_in, h1*wbuf)  input embedded in a zero canvas, flattened
    mask_ref: (1, r1*wbuf)        1.0 on the true layer-1 interior, else 0.0
    w1_ref  : (K*K, c1, c_in)     per-tap equivalent-conv weights, layer 1
    b1_ref  : (c1, 1)
    w2_ref  : (K*K, c2, c1)       per-tap equivalent-conv weights, layer 2
    b2_ref  : (c2, 1)
    o_ref   : (1, c2, ho2*wbuf)   flat output (columns >= true width discarded)
    mid_ref : VMEM (c1, r1*wbuf)  zero-padded layer-1 activation (flat)
    """
    len1 = r1 * wbuf
    len2 = ho2 * wbuf

    # ---- layer 1: 9 taps -> 9 small MXU matmuls, f32 accumulation ----------
    acc1 = jnp.zeros((c1, len1), jnp.float32)
    for t in range(K * K):
        kh, kw = divmod(t, K)
        off = kh * wbuf + kw
        patch = x_ref[0, :, off:off + len1].astype(jnp.float32)
        acc1 = acc1 + jnp.dot(w1_ref[t].astype(jnp.float32), patch,
                              preferred_element_type=jnp.float32)

    # Bias + ReLU, then zero everything outside the true interior: the scratch
    # then IS the zero-padded layer-2 input, resident in VMEM.
    b1 = b1_ref[...].astype(jnp.float32)
    mid_ref[...] = mask_ref[...] * jnp.maximum(acc1 + b1, 0.0)

    # ---- layer 2: same implicit GEMM over the VMEM-resident activation -----
    acc2 = jnp.zeros((c2, len2), jnp.float32)
    for t in range(K * K):
        kh, kw = divmod(t, K)
        off = kh * wbuf + kw
        patch = mid_ref[:, off:off + len2]
        acc2 = acc2 + jnp.dot(w2_ref[t].astype(jnp.float32), patch,
                              preferred_element_type=jnp.float32)
    b2 = b2_ref[...].astype(jnp.float32)
    out = jnp.maximum(acc2 + b2, 0.0)
    o_ref[...] = out[None].astype(o_ref.dtype)


def prepare_decoder_params(params):
    """One-time weight re-layout (hoisted out of the per-forward wrapper)."""
    def taps(wt):  # PyTorch ConvTranspose2d layout: (c_in, c_out, K, K)
        c_in, c_out, k, _ = wt.shape
        w = jnp.flip(wt, axis=(2, 3))          # flip spatial taps
        w = jnp.transpose(w, (2, 3, 1, 0))     # (K, K, c_out, c_in)
        return w.reshape(k * k, c_out, c_in).astype(jnp.float32)

    return {
        "w1": taps(params["dec1_w"]),
        "b1": params["dec1_b"].reshape(-1, 1).astype(jnp.float32),
        "w2": taps(params["dec2_w"]),
        "b2": params["dec2_b"].reshape(-1, 1).astype(jnp.float32),
    }


@jax.jit
def decoder_forward(x, prepped):
    """Forward pass matching the PyTorch Decoder module."""
    n, c_in, h, w = x.shape
    c1 = prepped["b1"].shape[0]
    c2 = prepped["b2"].shape[0]

    ho1, wo1 = h + P, w + P            # layer-1 output spatial (18, 18)
    ho2, wo2 = ho1 + P, wo1 + P        # layer-2 output spatial (20, 20)
    wbuf = w + 4 * P                   # flat row stride of every buffer (24)
    r1 = ho1 + 2 * P + 1               # layer-1 GEMM rows: 22 meaningful + tail
    h1 = r1 + P + 1                    # rows of the embedded-input canvas (26)

    # Embed x (with the 2*(K-1)-wide zero border that provides padding for
    # BOTH layers) into an (h1, wbuf) canvas and flatten.  Tiny wrapper-side op.
    x1 = jnp.pad(x, ((0, 0), (0, 0),
                     (2 * P, h1 - 2 * P - h),
                     (2 * P, wbuf - 2 * P - w)))
    x1 = x1.reshape(n, c_in, h1 * wbuf)

    # 1.0 exactly on the true 18x18 layer-1 interior of the flat (r1, wbuf) grid.
    row = jnp.arange(r1)[:, None]
    col = jnp.arange(wbuf)[None, :]
    interior = (row >= P) & (row < P + ho1) & (col >= P) & (col < P + wo1)
    mask = interior.astype(jnp.float32).reshape(1, r1 * wbuf)

    kernel = functools.partial(_fused_decoder_kernel, c_in=c_in, c1=c1, c2=c2,
                               wbuf=wbuf, r1=r1, ho2=ho2)

    out_flat = pl.pallas_call(
        kernel,
        out_shape=jax.ShapeDtypeStruct((n, c2, ho2 * wbuf), x.dtype),
        grid=(n,),
        in_specs=[
            pl.BlockSpec((1, c_in, h1 * wbuf), lambda b: (b, 0, 0)),
            pl.BlockSpec((1, r1 * wbuf), lambda b: (0, 0)),
            pl.BlockSpec((K * K, c1, c_in), lambda b: (0, 0, 0)),
            pl.BlockSpec((c1, 1), lambda b: (0, 0)),
            pl.BlockSpec((K * K, c2, c1), lambda b: (0, 0, 0)),
            pl.BlockSpec((c2, 1), lambda b: (0, 0)),
        ],
        out_specs=pl.BlockSpec((1, c2, ho2 * wbuf), lambda b: (b, 0, 0)),
        scratch_shapes=[pltpu.VMEM((c1, r1 * wbuf), jnp.float32)],
        compiler_params=pltpu.CompilerParams(
            dimension_semantics=("parallel",)),
    )(x1, mask, prepped["w1"], prepped["b1"], prepped["w2"], prepped["b2"])

    # Un-flatten and crop the discarded columns.
    return out_flat.reshape(n, c2, ho2, wbuf)[:, :, :, :wo2]


def _reference_forward(x, params):
    """Pure-JAX reference (lax conv) for verification."""
    def ct_relu(x, wt, b):
        k = wt.shape[2]
        w_conv = jnp.transpose(jnp.flip(wt, axis=(2, 3)), (1, 0, 2, 3))
        y = jax.lax.conv_general_dilated(
            x, w_conv, window_strides=(1, 1),
            padding=[(k - 1, k - 1), (k - 1, k - 1)],
            dimension_numbers=("NCHW", "OIHW", "NCHW"),
        )
        return jnp.maximum(y + b[None, :, None, None], 0.0)

    x = ct_relu(x, params["dec1_w"], params["dec1_b"])
    x = ct_relu(x, params["dec2_w"], params["dec2_b"])
    return x


def init_params():
    """Deterministic synthetic parameters with the module's shapes."""
    k1, k2, k3, k4 = jax.random.split(jax.random.PRNGKey(42), 4)
    return {
        # ConvTranspose2d weight layout: (in_channels, out_channels, kH, kW)
        "dec1_w": jax.random.normal(k1, (4, 8, 3, 3), jnp.float32) * 0.1,
        "dec1_b": jax.random.normal(k2, (8,), jnp.float32) * 0.1,
        "dec2_w": jax.random.normal(k3, (8, 3, 3, 3), jnp.float32) * 0.1,
        "dec2_b": jax.random.normal(k4, (3,), jnp.float32) * 0.1,
    }


if __name__ == "__main__":
    params = init_params()
    prepped = prepare_decoder_params(params)   # one-time weight re-layout

    x = jax.random.normal(jax.random.PRNGKey(0), (2, 4, 16, 16), jnp.float32)

    out = jax.block_until_ready(decoder_forward(x, prepped))
    assert out.shape == (2, 3, 20, 20), out.shape

    ref = jax.block_until_ready(_reference_forward(x, params))
    assert jnp.allclose(out, ref, atol=1e-4, rtol=1e-4), "mismatch vs reference"

    print("KERNEL_OK")
</pallas_src>

<mosaic_0001>
module attributes {stable_mosaic.version = 11 : i64} {
  func.func @_fused_decoder_kernel(%arg0: i32, %arg1: memref<1x4x624xf32, #tpu.memory_space<vmem>>, %arg2: memref<1x552xf32, #tpu.memory_space<vmem>>, %arg3: memref<9x8x4xf32, #tpu.memory_space<vmem>>, %arg4: memref<8x1xf32, #tpu.memory_space<vmem>>, %arg5: memref<9x3x8xf32, #tpu.memory_space<vmem>>, %arg6: memref<3x1xf32, #tpu.memory_space<vmem>>, %arg7: memref<1x3x480xf32, #tpu.memory_space<vmem>>, %arg8: memref<8x552xf32, #tpu.memory_space<vmem>>) attributes {dimension_semantics = [#tpu.dimension_semantics<parallel>], iteration_bounds = array<i64: 2>, scalar_prefetch = 0 : i64, scratch_operands = 1 : i64, tpu.core_type = #tpu.core_type<tc>, window_params = [{transform_indices = @transform_0, window_bounds = array<i64: 1, 4, 624>}, {pipeline_mode = #tpu.pipeline_mode<synchronous>, transform_indices = @transform_1, window_bounds = array<i64: 1, 552>}, {pipeline_mode = #tpu.pipeline_mode<synchronous>, transform_indices = @transform_2, window_bounds = array<i64: 9, 8, 4>}, {pipeline_mode = #tpu.pipeline_mode<synchronous>, transform_indices = @transform_3, window_bounds = array<i64: 8, 1>}, {pipeline_mode = #tpu.pipeline_mode<synchronous>, transform_indices = @transform_4, window_bounds = array<i64: 9, 3, 8>}, {pipeline_mode = #tpu.pipeline_mode<synchronous>, transform_indices = @transform_5, window_bounds = array<i64: 3, 1>}, {transform_indices = @transform_6, window_bounds = array<i64: 1, 3, 480>}]} {
    %cst = arith.constant 0.000000e+00 : f32
    %0 = vector.broadcast %cst : f32 to vector<8x552xf32>
    %c0 = arith.constant 0 : index
    %c0_0 = arith.constant 0 : index
    %c0_1 = arith.constant 0 : index
    %1 = vector.load %arg1[%c0, %c0_0, %c0_1] : memref<1x4x624xf32, #tpu.memory_space<vmem>>, vector<1x4x552xf32>
    %2 = vector.shape_cast %1 : vector<1x4x552xf32> to vector<4x552xf32>
    %c0_2 = arith.constant 0 : index
    %c0_3 = arith.constant 0 : index
    %c0_4 = arith.constant 0 : index
    %3 = vector.load %arg3[%c0_2, %c0_3, %c0_4] : memref<9x8x4xf32, #tpu.memory_space<vmem>>, vector<1x8x4xf32>
    %4 = vector.shape_cast %3 : vector<1x8x4xf32> to vector<8x4xf32>
    %cst_5 = arith.constant dense<0.000000e+00> : vector<8x552xf32>
    %5 = tpu.matmul %4, %2, %cst_5 {dimension_numbers = #tpu.dot_dimension_numbers<[1], [0], [0], [1], [0, 0, 1, 1], [], []>} : vector<8x4xf32>, vector<4x552xf32>, vector<8x552xf32> -> vector<8x552xf32>
    %6 = arith.addf %0, %5 : vector<8x552xf32>
    %c0_6 = arith.constant 0 : index
    %c0_7 = arith.constant 0 : index
    %c1 = arith.constant 1 : index
    %7 = vector.load %arg1[%c0_6, %c0_7, %c1] : memref<1x4x624xf32, #tpu.memory_space<vmem>>, vector<1x4x552xf32>
    %8 = vector.shape_cast %7 : vector<1x4x552xf32> to vector<4x552xf32>
    %c1_8 = arith.constant 1 : index
    %c0_9 = arith.constant 0 : index
    %c0_10 = arith.constant 0 : index
    %9 = vector.load %arg3[%c1_8, %c0_9, %c0_10] : memref<9x8x4xf32, #tpu.memory_space<vmem>>, vector<1x8x4xf32>
    %10 = vector.shape_cast %9 : vector<1x8x4xf32> to vector<8x4xf32>
    %cst_11 = arith.constant dense<0.000000e+00> : vector<8x552xf32>
    %11 = tpu.matmul %10, %8, %cst_11 {dimension_numbers = #tpu.dot_dimension_numbers<[1], [0], [0], [1], [0, 0, 1, 1], [], []>} : vector<8x4xf32>, vector<4x552xf32>, vector<8x552xf32> -> vector<8x552xf32>
    %12 = arith.addf %6, %11 : vector<8x552xf32>
    %c0_12 = arith.constant 0 : index
    %c0_13 = arith.constant 0 : index
    %c2 = arith.constant 2 : index
    %13 = vector.load %arg1[%c0_12, %c0_13, %c2] : memref<1x4x624xf32, #tpu.memory_space<vmem>>, vector<1x4x552xf32>
    %14 = vector.shape_cast %13 : vector<1x4x552xf32> to vector<4x552xf32>
    %c2_14 = arith.constant 2 : index
    %c0_15 = arith.constant 0 : index
    %c0_16 = arith.constant 0 : index
    %15 = vector.load %arg3[%c2_14, %c0_15, %c0_16] : memref<9x8x4xf32, #tpu.memory_space<vmem>>, vector<1x8x4xf32>
    %16 = vector.shape_cast %15 : vector<1x8x4xf32> to vector<8x4xf32>
    %cst_17 = arith.constant dense<0.000000e+00> : vector<8x552xf32>
    %17 = tpu.matmul %16, %14, %cst_17 {dimension_numbers = #tpu.dot_dimension_numbers<[1], [0], [0], [1], [0, 0, 1, 1], [], []>} : vector<8x4xf32>, vector<4x552xf32>, vector<8x552xf32> -> vector<8x552xf32>
    %18 = arith.addf %12, %17 : vector<8x552xf32>
    %c0_18 = arith.constant 0 : index
    %c0_19 = arith.constant 0 : index
    %c24 = arith.constant 24 : index
    %19 = vector.load %arg1[%c0_18, %c0_19, %c24] : memref<1x4x624xf32, #tpu.memory_space<vmem>>, vector<1x4x552xf32>
    %20 = vector.shape_cast %19 : vector<1x4x552xf32> to vector<4x552xf32>
    %c3 = arith.constant 3 : index
    %c0_20 = arith.constant 0 : index
    %c0_21 = arith.constant 0 : index
    %21 = vector.load %arg3[%c3, %c0_20, %c0_21] : memref<9x8x4xf32, #tpu.memory_space<vmem>>, vector<1x8x4xf32>
    %22 = vector.shape_cast %21 : vector<1x8x4xf32> to vector<8x4xf32>
    %cst_22 = arith.constant dense<0.000000e+00> : vector<8x552xf32>
    %23 = tpu.matmul %22, %20, %cst_22 {dimension_numbers = #tpu.dot_dimension_numbers<[1], [0], [0], [1], [0, 0, 1, 1], [], []>} : vector<8x4xf32>, vector<4x552xf32>, vector<8x552xf32> -> vector<8x552xf32>
    %24 = arith.addf %18, %23 : vector<8x552xf32>
    %c0_23 = arith.constant 0 : index
    %c0_24 = arith.constant 0 : index
    %c25 = arith.constant 25 : index
    %25 = vector.load %arg1[%c0_23, %c0_24, %c25] : memref<1x4x624xf32, #tpu.memory_space<vmem>>, vector<1x4x552xf32>
    %26 = vector.shape_cast %25 : vector<1x4x552xf32> to vector<4x552xf32>
    %c4 = arith.constant 4 : index
    %c0_25 = arith.constant 0 : index
    %c0_26 = arith.constant 0 : index
    %27 = vector.load %arg3[%c4, %c0_25, %c0_26] : memref<9x8x4xf32, #tpu.memory_space<vmem>>, vector<1x8x4xf32>
    %28 = vector.shape_cast %27 : vector<1x8x4xf32> to vector<8x4xf32>
    %cst_27 = arith.constant dense<0.000000e+00> : vector<8x552xf32>
    %29 = tpu.matmul %28, %26, %cst_27 {dimension_numbers = #tpu.dot_dimension_numbers<[1], [0], [0], [1], [0, 0, 1, 1], [], []>} : vector<8x4xf32>, vector<4x552xf32>, vector<8x552xf32> -> vector<8x552xf32>
    %30 = arith.addf %24, %29 : vector<8x552xf32>
    %c0_28 = arith.constant 0 : index
    %c0_29 = arith.constant 0 : index
    %c26 = arith.constant 26 : index
    %31 = vector.load %arg1[%c0_28, %c0_29, %c26] : memref<1x4x624xf32, #tpu.memory_space<vmem>>, vector<1x4x552xf32>
    %32 = vector.shape_cast %31 : vector<1x4x552xf32> to vector<4x552xf32>
    %c5 = arith.constant 5 : index
    %c0_30 = arith.constant 0 : index
    %c0_31 = arith.constant 0 : index
    %33 = vector.load %arg3[%c5, %c0_30, %c0_31] : memref<9x8x4xf32, #tpu.memory_space<vmem>>, vector<1x8x4xf32>
    %34 = vector.shape_cast %33 : vector<1x8x4xf32> to vector<8x4xf32>
    %cst_32 = arith.constant dense<0.000000e+00> : vector<8x552xf32>
    %35 = tpu.matmul %34, %32, %cst_32 {dimension_numbers = #tpu.dot_dimension_numbers<[1], [0], [0], [1], [0, 0, 1, 1], [], []>} : vector<8x4xf32>, vector<4x552xf32>, vector<8x552xf32> -> vector<8x552xf32>
    %36 = arith.addf %30, %35 : vector<8x552xf32>
    %c0_33 = arith.constant 0 : index
    %c0_34 = arith.constant 0 : index
    %c48 = arith.constant 48 : index
    %37 = vector.load %arg1[%c0_33, %c0_34, %c48] : memref<1x4x624xf32, #tpu.memory_space<vmem>>, vector<1x4x552xf32>
    %38 = vector.shape_cast %37 : vector<1x4x552xf32> to vector<4x552xf32>
    %c6 = arith.constant 6 : index
    %c0_35 = arith.constant 0 : index
    %c0_36 = arith.constant 0 : index
    %39 = vector.load %arg3[%c6, %c0_35, %c0_36] : memref<9x8x4xf32, #tpu.memory_space<vmem>>, vector<1x8x4xf32>
    %40 = vector.shape_cast %39 : vector<1x8x4xf32> to vector<8x4xf32>
    %cst_37 = arith.constant dense<0.000000e+00> : vector<8x552xf32>
    %41 = tpu.matmul %40, %38, %cst_37 {dimension_numbers = #tpu.dot_dimension_numbers<[1], [0], [0], [1], [0, 0, 1, 1], [], []>} : vector<8x4xf32>, vector<4x552xf32>, vector<8x552xf32> -> vector<8x552xf32>
    %42 = arith.addf %36, %41 : vector<8x552xf32>
    %c0_38 = arith.constant 0 : index
    %c0_39 = arith.constant 0 : index
    %c49 = arith.constant 49 : index
    %43 = vector.load %arg1[%c0_38, %c0_39, %c49] : memref<1x4x624xf32, #tpu.memory_space<vmem>>, vector<1x4x552xf32>
    %44 = vector.shape_cast %43 : vector<1x4x552xf32> to vector<4x552xf32>
    %c7 = arith.constant 7 : index
    %c0_40 = arith.constant 0 : index
    %c0_41 = arith.constant 0 : index
    %45 = vector.load %arg3[%c7, %c0_40, %c0_41] : memref<9x8x4xf32, #tpu.memory_space<vmem>>, vector<1x8x4xf32>
    %46 = vector.shape_cast %45 : vector<1x8x4xf32> to vector<8x4xf32>
    %cst_42 = arith.constant dense<0.000000e+00> : vector<8x552xf32>
    %47 = tpu.matmul %46, %44, %cst_42 {dimension_numbers = #tpu.dot_dimension_numbers<[1], [0], [0], [1], [0, 0, 1, 1], [], []>} : vector<8x4xf32>, vector<4x552xf32>, vector<8x552xf32> -> vector<8x552xf32>
    %48 = arith.addf %42, %47 : vector<8x552xf32>
    %c0_43 = arith.constant 0 : index
    %c0_44 = arith.constant 0 : index
    %c50 = arith.constant 50 : index
    %49 = vector.load %arg1[%c0_43, %c0_44, %c50] : memref<1x4x624xf32, #tpu.memory_space<vmem>>, vector<1x4x552xf32>
    %50 = vector.shape_cast %49 : vector<1x4x552xf32> to vector<4x552xf32>
    %c8 = arith.constant 8 : index
    %c0_45 = arith.constant 0 : index
    %c0_46 = arith.constant 0 : index
    %51 = vector.load %arg3[%c8, %c0_45, %c0_46] : memref<9x8x4xf32, #tpu.memory_space<vmem>>, vector<1x8x4xf32>
    %52 = vector.shape_cast %51 : vector<1x8x4xf32> to vector<8x4xf32>
    %cst_47 = arith.constant dense<0.000000e+00> : vector<8x552xf32>
    %53 = tpu.matmul %52, %50, %cst_47 {dimension_numbers = #tpu.dot_dimension_numbers<[1], [0], [0], [1], [0, 0, 1, 1], [], []>} : vector<8x4xf32>, vector<4x552xf32>, vector<8x552xf32> -> vector<8x552xf32>
    %54 = arith.addf %48, %53 : vector<8x552xf32>
    %c0_48 = arith.constant 0 : index
    %c0_49 = arith.constant 0 : index
    %55 = vector.load %arg4[%c0_48, %c0_49] : memref<8x1xf32, #tpu.memory_space<vmem>>, vector<8x1xf32>
    %c0_50 = arith.constant 0 : index
    %c0_51 = arith.constant 0 : index
    %56 = vector.load %arg2[%c0_50, %c0_51] : memref<1x552xf32, #tpu.memory_space<vmem>>, vector<1x552xf32>
    %57 = vector.broadcast %55 : vector<8x1xf32> to vector<8x552xf32>
    %58 = arith.addf %54, %57 : vector<8x552xf32>
    %cst_52 = arith.constant 0.000000e+00 : f32
    %59 = vector.broadcast %cst_52 : f32 to vector<8x552xf32>
    %60 = arith.maximumf %58, %59 : vector<8x552xf32>
    %61 = vector.broadcast %56 : vector<1x552xf32> to vector<8x552xf32>
    %62 = arith.mulf %61, %60 : vector<8x552xf32>
    %c0_53 = arith.constant 0 : index
    %c0_54 = arith.constant 0 : index
    %63 = vector.load %arg8[%c0_53, %c0_54] : memref<8x552xf32, #tpu.memory_space<vmem>>, vector<8x552xf32>
    tpu.vector_store %arg8[%c0_53, %c0_54], %62 {strides = array<i32>} : memref<8x552xf32, #tpu.memory_space<vmem>>, vector<8x552xf32>,
    %cst_55 = arith.constant 0.000000e+00 : f32
    %64 = vector.broadcast %cst_55 : f32 to vector<3x480xf32>
    %c0_56 = arith.constant 0 : index
    %c0_57 = arith.constant 0 : index
    %65 = vector.load %arg8[%c0_56, %c0_57] : memref<8x552xf32, #tpu.memory_space<vmem>>, vector<8x480xf32>
    %c0_58 = arith.constant 0 : index
    %c0_59 = arith.constant 0 : index
    %c0_60 = arith.constant 0 : index
    %66 = vector.load %arg5[%c0_58, %c0_59, %c0_60] : memref<9x3x8xf32, #tpu.memory_space<vmem>>, vector<1x3x8xf32>
    %67 = vector.shape_cast %66 : vector<1x3x8xf32> to vector<3x8xf32>
    %cst_61 = arith.constant dense<0.000000e+00> : vector<3x480xf32>
    %68 = tpu.matmul %67, %65, %cst_61 {dimension_numbers = #tpu.dot_dimension_numbers<[1], [0], [0], [1], [0, 0, 1, 1], [], []>} : vector<3x8xf32>, vector<8x480xf32>, vector<3x480xf32> -> vector<3x480xf32>
    %69 = arith.addf %64, %68 : vector<3x480xf32>
    %c0_62 = arith.constant 0 : index
    %c1_63 = arith.constant 1 : index
    %70 = vector.load %arg8[%c0_62, %c1_63] : memref<8x552xf32, #tpu.memory_space<vmem>>, vector<8x480xf32>
    %c1_64 = arith.constant 1 : index
    %c0_65 = arith.constant 0 : index
    %c0_66 = arith.constant 0 : index
    %71 = vector.load %arg5[%c1_64, %c0_65, %c0_66] : memref<9x3x8xf32, #tpu.memory_space<vmem>>, vector<1x3x8xf32>
    %72 = vector.shape_cast %71 : vector<1x3x8xf32> to vector<3x8xf32>
    %cst_67 = arith.constant dense<0.000000e+00> : vector<3x480xf32>
    %73 = tpu.matmul %72, %70, %cst_67 {dimension_numbers = #tpu.dot_dimension_numbers<[1], [0], [0], [1], [0, 0, 1, 1], [], []>} : vector<3x8xf32>, vector<8x480xf32>, vector<3x480xf32> -> vector<3x480xf32>
    %74 = arith.addf %69, %73 : vector<3x480xf32>
    %c0_68 = arith.constant 0 : index
    %c2_69 = arith.constant 2 : index
    %75 = vector.load %arg8[%c0_68, %c2_69] : memref<8x552xf32, #tpu.memory_space<vmem>>, vector<8x480xf32>
    %c2_70 = arith.constant 2 : index
    %c0_71 = arith.constant 0 : index
    %c0_72 = arith.constant 0 : index
    %76 = vector.load %arg5[%c2_70, %c0_71, %c0_72] : memref<9x3x8xf32, #tpu.memory_space<vmem>>, vector<1x3x8xf32>
    %77 = vector.shape_cast %76 : vector<1x3x8xf32> to vector<3x8xf32>
    %cst_73 = arith.constant dense<0.000000e+00> : vector<3x480xf32>
    %78 = tpu.matmul %77, %75, %cst_73 {dimension_numbers = #tpu.dot_dimension_numbers<[1], [0], [0], [1], [0, 0, 1, 1], [], []>} : vector<3x8xf32>, vector<8x480xf32>, vector<3x480xf32> -> vector<3x480xf32>
    %79 = arith.addf %74, %78 : vector<3x480xf32>
    %c0_74 = arith.constant 0 : index
    %c24_75 = arith.constant 24 : index
    %80 = vector.load %arg8[%c0_74, %c24_75] : memref<8x552xf32, #tpu.memory_space<vmem>>, vector<8x480xf32>
    %c3_76 = arith.constant 3 : index
    %c0_77 = arith.constant 0 : index
    %c0_78 = arith.constant 0 : index
    %81 = vector.load %arg5[%c3_76, %c0_77, %c0_78] : memref<9x3x8xf32, #tpu.memory_space<vmem>>, vector<1x3x8xf32>
    %82 = vector.shape_cast %81 : vector<1x3x8xf32> to vector<3x8xf32>
    %cst_79 = arith.constant dense<0.000000e+00> : vector<3x480xf32>
    %83 = tpu.matmul %82, %80, %cst_79 {dimension_numbers = #tpu.dot_dimension_numbers<[1], [0], [0], [1], [0, 0, 1, 1], [], []>} : vector<3x8xf32>, vector<8x480xf32>, vector<3x480xf32> -> vector<3x480xf32>
    %84 = arith.addf %79, %83 : vector<3x480xf32>
    %c0_80 = arith.constant 0 : index
    %c25_81 = arith.constant 25 : index
    %85 = vector.load %arg8[%c0_80, %c25_81] : memref<8x552xf32, #tpu.memory_space<vmem>>, vector<8x480xf32>
    %c4_82 = arith.constant 4 : index
    %c0_83 = arith.constant 0 : index
    %c0_84 = arith.constant 0 : index
    %86 = vector.load %arg5[%c4_82, %c0_83, %c0_84] : memref<9x3x8xf32, #tpu.memory_space<vmem>>, vector<1x3x8xf32>
    %87 = vector.shape_cast %86 : vector<1x3x8xf32> to vector<3x8xf32>
    %cst_85 = arith.constant dense<0.000000e+00> : vector<3x480xf32>
    %88 = tpu.matmul %87, %85, %cst_85 {dimension_numbers = #tpu.dot_dimension_numbers<[1], [0], [0], [1], [0, 0, 1, 1], [], []>} : vector<3x8xf32>, vector<8x480xf32>, vector<3x480xf32> -> vector<3x480xf32>
    %89 = arith.addf %84, %88 : vector<3x480xf32>
    %c0_86 = arith.constant 0 : index
    %c26_87 = arith.constant 26 : index
    %90 = vector.load %arg8[%c0_86, %c26_87] : memref<8x552xf32, #tpu.memory_space<vmem>>, vector<8x480xf32>
    %c5_88 = arith.constant 5 : index
    %c0_89 = arith.constant 0 : index
    %c0_90 = arith.constant 0 : index
    %91 = vector.load %arg5[%c5_88, %c0_89, %c0_90] : memref<9x3x8xf32, #tpu.memory_space<vmem>>, vector<1x3x8xf32>
    %92 = vector.shape_cast %91 : vector<1x3x8xf32> to vector<3x8xf32>
    %cst_91 = arith.constant dense<0.000000e+00> : vector<3x480xf32>
    %93 = tpu.matmul %92, %90, %cst_91 {dimension_numbers = #tpu.dot_dimension_numbers<[1], [0], [0], [1], [0, 0, 1, 1], [], []>} : vector<3x8xf32>, vector<8x480xf32>, vector<3x480xf32> -> vector<3x480xf32>
    %94 = arith.addf %89, %93 : vector<3x480xf32>
    %c0_92 = arith.constant 0 : index
    %c48_93 = arith.constant 48 : index
    %95 = vector.load %arg8[%c0_92, %c48_93] : memref<8x552xf32, #tpu.memory_space<vmem>>, vector<8x480xf32>
    %c6_94 = arith.constant 6 : index
    %c0_95 = arith.constant 0 : index
    %c0_96 = arith.constant 0 : index
    %96 = vector.load %arg5[%c6_94, %c0_95, %c0_96] : memref<9x3x8xf32, #tpu.memory_space<vmem>>, vector<1x3x8xf32>
    %97 = vector.shape_cast %96 : vector<1x3x8xf32> to vector<3x8xf32>
    %cst_97 = arith.constant dense<0.000000e+00> : vector<3x480xf32>
    %98 = tpu.matmul %97, %95, %cst_97 {dimension_numbers = #tpu.dot_dimension_numbers<[1], [0], [0], [1], [0, 0, 1, 1], [], []>} : vector<3x8xf32>, vector<8x480xf32>, vector<3x480xf32> -> vector<3x480xf32>
    %99 = arith.addf %94, %98 : vector<3x480xf32>
    %c0_98 = arith.constant 0 : index
    %c49_99 = arith.constant 49 : index
    %100 = vector.load %arg8[%c0_98, %c49_99] : memref<8x552xf32, #tpu.memory_space<vmem>>, vector<8x480xf32>
    %c7_100 = arith.constant 7 : index
    %c0_101 = arith.constant 0 : index
    %c0_102 = arith.constant 0 : index
    %101 = vector.load %arg5[%c7_100, %c0_101, %c0_102] : memref<9x3x8xf32, #tpu.memory_space<vmem>>, vector<1x3x8xf32>
    %102 = vector.shape_cast %101 : vector<1x3x8xf32> to vector<3x8xf32>
    %cst_103 = arith.constant dense<0.000000e+00> : vector<3x480xf32>
    %103 = tpu.matmul %102, %100, %cst_103 {dimension_numbers = #tpu.dot_dimension_numbers<[1], [0], [0], [1], [0, 0, 1, 1], [], []>} : vector<3x8xf32>, vector<8x480xf32>, vector<3x480xf32> -> vector<3x480xf32>
    %104 = arith.addf %99, %103 : vector<3x480xf32>
    %c0_104 = arith.constant 0 : index
    %c50_105 = arith.constant 50 : index
    %105 = vector.load %arg8[%c0_104, %c50_105] : memref<8x552xf32, #tpu.memory_space<vmem>>, vector<8x480xf32>
    %c8_106 = arith.constant 8 : index
    %c0_107 = arith.constant 0 : index
    %c0_108 = arith.constant 0 : index
    %106 = vector.load %arg5[%c8_106, %c0_107, %c0_108] : memref<9x3x8xf32, #tpu.memory_space<vmem>>, vector<1x3x8xf32>
    %107 = vector.shape_cast %106 : vector<1x3x8xf32> to vector<3x8xf32>
    %cst_109 = arith.constant dense<0.000000e+00> : vector<3x480xf32>
    %108 = tpu.matmul %107, %105, %cst_109 {dimension_numbers = #tpu.dot_dimension_numbers<[1], [0], [0], [1], [0, 0, 1, 1], [], []>} : vector<3x8xf32>, vector<8x480xf32>, vector<3x480xf32> -> vector<3x480xf32>
    %109 = arith.addf %104, %108 : vector<3x480xf32>
    %c0_110 = arith.constant 0 : index
    %c0_111 = arith.constant 0 : index
    %110 = vector.load %arg6[%c0_110, %c0_111] : memref<3x1xf32, #tpu.memory_space<vmem>>, vector<3x1xf32>
    %111 = vector.broadcast %110 : vector<3x1xf32> to vector<3x480xf32>
    %112 = arith.addf %109, %111 : vector<3x480xf32>
    %cst_112 = arith.constant 0.000000e+00 : f32
    %113 = vector.broadcast %cst_112 : f32 to vector<3x480xf32>
    %114 = arith.maximumf %112, %113 : vector<3x480xf32>
    %115 = vector.shape_cast %114 : vector<3x480xf32> to vector<1x3x480xf32>
    %c0_113 = arith.constant 0 : index
    %c0_114 = arith.constant 0 : index
    %c0_115 = arith.constant 0 : index
    %116 = vector.load %arg7[%c0_113, %c0_114, %c0_115] : memref<1x3x480xf32, #tpu.memory_space<vmem>>, vector<1x3x480xf32>
    tpu.vector_store %arg7[%c0_113, %c0_114, %c0_115], %115 {strides = array<i32>} : memref<1x3x480xf32, #tpu.memory_space<vmem>>, vector<1x3x480xf32>,
    return
  }
  func.func @transform_0(%arg0: i32) -> (i32, i32, i32) {
    %c0_i32 = arith.constant 0 : i32
    %c0_i32_0 = arith.constant 0 : i32
    %c0_i32_1 = arith.constant 0 : i32
    return %arg0, %c0_i32, %c0_i32_0 : i32, i32, i32
  }
  func.func @transform_1(%arg0: i32) -> (i32, i32) {
    %c0_i32 = arith.constant 0 : i32
    %c0_i32_0 = arith.constant 0 : i32
    %c0_i32_1 = arith.constant 0 : i32
    return %c0_i32, %c0_i32_0 : i32, i32
  }
  func.func @transform_2(%arg0: i32) -> (i32, i32, i32) {
    %c0_i32 = arith.constant 0 : i32
    %c0_i32_0 = arith.constant 0 : i32
    %c0_i32_1 = arith.constant 0 : i32
    %c0_i32_2 = arith.constant 0 : i32
    return %c0_i32, %c0_i32_0, %c0_i32_1 : i32, i32, i32
  }
  func.func @transform_3(%arg0: i32) -> (i32, i32) {
    %c0_i32 = arith.constant 0 : i32
    %c0_i32_0 = arith.constant 0 : i32
    %c0_i32_1 = arith.constant 0 : i32
    return %c0_i32, %c0_i32_0 : i32, i32
  }
  func.func @transform_4(%arg0: i32) -> (i32, i32, i32) {
    %c0_i32 = arith.constant 0 : i32
    %c0_i32_0 = arith.constant 0 : i32
    %c0_i32_1 = arith.constant 0 : i32
    %c0_i32_2 = arith.constant 0 : i32
    return %c0_i32, %c0_i32_0, %c0_i32_1 : i32, i32, i32
  }
  func.func @transform_5(%arg0: i32) -> (i32, i32) {
    %c0_i32 = arith.constant 0 : i32
    %c0_i32_0 = arith.constant 0 : i32
    %c0_i32_1 = arith.constant 0 : i32
    return %c0_i32, %c0_i32_0 : i32, i32
  }
  func.func @transform_6(%arg0: i32) -> (i32, i32, i32) {
    %c0_i32 = arith.constant 0 : i32
    %c0_i32_0 = arith.constant 0 : i32
    %c0_i32_1 = arith.constant 0 : i32
    return %arg0, %c0_i32, %c0_i32_0 : i32, i32, i32
  }
}

</mosaic_0001>

<llo_original>
// kernel: decoder_forward.1
$region0: #{decoder_forward.1}
  #allocation0 [shape = 'u32[]', space=smem, size = 0x4, offset = 0x4, fixed_abs, tag = 'smem constant byte address 0x4 - core index']
  #allocation1 [shape = 'u32[144,128]{1,0:T(1,128)}', space=vmem, size = 0x12000, scoped, tag = 'internal scratch']
  #allocation2 [shape = 'f32[8,552]{1,0:T(8,128)}', space=vmem, size = 0x5000, scoped, tag = 'scratch operand']
  %s0 = inlined_call_operand.vmem [shape: f32[2,4,624], index: 0, kind: input, shape index: {}]
  %s1 = inlined_call_operand.vmem [shape: f32[1,552], index: 1, kind: input, shape index: {}]
  %s2 = inlined_call_operand.vmem [shape: f32[9,8,4], index: 2, kind: input, shape index: {}]
  %s3 = inlined_call_operand.vmem [shape: f32[8,1], index: 3, kind: input, shape index: {}]
  %s4 = inlined_call_operand.vmem [shape: f32[9,3,8], index: 4, kind: input, shape index: {}]
  %s5 = inlined_call_operand.vmem [shape: f32[3,1], index: 5, kind: input, shape index: {}]
  %s6 = inlined_call_operand.vmem [shape: f32[2,3,480], index: 6, kind: output, shape index: {}]
  %s7 = sld [smem:[#allocation0]]
  $region57: #{decoder_forward.1} parent=0
    _
  %s9 = ssub.s32 1, %s7
  %s10 = scalar_select 0, %s9, %s7
  loop: start=0, step=1, limit=4
  $region2: #{decoder_forward.1} parent=0 // loop_pre_header
    _
  $region3: #{decoder_forward.1} parent=0 // loop_header
    %s12 = sphi 0, %s16
    %p13 = scmp.ge.s32.totalorder %s12, 4
    %s22 = sphi 0, %s24
    %s25 = sphi 0, %s22
    %s26 = sphi 0, %s25
    %s42 = sphi 0, %s26
    %s46 = sphi 0, %s46
    %s48 = sphi 0, %s46
    %s49 = sphi 0, %s48
    %s63 = sphi 0, %s49
    %s67 = sphi 0, %s67
    %s69 = sphi 0, %s67
    %s70 = sphi 0, %s69
    %s84 = sphi 0, %s70
    %s88 = sphi 0, %s88
    %s90 = sphi 0, %s88
    %s91 = sphi 0, %s90
    %s105 = sphi 0, %s91
    %s109 = sphi 0, %s109
    %s111 = sphi 0, %s109
    %s112 = sphi 0, %s111
    %s126 = sphi 0, %s112
    %s130 = sphi 0, %s130
    %s132 = sphi 0, %s130
    %s133 = sphi 0, %s132
    %s147 = sphi 0, %s133
    %s153 = sphi 0, %s155
    %s156 = sphi 0, %s153
    %s157 = sphi 0, %s156
    %s173 = sphi 0, %s157
  $region4: #{decoder_forward.1} parent=0 // loop_header_branch
    %15 = sbr.rel (%p13) target = $region8
  $region5: #{decoder_forward.1} parent=0 // loop_body
    %s17 = ssub.s32 %s12, 1
    %s18 = ssub.s32 %s12, 2
    %s19 = sadd.s32 %s12, 1
    %s20 = ssub.s32 %s12, %s19
    %p21 = scmp.eq.s32.totalorder %s20, 0
    %s23 = sadd.s32 %s22, 1
    %s24 = scalar_select %p21, %s22, %s23
    %p27 = pneg %p21
    %p28 = scmp.eq.s32.totalorder %s12, 1
    %p29 = por %p27, %p28
    %p30 = scmp.ne.s32.totalorder %s22, %s25
    %p31 = scmp.eq.s32.totalorder %s12, 0
    %p32 = por %p30, %p31
    %p33 = scmp.ne.s32.totalorder %s22, %s25
    %p34 = scmp.eq.s32.totalorder %s17, 1
    %p35 = por %p33, %p34
    %p36 = scmp.ne.s32.totalorder %s25, %s26
    %p37 = scmp.eq.s32.totalorder %s17, 0
    %p38 = por %p36, %p37
    %p39 = scmp.ne.s32.totalorder %s25, %s26
    %p40 = scmp.eq.s32.totalorder %s18, 1
    %p41 = por %p39, %p40
    %p43 = scmp.ne.s32.totalorder %s26, %s42
    %p44 = scmp.eq.s32.totalorder %s18, 0
    %p45 = por %p43, %p44
    %s47 = sadd.s32 %s46, 1
    %p50 = scmp.eq.s32.totalorder %s12, 1
    %p51 = scmp.ne.s32.totalorder %s46, %s48
    %p52 = scmp.eq.s32.totalorder %s12, 0
    %p53 = por %p51, %p52
    %p54 = scmp.ne.s32.totalorder %s46, %s48
    %p55 = scmp.eq.s32.totalorder %s17, 1
    %p56 = por %p54, %p55
    %p57 = scmp.ne.s32.totalorder %s48, %s49
    %p58 = scmp.eq.s32.totalorder %s17, 0
    %p59 = por %p57, %p58
    %p60 = scmp.ne.s32.totalorder %s48, %s49
    %p61 = scmp.eq.s32.totalorder %s18, 1
    %p62 = por %p60, %p61
    %p64 = scmp.ne.s32.totalorder %s49, %s63
    %p65 = scmp.eq.s32.totalorder %s18, 0
    %p66 = por %p64, %p65
    %s68 = sadd.s32 %s67, 1
    %p71 = scmp.eq.s32.totalorder %s12, 1
    %p72 = scmp.ne.s32.totalorder %s67, %s69
    %p73 = scmp.eq.s32.totalorder %s12, 0
    %p74 = por %p72, %p73
    %p75 = scmp.ne.s32.totalorder %s67, %s69
    %p76 = scmp.eq.s32.totalorder %s17, 1
    %p77 = por %p75, %p76
    %p78 = scmp.ne.s32.totalorder %s69, %s70
    %p79 = scmp.eq.s32.totalorder %s17, 0
    %p80 = por %p78, %p79
    %p81 = scmp.ne.s32.totalorder %s69, %s70
    %p82 = scmp.eq.s32.totalorder %s18, 1
    %p83 = por %p81, %p82
    %p85 = scmp.ne.s32.totalorder %s70, %s84
    %p86 = scmp.eq.s32.totalorder %s18, 0
    %p87 = por %p85, %p86
    %s89 = sadd.s32 %s88, 1
    %p92 = scmp.eq.s32.totalorder %s12, 1
    %p93 = scmp.ne.s32.totalorder %s88, %s90
    %p94 = scmp.eq.s32.totalorder %s12, 0
    %p95 = por %p93, %p94
    %p96 = scmp.ne.s32.totalorder %s88, %s90
    %p97 = scmp.eq.s32.totalorder %s17, 1
    %p98 = por %p96, %p97
    %p99 = scmp.ne.s32.totalorder %s90, %s91
    %p100 = scmp.eq.s32.totalorder %s17, 0
    %p101 = por %p99, %p100
    %p102 = scmp.ne.s32.totalorder %s90, %s91
    %p103 = scmp.eq.s32.totalorder %s18, 1
    %p104 = por %p102, %p103
    %p106 = scmp.ne.s32.totalorder %s91, %s105
    %p107 = scmp.eq.s32.totalorder %s18, 0
    %p108 = por %p106, %p107
    %s110 = sadd.s32 %s109, 1
    %p113 = scmp.eq.s32.totalorder %s12, 1
    %p114 = scmp.ne.s32.totalorder %s109, %s111
    %p115 = scmp.eq.s32.totalorder %s12, 0
    %p116 = por %p114, %p115
    %p117 = scmp.ne.s32.totalorder %s109, %s111
    %p118 = scmp.eq.s32.totalorder %s17, 1
    %p119 = por %p117, %p118
    %p120 = scmp.ne.s32.totalorder %s111, %s112
    %p121 = scmp.eq.s32.totalorder %s17, 0
    %p122 = por %p120, %p121
    %p123 = scmp.ne.s32.totalorder %s111, %s112
    %p124 = scmp.eq.s32.totalorder %s18, 1
    %p125 = por %p123, %p124
    %p127 = scmp.ne.s32.totalorder %s112, %s126
    %p128 = scmp.eq.s32.totalorder %s18, 0
    %p129 = por %p127, %p128
    %s131 = sadd.s32 %s130, 1
    %p134 = scmp.eq.s32.totalorder %s12, 1
    %p135 = scmp.ne.s32.totalorder %s130, %s132
    %p136 = scmp.eq.s32.totalorder %s12, 0
    %p137 = por %p135, %p136
    %p138 = scmp.ne.s32.totalorder %s130, %s132
    %p139 = scmp.eq.s32.totalorder %s17, 1
    %p140 = por %p138, %p139
    %p141 = scmp.ne.s32.totalorder %s132, %s133
    %p142 = scmp.eq.s32.totalorder %s17, 0
    %p143 = por %p141, %p142
    %p144 = scmp.ne.s32.totalorder %s132, %s133
    %p145 = scmp.eq.s32.totalorder %s18, 1
    %p146 = por %p144, %p145
    %p148 = scmp.ne.s32.totalorder %s133, %s147
    %p149 = scmp.eq.s32.totalorder %s18, 0
    %p150 = por %p148, %p149
    %s151 = ssub.s32 %s12, %s19
    %p152 = scmp.eq.s32.totalorder %s151, 0
    %s154 = sadd.s32 %s153, 1
    %s155 = scalar_select %p152, %s153, %s154
    %p158 = pneg %p152
    %p159 = scmp.eq.s32.totalorder %s12, 1
    %p160 = por %p158, %p159
    %p161 = scmp.ne.s32.totalorder %s153, %s156
    %p162 = scmp.eq.s32.totalorder %s12, 0
    %p163 = por %p161, %p162
    %p164 = scmp.ne.s32.totalorder %s153, %s156
    %p165 = scmp.eq.s32.totalorder %s17, 1
    %p166 = por %p164, %p165
    %p167 = scmp.ne.s32.totalorder %s156, %s157
    %p168 = scmp.eq.s32.totalorder %s17, 0
    %p169 = por %p167, %p168
    %p170 = scmp.ne.s32.totalorder %s156, %s157
    %p171 = scmp.eq.s32.totalorder %s18, 1
    %p172 = por %p170, %p171
    %p174 = scmp.ne.s32.totalorder %s157, %s173
    %p175 = scmp.eq.s32.totalorder %s18, 0
    %p176 = por %p174, %p175
    %p177 = scmp.le.s32.totalorder 1, %s12
    %p178 = scmp.lt.s32.totalorder %s12, 3
    %p179 = pnand %p177, %p178
    %p180 = pneg %p179
    // Predicated region
    $region9: #{decoder_forward.1} parent=5 // pred_check
      _
    $region10: #{decoder_forward.1} parent=5 // pred_check_branch
      %182 = sbr.rel (%p179) target = $region12
    $region11: #{decoder_forward.1} parent=5 // pred_region
      %s183 = ssub.s32 %s12, 1
      // Predicated region
      $region13: #{decoder_forward.1} parent=11 // pred_check
        %p184 = pneg %p59
      $region14: #{decoder_forward.1} parent=11 // pred_check_branch
        %186 = sbr.rel (%p184) target = $region16
      $region15: #{decoder_forward.1} parent=11 // pred_region
        _
      $region16: #{decoder_forward.1} parent=11 // pred_fallthru
        _
      // Predicated region
      $region17: #{decoder_forward.1} parent=11 // pred_check
        %p187 = pneg %p80
      $region18: #{decoder_forward.1} parent=11 // pred_check_branch
        %189 = sbr.rel (%p187) target = $region20
      $region19: #{decoder_forward.1} parent=11 // pred_region
        _
      $region20: #{decoder_forward.1} parent=11 // pred_fallthru
        _
      // Predicated region
      $region21: #{decoder_forward.1} parent=11 // pred_check
        %p190 = pneg %p101
      $region22: #{decoder_forward.1} parent=11 // pred_check_branch
        %192 = sbr.rel (%p190) target = $region24
      $region23: #{decoder_forward.1} parent=11 // pred_region
        _
      $region24: #{decoder_forward.1} parent=11 // pred_fallthru
        _
      // Predicated region
      $region25: #{decoder_forward.1} parent=11 // pred_check
        %p193 = pneg %p122
      $region26: #{decoder_forward.1} parent=11 // pred_check_branch
        %195 = sbr.rel (%p193) target = $region28
      $region27: #{decoder_forward.1} parent=11 // pred_region
        _
      $region28: #{decoder_forward.1} parent=11 // pred_fallthru
        _
      // Predicated region
      $region29: #{decoder_forward.1} parent=11 // pred_check
        %p196 = pneg %p143
      $region30: #{decoder_forward.1} parent=11 // pred_check_branch
        %198 = sbr.rel (%p196) target = $region32
      $region31: #{decoder_forward.1} parent=11 // pred_region
        _
      $region32: #{decoder_forward.1} parent=11 // pred_fallthru
        _
    $region12: #{decoder_forward.1} parent=5 // pred_fallthru
      _
    %p199 = scmp.lt.s32.totalorder %s12, 2
    // Predicated region
    $region33: #{decoder_forward.1} parent=5 // pred_check
      %p200 = pneg %p199
    $region34: #{decoder_forward.1} parent=5 // pred_check_branch
      %202 = sbr.rel (%p200) target = $region36
    $region35: #{decoder_forward.1} parent=5 // pred_region
      // Predicated region
      $region37: #{decoder_forward.1} parent=35 // pred_check
        %p203 = pneg %p32
      $region38: #{decoder_forward.1} parent=35 // pred_check_branch
        %205 = sbr.rel (%p203) target = $region40
      $region39: #{decoder_forward.1} parent=35 // pred_region
        %p206 = scmp.lt.s32.totalorder %s12, 1
        %s207 = scalar_select %p206, %s12, 1
        %s208 = smul.addr %s207, 5
        %s209 = smul.addr %s208, 4
        %s210 = scalar_lea.vmem %s0, %s209
      $region40: #{decoder_forward.1} parent=35 // pred_fallthru
        _
    $region36: #{decoder_forward.1} parent=5 // pred_fallthru
      _
    %p211 = scmp.le.s32.totalorder 1, %s12
    %p212 = scmp.lt.s32.totalorder %s12, 3
    %p213 = pnand %p211, %p212
    %p214 = pneg %p213
    // Predicated region
    $region41: #{decoder_forward.1} parent=5 // pred_check
      _
    $region42: #{decoder_forward.1} parent=5 // pred_check_branch
      %216 = sbr.rel (%p213) target = $region44
    $region43: #{decoder_forward.1} parent=5 // pred_region
      %s217 = ssub.s32 %s12, 1
      %p218 = scmp.lt.s32.totalorder %s17, 1
      %s219 = scalar_select %p218, %s17, 1
      %s220 = smul.addr %s219, 5
      %s221 = smul.addr %s220, 4
      %s222 = scalar_lea.vmem %s0, %s221
      %p223 = pneg %p38
      %p224 = pneg %p35
      %p225 = pneg %p59
      %p226 = pneg %p56
      %p227 = pneg %p80
      %p228 = pneg %p77
      %p229 = pneg %p101
      %p230 = pneg %p98
      %p231 = pneg %p122
      %p232 = pneg %p119
      %p233 = pneg %p143
      %p234 = pneg %p140
      %p235 = pneg %p169
      %p236 = pneg %p166
      %p237 = scmp.lt.s32.totalorder %s17, 1
      %s238 = scalar_select %p237, %s17, 1
      %s239 = smul.addr %s238, 4
      %s240 = smul.addr %s239, 4
      %s241 = scalar_lea.vmem %s6, %s240
      %p242 = scmp.lt.s32.totalorder %s17, 1
      %s243 = scalar_select %p242, %s17, 1
      %s244 = smul.addr %s243, 5
      %s245 = smul.addr %s244, 4
      %s246 = scalar_lea.vmem %s0, %s245
      %p247 = scmp.lt.s32.totalorder %s17, 1
      %s248 = scalar_select %p247, %s17, 1
      %s249 = smul.addr %s248, 4
      %s250 = smul.addr %s249, 4
      %s251 = scalar_lea.vmem %s6, %s250
      %v252 = vld [vmem:[%s246] sm:$0xff]
      %v253 = vld [vmem:[%s246 + $0x8] sm:$0xff]
      %v254 = vld [vmem:[%s246 + $0x10] sm:$0xf]
      %v255 = vld [vmem:[%s2] sm:$0xff]
      %s256 = scalar_lea.vmem %s2, 8
      %v257 = vld [vmem:[%s256] sm:$0xff]
      %v261 = vcombine.high %v252, %v252
      %v262 = vcombine.high %v253, %v253
      %263 = vrot.lane.b32.xlu0 %v252, 127
      %v264 = vpop.permute.xlu0 %263
      %265 = vrot.lane.b32.xlu0 %v261, 127
      %v266 = vpop.permute.xlu0 %265
      %267 = vrot.lane.b32.xlu0 %v253, 127
      %v268 = vpop.permute.xlu0 %267
      %269 = vrot.lane.b32.xlu0 %v262, 127
      %v270 = vpop.permute.xlu0 %269
      %271 = vrot.lane.b32.xlu0 %v254, 127
      %v272 = vpop.permute.xlu0 %271
      %vm273 = vcmask 1039360
      %v274 = vsel %vm273, %v264, %v266
      %v275 = vsel %vm273, %v266, %v268
      %v276 = vsel %vm273, %v268, %v270
      %v277 = vsel %vm273, %v270, %v272
      %vm278 = vcmask 31744
      %v280 = vsel %vm278, %v257, 0
      %vm282 = vcmask 1043456
      %v283 = vsel %vm282, %v274, 0
      %v285 = vsel %vm282, %v275, 0
      %v287 = vsel %vm282, %v276, 0
      %v289 = vsel %vm282, %v277, 0
      %v291 = vsel %vm282, %v272, 0
      %293 = vmatprep.subr.mxu0 %v285
      %294 = vmatpush1.msra.mxu0 %v283
      %295 = vmatprep.subr.mxu0 0.0
      %296 = vmatpush1.msra.mxu0 0.0
      %297 = vmatprep.subr.mxu0 0.0
      %298 = vmatpush1.msra.mxu0 0.0
      %299 = vmatprep.subr.mxu0 0.0
      %300 = vmatpush1.msra.mxu0 0.0
      %301 = vmatprep.subr.mxu0 0.0
      %302 = vmatpush1.msra.mxu0 0.0
      %303 = vmatprep.subr.mxu0 0.0
      %304 = vmatpush1.msra.mxu0 0.0
      %305 = vmatprep.subr.mxu0 0.0
      %306 = vmatpush1.msra.mxu0 0.0
      %307 = vmatprep.subr.mxu0 0.0
      %308 = vmatpush1.msra.mxu0 0.0
      %309 = vmatprep.subr.mxu0 0.0
      %310 = vmatpush1.msra.mxu0 0.0
      %311 = vmatprep.subr.mxu0 0.0
      %312 = vmatpush1.msra.mxu0 0.0
      %313 = vmatprep.subr.mxu0 0.0
      %314 = vmatpush1.msra.mxu0 0.0
      %315 = vmatprep.subr.mxu0 0.0
      %316 = vmatpush1.msra.mxu0 0.0
      %317 = vmatprep.subr.mxu0 0.0
      %318 = vmatpush1.msra.mxu0 0.0
      %319 = vmatprep.subr.mxu0 0.0
      %320 = vmatpush1.msra.mxu0 0.0
      %321 = vmatprep.subr.mxu0 0.0
      %322 = vmatpush1.msra.mxu0 0.0
      %323 = vmatprep.subr.mxu0 0.0
      %324 = vmatpush1.msra.mxu0 0.0
      %325 = vmatprep.subr.mxu0 0.0
      %326 = vmatpush1.msra.mxu0 0.0
      %327 = vmatprep.subr.mxu0 0.0
      %328 = vmatpush1.msra.mxu0 0.0
      %329 = vmatprep.subr.mxu0 0.0
      %330 = vmatpush1.msra.mxu0 0.0
      %331 = vmatprep.subr.mxu0 0.0
      %332 = vmatpush1.msra.mxu0 0.0
      %333 = vmatprep.subr.mxu0 0.0
      %334 = vmatpush1.msra.mxu0 0.0
      %335 = vmatprep.subr.mxu0 0.0
      %336 = vmatpush1.msra.mxu0 0.0
      %337 = vmatprep.subr.mxu0 0.0
      %338 = vmatpush1.msra.mxu0 0.0
      %339 = vmatprep.subr.mxu0 0.0
      %340 = vmatpush1.msra.mxu0 0.0
      %341 = vmatprep.subr.mxu0 0.0
      %342 = vmatpush1.msra.mxu0 0.0
      %343 = vmatprep.subr.mxu0 0.0
      %344 = vmatpush1.msra.mxu0 0.0
      %345 = vmatprep.subr.mxu0 0.0
      %346 = vmatpush1.msra.mxu0 0.0
      %347 = vmatprep.subr.mxu0 0.0
      %348 = vmatpush1.msra.mxu0 0.0
      %349 = vmatprep.subr.mxu0 0.0
      %350 = vmatpush1.msra.mxu0 0.0
      %351 = vmatprep.subr.mxu0 0.0
      %352 = vmatpush1.msra.mxu0 0.0
      %353 = vmatprep.subr.mxu0 0.0
      %354 = vmatpush1.msra.mxu0 0.0
      %355 = vmatprep.subr.mxu0 0.0
      %356 = vmatpush1.msra.mxu0 0.0
      %357 = vmatprep.mubr.f32.mxu0 0.0
      %358 = vmatmul.mubr.f32.gmra.mrb[0].mxu0 %v280
      %v359 = vpop.f32.mrb[0].mxu0
      %v360 = vadd.f32 0.0, %v359
      %v361 = vpop.f32.mrb[0].mxu0
      %v362 = vadd.f32 0.0, %v361
      %363 = vdwg.mxu0
      %364 = vmatprep.subr.mxu0 %v289
      %365 = vmatpush1.msra.mxu0 %v287
      %366 = vmatprep.subr.mxu0 0.0
      %367 = vmatpush1.msra.mxu0 0.0
      %368 = vmatprep.subr.mxu0 0.0
      %369 = vmatpush1.msra.mxu0 0.0
      %370 = vmatprep.subr.mxu0 0.0
      %371 = vmatpush1.msra.mxu0 0.0
      %372 = vmatprep.subr.mxu0 0.0
      %373 = vmatpush1.msra.mxu0 0.0
      %374 = vmatprep.subr.mxu0 0.0
      %375 = vmatpush1.msra.mxu0 0.0
      %376 = vmatprep.subr.mxu0 0.0
      %377 = vmatpush1.msra.mxu0 0.0
      %378 = vmatprep.subr.mxu0 0.0
      %379 = vmatpush1.msra.mxu0 0.0
      %380 = vmatprep.subr.mxu0 0.0
      %381 = vmatpush1.msra.mxu0 0.0
      %382 = vmatprep.subr.mxu0 0.0
      %383 = vmatpush1.msra.mxu0 0.0
      %384 = vmatprep.subr.mxu0 0.0
      %385 = vmatpush1.msra.mxu0 0.0
      %386 = vmatprep.subr.mxu0 0.0
      %387 = vmatpush1.msra.mxu0 0.0
      %388 = vmatprep.subr.mxu0 0.0
      %389 = vmatpush1.msra.mxu0 0.0
      %390 = vmatprep.subr.mxu0 0.0
      %391 = vmatpush1.msra.mxu0 0.0
      %392 = vmatprep.subr.mxu0 0.0
      %393 = vmatpush1.msra.mxu0 0.0
      %394 = vmatprep.subr.mxu0 0.0
      %395 = vmatpush1.msra.mxu0 0.0
      %396 = vmatprep.subr.mxu0 0.0
      %397 = vmatpush1.msra.mxu0 0.0
      %398 = vmatprep.subr.mxu0 0.0
      %399 = vmatpush1.msra.mxu0 0.0
      %400 = vmatprep.subr.mxu0 0.0
      %401 = vmatpush1.msra.mxu0 0.0
      %402 = vmatprep.subr.mxu0 0.0
      %403 = vmatpush1.msra.mxu0 0.0
      %404 = vmatprep.subr.mxu0 0.0
      %405 = vmatpush1.msra.mxu0 0.0
      %406 = vmatprep.subr.mxu0 0.0
      %407 = vmatpush1.msra.mxu0 0.0
      %408 = vmatprep.subr.mxu0 0.0
      %409 = vmatpush1.msra.mxu0 0.0
      %410 = vmatprep.subr.mxu0 0.0
      %411 = vmatpush1.msra.mxu0 0.0
      %412 = vmatprep.subr.mxu0 0.0
      %413 = vmatpush1.msra.mxu0 0.0
      %414 = vmatprep.subr.mxu0 0.0
      %415 = vmatpush1.msra.mxu0 0.0
      %416 = vmatprep.subr.mxu0 0.0
      %417 = vmatpush1.msra.mxu0 0.0
      %418 = vmatprep.subr.mxu0 0.0
      %419 = vmatpush1.msra.mxu0 0.0
      %420 = vmatprep.subr.mxu0 0.0
      %421 = vmatpush1.msra.mxu0 0.0
      %422 = vmatprep.subr.mxu0 0.0
      %423 = vmatpush1.msra.mxu0 0.0
      %424 = vmatprep.subr.mxu0 0.0
      %425 = vmatpush1.msra.mxu0 0.0
      %426 = vmatprep.subr.mxu0 0.0
      %427 = vmatpush1.msra.mxu0 0.0
      %428 = vmatprep.mubr.f32.mxu0 0.0
      %429 = vmatmul.mubr.f32.gmra.mrb[0].mxu0 %v280
      %v430 = vpop.f32.mrb[0].mxu0
      %v431 = vadd.f32 0.0, %v430
      %v432 = vpop.f32.mrb[0].mxu0
      %v433 = vadd.f32 0.0, %v432
      %434 = vdwg.mxu0
      %435 = vmatprep.subr.mxu0 0.0
      %436 = vmatpush1.msra.mxu0 %v291
      %437 = vmatprep.subr.mxu0 0.0
      %438 = vmatpush1.msra.mxu0 0.0
      %439 = vmatprep.subr.mxu0 0.0
      %440 = vmatpush1.msra.mxu0 0.0
      %441 = vmatprep.subr.mxu0 0.0
      %442 = vmatpush1.msra.mxu0 0.0
      %443 = vmatprep.subr.mxu0 0.0
      %444 = vmatpush1.msra.mxu0 0.0
      %445 = vmatprep.subr.mxu0 0.0
      %446 = vmatpush1.msra.mxu0 0.0
      %447 = vmatprep.subr.mxu0 0.0
      %448 = vmatpush1.msra.mxu0 0.0
      %449 = vmatprep.subr.mxu0 0.0
      %450 = vmatpush1.msra.mxu0 0.0
      %451 = vmatprep.subr.mxu0 0.0
      %452 = vmatpush1.msra.mxu0 0.0
      %453 = vmatprep.subr.mxu0 0.0
      %454 = vmatpush1.msra.mxu0 0.0
      %455 = vmatprep.subr.mxu0 0.0
      %456 = vmatpush1.msra.mxu0 0.0
      %457 = vmatprep.subr.mxu0 0.0
      %458 = vmatpush1.msra.mxu0 0.0
      %459 = vmatprep.subr.mxu0 0.0
      %460 = vmatpush1.msra.mxu0 0.0
      %461 = vmatprep.subr.mxu0 0.0
      %462 = vmatpush1.msra.mxu0 0.0
      %463 = vmatprep.subr.mxu0 0.0
      %464 = vmatpush1.msra.mxu0 0.0
      %465 = vmatprep.subr.mxu0 0.0
      %466 = vmatpush1.msra.mxu0 0.0
      %467 = vmatprep.subr.mxu0 0.0
      %468 = vmatpush1.msra.mxu0 0.0
      %469 = vmatprep.subr.mxu0 0.0
      %470 = vmatpush1.msra.mxu0 0.0
      %471 = vmatprep.subr.mxu0 0.0
      %472 = vmatpush1.msra.mxu0 0.0
      %473 = vmatprep.subr.mxu0 0.0
      %474 = vmatpush1.msra.mxu0 0.0
      %475 = vmatprep.subr.mxu0 0.0
      %476 = vmatpush1.msra.mxu0 0.0
      %477 = vmatprep.subr.mxu0 0.0
      %478 = vmatpush1.msra.mxu0 0.0
      %479 = vmatprep.subr.mxu0 0.0
      %480 = vmatpush1.msra.mxu0 0.0
      %481 = vmatprep.subr.mxu0 0.0
      %482 = vmatpush1.msra.mxu0 0.0
      %483 = vmatprep.subr.mxu0 0.0
      %484 = vmatpush1.msra.mxu0 0.0
      %485 = vmatprep.subr.mxu0 0.0
      %486 = vmatpush1.msra.mxu0 0.0
      %487 = vmatprep.subr.mxu0 0.0
      %488 = vmatpush1.msra.mxu0 0.0
      %489 = vmatprep.subr.mxu0 0.0
      %490 = vmatpush1.msra.mxu0 0.0
      %491 = vmatprep.subr.mxu0 0.0
      %492 = vmatpush1.msra.mxu0 0.0
      %493 = vmatprep.subr.mxu0 0.0
      %494 = vmatpush1.msra.mxu0 0.0
      %495 = vmatprep.subr.mxu0 0.0
      %496 = vmatpush1.msra.mxu0 0.0
      %497 = vmatprep.subr.mxu0 0.0
      %498 = vmatpush1.msra.mxu0 0.0
      %499 = vmatprep.mubr.f32.mxu0 0.0
      %500 = vmatmul.mubr.f32.gmra.mrb[0].mxu0 %v280
      %v501 = vpop.f32.mrb[0].mxu0
      %v502 = vadd.f32 0.0, %v501
      %v503 = vpop.f32.mrb[0].mxu0
      %504 = vdwg.mxu0
      %v506 = vsel %vm278, %v255, 0
      %v508 = vsel %vm282, %v252, 0
      %v510 = vsel %vm282, %v261, 0
      %v512 = vsel %vm282, %v253, 0
      %v514 = vsel %vm282, %v262, 0
      %v516 = vsel %vm282, %v254, 0
      %518 = vmatprep.subr.mxu0 %v510
      %519 = vmatpush1.msra.mxu0 %v508
      %520 = vmatprep.subr.mxu0 0.0
      %521 = vmatpush1.msra.mxu0 0.0
      %522 = vmatprep.subr.mxu0 0.0
      %523 = vmatpush1.msra.mxu0 0.0
      %524 = vmatprep.subr.mxu0 0.0
      %525 = vmatpush1.msra.mxu0 0.0
      %526 = vmatprep.subr.mxu0 0.0
      %527 = vmatpush1.msra.mxu0 0.0
      %528 = vmatprep.subr.mxu0 0.0
      %529 = vmatpush1.msra.mxu0 0.0
      %530 = vmatprep.subr.mxu0 0.0
      %531 = vmatpush1.msra.mxu0 0.0
      %532 = vmatprep.subr.mxu0 0.0
      %533 = vmatpush1.msra.mxu0 0.0
      %534 = vmatprep.subr.mxu0 0.0
      %535 = vmatpush1.msra.mxu0 0.0
      %536 = vmatprep.subr.mxu0 0.0
      %537 = vmatpush1.msra.mxu0 0.0
      %538 = vmatprep.subr.mxu0 0.0
      %539 = vmatpush1.msra.mxu0 0.0
      %540 = vmatprep.subr.mxu0 0.0
      %541 = vmatpush1.msra.mxu0 0.0
      %542 = vmatprep.subr.mxu0 0.0
      %543 = vmatpush1.msra.mxu0 0.0
      %544 = vmatprep.subr.mxu0 0.0
      %545 = vmatpush1.msra.mxu0 0.0
      %546 = vmatprep.subr.mxu0 0.0
      %547 = vmatpush1.msra.mxu0 0.0
      %548 = vmatprep.subr.mxu0 0.0
      %549 = vmatpush1.msra.mxu0 0.0
      %550 = vmatprep.subr.mxu0 0.0
      %551 = vmatpush1.msra.mxu0 0.0
      %552 = vmatprep.subr.mxu0 0.0
      %553 = vmatpush1.msra.mxu0 0.0
      %554 = vmatprep.subr.mxu0 0.0
      %555 = vmatpush1.msra.mxu0 0.0
      %556 = vmatprep.subr.mxu0 0.0
      %557 = vmatpush1.msra.mxu0 0.0
      %558 = vmatprep.subr.mxu0 0.0
      %559 = vmatpush1.msra.mxu0 0.0
      %560 = vmatprep.subr.mxu0 0.0
      %561 = vmatpush1.msra.mxu0 0.0
      %562 = vmatprep.subr.mxu0 0.0
      %563 = vmatpush1.msra.mxu0 0.0
      %564 = vmatprep.subr.mxu0 0.0
      %565 = vmatpush1.msra.mxu0 0.0
      %566 = vmatprep.subr.mxu0 0.0
      %567 = vmatpush1.msra.mxu0 0.0
      %568 = vmatprep.subr.mxu0 0.0
      %569 = vmatpush1.msra.mxu0 0.0
      %570 = vmatprep.subr.mxu0 0.0
      %571 = vmatpush1.msra.mxu0 0.0
      %572 = vmatprep.subr.mxu0 0.0
      %573 = vmatpush1.msra.mxu0 0.0
      %574 = vmatprep.subr.mxu0 0.0
      %575 = vmatpush1.msra.mxu0 0.0
      %576 = vmatprep.subr.mxu0 0.0
      %577 = vmatpush1.msra.mxu0 0.0
      %578 = vmatprep.subr.mxu0 0.0
      %579 = vmatpush1.msra.mxu0 0.0
      %580 = vmatprep.subr.mxu0 0.0
      %581 = vmatpush1.msra.mxu0 0.0
      %582 = vmatprep.mubr.f32.mxu0 0.0
      %583 = vmatmul.mubr.f32.gmra.mrb[0].mxu0 %v506
      %v584 = vpop.f32.mrb[0].mxu0
      %v585 = vadd.f32 %v360, %v584
      %v586 = vpop.f32.mrb[0].mxu0
      %v587 = vadd.f32 %v362, %v586
      %588 = vdwg.mxu0
      %589 = vmatprep.subr.mxu0 %v514
      %590 = vmatpush1.msra.mxu0 %v512
      %591 = vmatprep.subr.mxu0 0.0
      %592 = vmatpush1.msra.mxu0 0.0
      %593 = vmatprep.subr.mxu0 0.0
      %594 = vmatpush1.msra.mxu0 0.0
      %595 = vmatprep.subr.mxu0 0.0
      %596 = vmatpush1.msra.mxu0 0.0
      %597 = vmatprep.subr.mxu0 0.0
      %598 = vmatpush1.msra.mxu0 0.0
      %599 = vmatprep.subr.mxu0 0.0
      %600 = vmatpush1.msra.mxu0 0.0
      %601 = vmatprep.subr.mxu0 0.0
      %602 = vmatpush1.msra.mxu0 0.0
      %603 = vmatprep.subr.mxu0 0.0
      %604 = vmatpush1.msra.mxu0 0.0
      %605 = vmatprep.subr.mxu0 0.0
      %606 = vmatpush1.msra.mxu0 0.0
      %607 = vmatprep.subr.mxu0 0.0
      %608 = vmatpush1.msra.mxu0 0.0
      %609 = vmatprep.subr.mxu0 0.0
      %610 = vmatpush1.msra.mxu0 0.0
      %611 = vmatprep.subr.mxu0 0.0
      %612 = vmatpush1.msra.mxu0 0.0
      %613 = vmatprep.subr.mxu0 0.0
      %614 = vmatpush1.msra.mxu0 0.0
      %615 = vmatprep.subr.mxu0 0.0
      %616 = vmatpush1.msra.mxu0 0.0
      %617 = vmatprep.subr.mxu0 0.0
      %618 = vmatpush1.msra.mxu0 0.0
      %619 = vmatprep.subr.mxu0 0.0
      %620 = vmatpush1.msra.mxu0 0.0
      %621 = vmatprep.subr.mxu0 0.0
      %622 = vmatpush1.msra.mxu0 0.0
      %623 = vmatprep.subr.mxu0 0.0
      %624 = vmatpush1.msra.mxu0 0.0
      %625 = vmatprep.subr.mxu0 0.0
      %626 = vmatpush1.msra.mxu0 0.0
      %627 = vmatprep.subr.mxu0 0.0
      %628 = vmatpush1.msra.mxu0 0.0
      %629 = vmatprep.subr.mxu0 0.0
      %630 = vmatpush1.msra.mxu0 0.0
      %631 = vmatprep.subr.mxu0 0.0
      %632 = vmatpush1.msra.mxu0 0.0
      %633 = vmatprep.subr.mxu0 0.0
      %634 = vmatpush1.msra.mxu0 0.0
      %635 = vmatprep.subr.mxu0 0.0
      %636 = vmatpush1.msra.mxu0 0.0
      %637 = vmatprep.subr.mxu0 0.0
      %638 = vmatpush1.msra.mxu0 0.0
      %639 = vmatprep.subr.mxu0 0.0
      %640 = vmatpush1.msra.mxu0 0.0
      %641 = vmatprep.subr.mxu0 0.0
      %642 = vmatpush1.msra.mxu0 0.0
      %643 = vmatprep.subr.mxu0 0.0
      %644 = vmatpush1.msra.mxu0 0.0
      %645 = vmatprep.subr.mxu0 0.0
      %646 = vmatpush1.msra.mxu0 0.0
      %647 = vmatprep.subr.mxu0 0.0
      %648 = vmatpush1.msra.mxu0 0.0
      %649 = vmatprep.subr.mxu0 0.0
      %650 = vmatpush1.msra.mxu0 0.0
      %651 = vmatprep.subr.mxu0 0.0
      %652 = vmatpush1.msra.mxu0 0.0
      %653 = vmatprep.mubr.f32.mxu0 0.0
      %654 = vmatmul.mubr.f32.gmra.mrb[0].mxu0 %v506
      %v655 = vpop.f32.mrb[0].mxu0
      %v656 = vadd.f32 %v431, %v655
      %v657 = vpop.f32.mrb[0].mxu0
      %v658 = vadd.f32 %v433, %v657
      %659 = vdwg.mxu0
      %660 = vmatprep.subr.mxu0 0.0
      %661 = vmatpush1.msra.mxu0 %v516
      %662 = vmatprep.subr.mxu0 0.0
      %663 = vmatpush1.msra.mxu0 0.0
      %664 = vmatprep.subr.mxu0 0.0
      %665 = vmatpush1.msra.mxu0 0.0
      %666 = vmatprep.subr.mxu0 0.0
      %667 = vmatpush1.msra.mxu0 0.0
      %668 = vmatprep.subr.mxu0 0.0
      %669 = vmatpush1.msra.mxu0 0.0
      %670 = vmatprep.subr.mxu0 0.0
      %671 = vmatpush1.msra.mxu0 0.0
      %672 = vmatprep.subr.mxu0 0.0
      %673 = vmatpush1.msra.mxu0 0.0
      %674 = vmatprep.subr.mxu0 0.0
      %675 = vmatpush1.msra.mxu0 0.0
      %676 = vmatprep.subr.mxu0 0.0
      %677 = vmatpush1.msra.mxu0 0.0
      %678 = vmatprep.subr.mxu0 0.0
      %679 = vmatpush1.msra.mxu0 0.0
      %680 = vmatprep.subr.mxu0 0.0
      %681 = vmatpush1.msra.mxu0 0.0
      %682 = vmatprep.subr.mxu0 0.0
      %683 = vmatpush1.msra.mxu0 0.0
      %684 = vmatprep.subr.mxu0 0.0
      %685 = vmatpush1.msra.mxu0 0.0
      %686 = vmatprep.subr.mxu0 0.0
      %687 = vmatpush1.msra.mxu0 0.0
      %688 = vmatprep.subr.mxu0 0.0
      %689 = vmatpush1.msra.mxu0 0.0
      %690 = vmatprep.subr.mxu0 0.0
      %691 = vmatpush1.msra.mxu0 0.0
      %692 = vmatprep.subr.mxu0 0.0
      %693 = vmatpush1.msra.mxu0 0.0
      %694 = vmatprep.subr.mxu0 0.0
      %695 = vmatpush1.msra.mxu0 0.0
      %696 = vmatprep.subr.mxu0 0.0
      %697 = vmatpush1.msra.mxu0 0.0
      %698 = vmatprep.subr.mxu0 0.0
      %699 = vmatpush1.msra.mxu0 0.0
      %700 = vmatprep.subr.mxu0 0.0
      %701 = vmatpush1.msra.mxu0 0.0
      %702 = vmatprep.subr.mxu0 0.0
      %703 = vmatpush1.msra.mxu0 0.0
      %704 = vmatprep.subr.mxu0 0.0
      %705 = vmatpush1.msra.mxu0 0.0
      %706 = vmatprep.subr.mxu0 0.0
      %707 = vmatpush1.msra.mxu0 0.0
      %708 = vmatprep.subr.mxu0 0.0
      %709 = vmatpush1.msra.mxu0 0.0
      %710 = vmatprep.subr.mxu0 0.0
      %711 = vmatpush1.msra.mxu0 0.0
      %712 = vmatprep.subr.mxu0 0.0
      %713 = vmatpush1.msra.mxu0 0.0
      %714 = vmatprep.subr.mxu0 0.0
      %715 = vmatpush1.msra.mxu0 0.0
      %716 = vmatprep.subr.mxu0 0.0
      %717 = vmatpush1.msra.mxu0 0.0
      %718 = vmatprep.subr.mxu0 0.0
      %719 = vmatpush1.msra.mxu0 0.0
      %720 = vmatprep.subr.mxu0 0.0
      %721 = vmatpush1.msra.mxu0 0.0
      %722 = vmatprep.subr.mxu0 0.0
      %723 = vmatpush1.msra.mxu0 0.0
      %724 = vmatprep.mubr.f32.mxu0 0.0
      %725 = vmatmul.mubr.f32.gmra.mrb[0].mxu0 %v506
      %v726 = vpop.f32.mrb[0].mxu0
      %v727 = vadd.f32 %v502, %v726
      %v728 = vpop.f32.mrb[0].mxu0
      %729 = vdwg.mxu0
      %v730 = vld [vmem:[%s246] sm:$0xff]
      %v731 = vld [vmem:[%s246 + $0x8] sm:$0xff]
      %v732 = vld [vmem:[%s246 + $0x10] sm:$0xf]
      %s733 = scalar_lea.vmem %s2, 16
      %v734 = vld [vmem:[%s733] sm:$0xff]
      %v738 = vcombine.high %v730, %v730
      %v739 = vcombine.high %v731, %v731
      %740 = vrot.lane.b32.xlu0 %v730, 126
      %v741 = vpop.permute.xlu0 %740
      %742 = vrot.lane.b32.xlu0 %v738, 126
      %v743 = vpop.permute.xlu0 %742
      %744 = vrot.lane.b32.xlu0 %v731, 126
      %v745 = vpop.permute.xlu0 %744
      %746 = vrot.lane.b32.xlu0 %v739, 126
      %v747 = vpop.permute.xlu0 %746
      %748 = vrot.lane.b32.xlu0 %v732, 126
      %v749 = vpop.permute.xlu0 %748
      %vm750 = vcmask 1031168
      %v751 = vsel %vm750, %v741, %v743
      %v752 = vsel %vm750, %v743, %v745
      %v753 = vsel %vm750, %v745, %v747
      %v754 = vsel %vm750, %v747, %v749
      %v756 = vsel %vm278, %v734, 0
      %v758 = vsel %vm282, %v751, 0
      %v760 = vsel %vm282, %v752, 0
      %v762 = vsel %vm282, %v753, 0
      %v764 = vsel %vm282, %v754, 0
      %v766 = vsel %vm282, %v749, 0
      %768 = vmatprep.subr.mxu0 %v760
      %769 = vmatpush1.msra.mxu0 %v758
      %770 = vmatprep.subr.mxu0 0.0
      %771 = vmatpush1.msra.mxu0 0.0
      %772 = vmatprep.subr.mxu0 0.0
      %773 = vmatpush1.msra.mxu0 0.0
      %774 = vmatprep.subr.mxu0 0.0
      %775 = vmatpush1.msra.mxu0 0.0
      %776 = vmatprep.subr.mxu0 0.0
      %777 = vmatpush1.msra.mxu0 0.0
      %778 = vmatprep.subr.mxu0 0.0
      %779 = vmatpush1.msra.mxu0 0.0
      %780 = vmatprep.subr.mxu0 0.0
      %781 = vmatpush1.msra.mxu0 0.0
      %782 = vmatprep.subr.mxu0 0.0
      %783 = vmatpush1.msra.mxu0 0.0
      %784 = vmatprep.subr.mxu0 0.0
      %785 = vmatpush1.msra.mxu0 0.0
      %786 = vmatprep.subr.mxu0 0.0
      %787 = vmatpush1.msra.mxu0 0.0
      %788 = vmatprep.subr.mxu0 0.0
      %789 = vmatpush1.msra.mxu0 0.0
      %790 = vmatprep.subr.mxu0 0.0
      %791 = vmatpush1.msra.mxu0 0.0
      %792 = vmatprep.subr.mxu0 0.0
      %793 = vmatpush1.msra.mxu0 0.0
      %794 = vmatprep.subr.mxu0 0.0
      %795 = vmatpush1.msra.mxu0 0.0
      %796 = vmatprep.subr.mxu0 0.0
      %797 = vmatpush1.msra.mxu0 0.0
      %798 = vmatprep.subr.mxu0 0.0
      %799 = vmatpush1.msra.mxu0 0.0
      %800 = vmatprep.subr.mxu0 0.0
      %801 = vmatpush1.msra.mxu0 0.0
      %802 = vmatprep.subr.mxu0 0.0
      %803 = vmatpush1.msra.mxu0 0.0
      %804 = vmatprep.subr.mxu0 0.0
      %805 = vmatpush1.msra.mxu0 0.0
      %806 = vmatprep.subr.mxu0 0.0
      %807 = vmatpush1.msra.mxu0 0.0
      %808 = vmatprep.subr.mxu0 0.0
      %809 = vmatpush1.msra.mxu0 0.0
      %810 = vmatprep.subr.mxu0 0.0
      %811 = vmatpush1.msra.mxu0 0.0
      %812 = vmatprep.subr.mxu0 0.0
      %813 = vmatpush1.msra.mxu0 0.0
      %814 = vmatprep.subr.mxu0 0.0
      %815 = vmatpush1.msra.mxu0 0.0
      %816 = vmatprep.subr.mxu0 0.0
      %817 = vmatpush1.msra.mxu0 0.0
      %818 = vmatprep.subr.mxu0 0.0
      %819 = vmatpush1.msra.mxu0 0.0
      %820 = vmatprep.subr.mxu0 0.0
      %821 = vmatpush1.msra.mxu0 0.0
      %822 = vmatprep.subr.mxu0 0.0
      %823 = vmatpush1.msra.mxu0 0.0
      %824 = vmatprep.subr.mxu0 0.0
      %825 = vmatpush1.msra.mxu0 0.0
      %826 = vmatprep.subr.mxu0 0.0
      %827 = vmatpush1.msra.mxu0 0.0
      %828 = vmatprep.subr.mxu0 0.0
      %829 = vmatpush1.msra.mxu0 0.0
      %830 = vmatprep.subr.mxu0 0.0
      %831 = vmatpush1.msra.mxu0 0.0
      %832 = vmatprep.mubr.f32.mxu0 0.0
      %833 = vmatmul.mubr.f32.gmra.mrb[0].mxu0 %v756
      %v834 = vpop.f32.mrb[0].mxu0
      %v835 = vadd.f32 0.0, %v834
      %v836 = vpop.f32.mrb[0].mxu0
      %v837 = vadd.f32 0.0, %v836
      %838 = vdwg.mxu0
      %839 = vmatprep.subr.mxu0 %v764
      %840 = vmatpush1.msra.mxu0 %v762
      %841 = vmatprep.subr.mxu0 0.0
      %842 = vmatpush1.msra.mxu0 0.0
      %843 = vmatprep.subr.mxu0 0.0
      %844 = vmatpush1.msra.mxu0 0.0
      %845 = vmatprep.subr.mxu0 0.0
      %846 = vmatpush1.msra.mxu0 0.0
      %847 = vmatprep.subr.mxu0 0.0
      %848 = vmatpush1.msra.mxu0 0.0
      %849 = vmatprep.subr.mxu0 0.0
      %850 = vmatpush1.msra.mxu0 0.0
      %851 = vmatprep.subr.mxu0 0.0
      %852 = vmatpush1.msra.mxu0 0.0
      %853 = vmatprep.subr.mxu0 0.0
      %854 = vmatpush1.msra.mxu0 0.0
      %855 = vmatprep.subr.mxu0 0.0
      %856 = vmatpush1.msra.mxu0 0.0
      %857 = vmatprep.subr.mxu0 0.0
      %858 = vmatpush1.msra.mxu0 0.0
      %859 = vmatprep.subr.mxu0 0.0
      %860 = vmatpush1.msra.mxu0 0.0
      %861 = vmatprep.subr.mxu0 0.0
      %862 = vmatpush1.msra.mxu0 0.0
      %863 = vmatprep.subr.mxu0 0.0
      %864 = vmatpush1.msra.mxu0 0.0
      %865 = vmatprep.subr.mxu0 0.0
      %866 = vmatpush1.msra.mxu0 0.0
      %867 = vmatprep.subr.mxu0 0.0
      %868 = vmatpush1.msra.mxu0 0.0
      %869 = vmatprep.subr.mxu0 0.0
      %870 = vmatpush1.msra.mxu0 0.0
      %871 = vmatprep.subr.mxu0 0.0
      %872 = vmatpush1.msra.mxu0 0.0
      %873 = vmatprep.subr.mxu0 0.0
      %874 = vmatpush1.msra.mxu0 0.0
      %875 = vmatprep.subr.mxu0 0.0
      %876 = vmatpush1.msra.mxu0 0.0
      %877 = vmatprep.subr.mxu0 0.0
      %878 = vmatpush1.msra.mxu0 0.0
      %879 = vmatprep.subr.mxu0 0.0
      %880 = vmatpush1.msra.mxu0 0.0
      %881 = vmatprep.subr.mxu0 0.0
      %882 = vmatpush1.msra.mxu0 0.0
      %883 = vmatprep.subr.mxu0 0.0
      %884 = vmatpush1.msra.mxu0 0.0
      %885 = vmatprep.subr.mxu0 0.0
      %886 = vmatpush1.msra.mxu0 0.0
      %887 = vmatprep.subr.mxu0 0.0
      %888 = vmatpush1.msra.mxu0 0.0
      %889 = vmatprep.subr.mxu0 0.0
      %890 = vmatpush1.msra.mxu0 0.0
      %891 = vmatprep.subr.mxu0 0.0
      %892 = vmatpush1.msra.mxu0 0.0
      %893 = vmatprep.subr.mxu0 0.0
      %894 = vmatpush1.msra.mxu0 0.0
      %895 = vmatprep.subr.mxu0 0.0
      %896 = vmatpush1.msra.mxu0 0.0
      %897 = vmatprep.subr.mxu0 0.0
      %898 = vmatpush1.msra.mxu0 0.0
      %899 = vmatprep.subr.mxu0 0.0
      %900 = vmatpush1.msra.mxu0 0.0
      %901 = vmatprep.subr.mxu0 0.0
      %902 = vmatpush1.msra.mxu0 0.0
      %903 = vmatprep.mubr.f32.mxu0 0.0
      %904 = vmatmul.mubr.f32.gmra.mrb[0].mxu0 %v756
      %v905 = vpop.f32.mrb[0].mxu0
      %v906 = vadd.f32 0.0, %v905
      %v907 = vpop.f32.mrb[0].mxu0
      %v908 = vadd.f32 0.0, %v907
      %909 = vdwg.mxu0
      %910 = vmatprep.subr.mxu0 0.0
      %911 = vmatpush1.msra.mxu0 %v766
      %912 = vmatprep.subr.mxu0 0.0
      %913 = vmatpush1.msra.mxu0 0.0
      %914 = vmatprep.subr.mxu0 0.0
      %915 = vmatpush1.msra.mxu0 0.0
      %916 = vmatprep.subr.mxu0 0.0
      %917 = vmatpush1.msra.mxu0 0.0
      %918 = vmatprep.subr.mxu0 0.0
      %919 = vmatpush1.msra.mxu0 0.0
      %920 = vmatprep.subr.mxu0 0.0
      %921 = vmatpush1.msra.mxu0 0.0
      %922 = vmatprep.subr.mxu0 0.0
      %923 = vmatpush1.msra.mxu0 0.0
      %924 = vmatprep.subr.mxu0 0.0
      %925 = vmatpush1.msra.mxu0 0.0
      %926 = vmatprep.subr.mxu0 0.0
      %927 = vmatpush1.msra.mxu0 0.0
      %928 = vmatprep.subr.mxu0 0.0
      %929 = vmatpush1.msra.mxu0 0.0
      %930 = vmatprep.subr.mxu0 0.0
      %931 = vmatpush1.msra.mxu0 0.0
      %932 = vmatprep.subr.mxu0 0.0
      %933 = vmatpush1.msra.mxu0 0.0
      %934 = vmatprep.subr.mxu0 0.0
      %935 = vmatpush1.msra.mxu0 0.0
      %936 = vmatprep.subr.mxu0 0.0
      %937 = vmatpush1.msra.mxu0 0.0
      %938 = vmatprep.subr.mxu0 0.0
      %939 = vmatpush1.msra.mxu0 0.0
      %940 = vmatprep.subr.mxu0 0.0
      %941 = vmatpush1.msra.mxu0 0.0
      %942 = vmatprep.subr.mxu0 0.0
      %943 = vmatpush1.msra.mxu0 0.0
      %944 = vmatprep.subr.mxu0 0.0
      %945 = vmatpush1.msra.mxu0 0.0
      %946 = vmatprep.subr.mxu0 0.0
      %947 = vmatpush1.msra.mxu0 0.0
      %948 = vmatprep.subr.mxu0 0.0
      %949 = vmatpush1.msra.mxu0 0.0
      %950 = vmatprep.subr.mxu0 0.0
      %951 = vmatpush1.msra.mxu0 0.0
      %952 = vmatprep.subr.mxu0 0.0
      %953 = vmatpush1.msra.mxu0 0.0
      %954 = vmatprep.subr.mxu0 0.0
      %955 = vmatpush1.msra.mxu0 0.0
      %956 = vmatprep.subr.mxu0 0.0
      %957 = vmatpush1.msra.mxu0 0.0
      %958 = vmatprep.subr.mxu0 0.0
      %959 = vmatpush1.msra.mxu0 0.0
      %960 = vmatprep.subr.mxu0 0.0
      %961 = vmatpush1.msra.mxu0 0.0
      %962 = vmatprep.subr.mxu0 0.0
      %963 = vmatpush1.msra.mxu0 0.0
      %964 = vmatprep.subr.mxu0 0.0
      %965 = vmatpush1.msra.mxu0 0.0
      %966 = vmatprep.subr.mxu0 0.0
      %967 = vmatpush1.msra.mxu0 0.0
      %968 = vmatprep.subr.mxu0 0.0
      %969 = vmatpush1.msra.mxu0 0.0
      %970 = vmatprep.subr.mxu0 0.0
      %971 = vmatpush1.msra.mxu0 0.0
      %972 = vmatprep.subr.mxu0 0.0
      %973 = vmatpush1.msra.mxu0 0.0
      %974 = vmatprep.mubr.f32.mxu0 0.0
      %975 = vmatmul.mubr.f32.gmra.mrb[0].mxu0 %v756
      %v976 = vpop.f32.mrb[0].mxu0
      %v977 = vadd.f32 0.0, %v976
      %v978 = vpop.f32.mrb[0].mxu0
      %979 = vdwg.mxu0
      %v980 = vadd.f32 %v585, %v835
      %v981 = vadd.f32 %v587, %v837
      %v982 = vadd.f32 %v656, %v906
      %v983 = vadd.f32 %v658, %v908
      %v984 = vadd.f32 %v727, %v977
      %v985 = vld [vmem:[%s246] sm:$0xff]
      %v986 = vld [vmem:[%s246 + $0x8] sm:$0xff]
      %v987 = vld [vmem:[%s246 + $0x10] sm:$0xf]
      %s988 = scalar_lea.vmem %s2, 24
      %v989 = vld [vmem:[%s988] sm:$0xff]
      %v993 = vcombine.high %v985, %v985
      %v994 = vcombine.high %v986, %v986
      %995 = vrot.lane.b32.xlu0 %v985, 104
      %v996 = vpop.permute.xlu0 %995
      %997 = vrot.lane.b32.xlu0 %v993, 104
      %v998 = vpop.permute.xlu0 %997
      %999 = vrot.lane.b32.xlu0 %v986, 104
      %v1000 = vpop.permute.xlu0 %999
      %1001 = vrot.lane.b32.xlu0 %v994, 104
      %v1002 = vpop.permute.xlu0 %1001
      %1003 = vrot.lane.b32.xlu0 %v987, 104
      %v1004 = vpop.permute.xlu0 %1003
      %vm1005 = vcmask 850944
      %v1006 = vsel %vm1005, %v996, %v998
      %v1007 = vsel %vm1005, %v998, %v1000
      %v1008 = vsel %vm1005, %v1000, %v1002
      %v1009 = vsel %vm1005, %v1002, %v1004
      %v1011 = vsel %vm278, %v989, 0
      %v1013 = vsel %vm282, %v1006, 0
      %v1015 = vsel %vm282, %v1007, 0
      %v1017 = vsel %vm282, %v1008, 0
      %v1019 = vsel %vm282, %v1009, 0
      %v1021 = vsel %vm282, %v1004, 0
      %1023 = vmatprep.subr.mxu0 %v1015
      %1024 = vmatpush1.msra.mxu0 %v1013
      %1025 = vmatprep.subr.mxu0 0.0
      %1026 = vmatpush1.msra.mxu0 0.0
      %1027 = vmatprep.subr.mxu0 0.0
      %1028 = vmatpush1.msra.mxu0 0.0
      %1029 = vmatprep.subr.mxu0 0.0
      %1030 = vmatpush1.msra.mxu0 0.0
      %1031 = vmatprep.subr.mxu0 0.0
      %1032 = vmatpush1.msra.mxu0 0.0
      %1033 = vmatprep.subr.mxu0 0.0
      %1034 = vmatpush1.msra.mxu0 0.0
      %1035 = vmatprep.subr.mxu0 0.0
      %1036 = vmatpush1.msra.mxu0 0.0
      %1037 = vmatprep.subr.mxu0 0.0
      %1038 = vmatpush1.msra.mxu0 0.0
      %1039 = vmatprep.subr.mxu0 0.0
      %1040 = vmatpush1.msra.mxu0 0.0
      %1041 = vmatprep.subr.mxu0 0.0
      %1042 = vmatpush1.msra.mxu0 0.0
      %1043 = vmatprep.subr.mxu0 0.0
      %1044 = vmatpush1.msra.mxu0 0.0
      %1045 = vmatprep.subr.mxu0 0.0
      %1046 = vmatpush1.msra.mxu0 0.0
      %1047 = vmatprep.subr.mxu0 0.0
      %1048 = vmatpush1.msra.mxu0 0.0
      %1049 = vmatprep.subr.mxu0 0.0
      %1050 = vmatpush1.msra.mxu0 0.0
      %1051 = vmatprep.subr.mxu0 0.0
      %1052 = vmatpush1.msra.mxu0 0.0
      %1053 = vmatprep.subr.mxu0 0.0
      %1054 = vmatpush1.msra.mxu0 0.0
      %1055 = vmatprep.subr.mxu0 0.0
      %1056 = vmatpush1.msra.mxu0 0.0
      %1057 = vmatprep.subr.mxu0 0.0
      %1058 = vmatpush1.msra.mxu0 0.0
      %1059 = vmatprep.subr.mxu0 0.0
      %1060 = vmatpush1.msra.mxu0 0.0
      %1061 = vmatprep.subr.mxu0 0.0
      %1062 = vmatpush1.msra.mxu0 0.0
      %1063 = vmatprep.subr.mxu0 0.0
      %1064 = vmatpush1.msra.mxu0 0.0
      %1065 = vmatprep.subr.mxu0 0.0
      %1066 = vmatpush1.msra.mxu0 0.0
      %1067 = vmatprep.subr.mxu0 0.0
      %1068 = vmatpush1.msra.mxu0 0.0
      %1069 = vmatprep.subr.mxu0 0.0
      %1070 = vmatpush1.msra.mxu0 0.0
      %1071 = vmatprep.subr.mxu0 0.0
      %1072 = vmatpush1.msra.mxu0 0.0
      %1073 = vmatprep.subr.mxu0 0.0
      %1074 = vmatpush1.msra.mxu0 0.0
      %1075 = vmatprep.subr.mxu0 0.0
      %1076 = vmatpush1.msra.mxu0 0.0
      %1077 = vmatprep.subr.mxu0 0.0
      %1078 = vmatpush1.msra.mxu0 0.0
      %1079 = vmatprep.subr.mxu0 0.0
      %1080 = vmatpush1.msra.mxu0 0.0
      %1081 = vmatprep.subr.mxu0 0.0
      %1082 = vmatpush1.msra.mxu0 0.0
      %1083 = vmatprep.subr.mxu0 0.0
      %1084 = vmatpush1.msra.mxu0 0.0
      %1085 = vmatprep.subr.mxu0 0.0
      %1086 = vmatpush1.msra.mxu0 0.0
      %1087 = vmatprep.mubr.f32.mxu0 0.0
      %1088 = vmatmul.mubr.f32.gmra.mrb[0].mxu0 %v1011
      %v1089 = vpop.f32.mrb[0].mxu0
      %v1090 = vadd.f32 0.0, %v1089
      %v1091 = vpop.f32.mrb[0].mxu0
      %v1092 = vadd.f32 0.0, %v1091
      %1093 = vdwg.mxu0
      %1094 = vmatprep.subr.mxu0 %v1019
      %1095 = vmatpush1.msra.mxu0 %v1017
      %1096 = vmatprep.subr.mxu0 0.0
      %1097 = vmatpush1.msra.mxu0 0.0
      %1098 = vmatprep.subr.mxu0 0.0
      %1099 = vmatpush1.msra.mxu0 0.0
      %1100 = vmatprep.subr.mxu0 0.0
      %1101 = vmatpush1.msra.mxu0 0.0
      %1102 = vmatprep.subr.mxu0 0.0
      %1103 = vmatpush1.msra.mxu0 0.0
      %1104 = vmatprep.subr.mxu0 0.0
      %1105 = vmatpush1.msra.mxu0 0.0
      %1106 = vmatprep.subr.mxu0 0.0
      %1107 = vmatpush1.msra.mxu0 0.0
      %1108 = vmatprep.subr.mxu0 0.0
      %1109 = vmatpush1.msra.mxu0 0.0
      %1110 = vmatprep.subr.mxu0 0.0
      %1111 = vmatpush1.msra.mxu0 0.0
      %1112 = vmatprep.subr.mxu0 0.0
      %1113 = vmatpush1.msra.mxu0 0.0
      %1114 = vmatprep.subr.mxu0 0.0
      %1115 = vmatpush1.msra.mxu0 0.0
      %1116 = vmatprep.subr.mxu0 0.0
      %1117 = vmatpush1.msra.mxu0 0.0
      %1118 = vmatprep.subr.mxu0 0.0
      %1119 = vmatpush1.msra.mxu0 0.0
      %1120 = vmatprep.subr.mxu0 0.0
      %1121 = vmatpush1.msra.mxu0 0.0
      %1122 = vmatprep.subr.mxu0 0.0
      %1123 = vmatpush1.msra.mxu0 0.0
      %1124 = vmatprep.subr.mxu0 0.0
      %1125 = vmatpush1.msra.mxu0 0.0
      %1126 = vmatprep.subr.mxu0 0.0
      %1127 = vmatpush1.msra.mxu0 0.0
      %1128 = vmatprep.subr.mxu0 0.0
      %1129 = vmatpush1.msra.mxu0 0.0
      %1130 = vmatprep.subr.mxu0 0.0
      %1131 = vmatpush1.msra.mxu0 0.0
      %1132 = vmatprep.subr.mxu0 0.0
      %1133 = vmatpush1.msra.mxu0 0.0
      %1134 = vmatprep.subr.mxu0 0.0
      %1135 = vmatpush1.msra.mxu0 0.0
      %1136 = vmatprep.subr.mxu0 0.0
      %1137 = vmatpush1.msra.mxu0 0.0
      %1138 = vmatprep.subr.mxu0 0.0
      %1139 = vmatpush1.msra.mxu0 0.0
      %1140 = vmatprep.subr.mxu0 0.0
      %1141 = vmatpush1.msra.mxu0 0.0
      %1142 = vmatprep.subr.mxu0 0.0
      %1143 = vmatpush1.msra.mxu0 0.0
      %1144 = vmatprep.subr.mxu0 0.0
      %1145 = vmatpush1.msra.mxu0 0.0
      %1146 = vmatprep.subr.mxu0 0.0
      %1147 = vmatpush1.msra.mxu0 0.0
      %1148 = vmatprep.subr.mxu0 0.0
      %1149 = vmatpush1.msra.mxu0 0.0
      %1150 = vmatprep.subr.mxu0 0.0
      %1151 = vmatpush1.msra.mxu0 0.0
      %1152 = vmatprep.subr.mxu0 0.0
      %1153 = vmatpush1.msra.mxu0 0.0
      %1154 = vmatprep.subr.mxu0 0.0
      %1155 = vmatpush1.msra.mxu0 0.0
      %1156 = vmatprep.subr.mxu0 0.0
      %1157 = vmatpush1.msra.mxu0 0.0
      %1158 = vmatprep.mubr.f32.mxu0 0.0
      %1159 = vmatmul.mubr.f32.gmra.mrb[0].mxu0 %v1011
      %v1160 = vpop.f32.mrb[0].mxu0
      %v1161 = vadd.f32 0.0, %v1160
      %v1162 = vpop.f32.mrb[0].mxu0
      %v1163 = vadd.f32 0.0, %v1162
      %1164 = vdwg.mxu0
      %1165 = vmatprep.subr.mxu0 0.0
      %1166 = vmatpush1.msra.mxu0 %v1021
      %1167 = vmatprep.subr.mxu0 0.0
      %1168 = vmatpush1.msra.mxu0 0.0
      %1169 = vmatprep.subr.mxu0 0.0
      %1170 = vmatpush1.msra.mxu0 0.0
      %1171 = vmatprep.subr.mxu0 0.0
      %1172 = vmatpush1.msra.mxu0 0.0
      %1173 = vmatprep.subr.mxu0 0.0
      %1174 = vmatpush1.msra.mxu0 0.0
      %1175 = vmatprep.subr.mxu0 0.0
      %1176 = vmatpush1.msra.mxu0 0.0
      %1177 = vmatprep.subr.mxu0 0.0
      %1178 = vmatpush1.msra.mxu0 0.0
      %1179 = vmatprep.subr.mxu0 0.0
      %1180 = vmatpush1.msra.mxu0 0.0
      %1181 = vmatprep.subr.mxu0 0.0
      %1182 = vmatpush1.msra.mxu0 0.0
      %1183 = vmatprep.subr.mxu0 0.0
      %1184 = vmatpush1.msra.mxu0 0.0
      %1185 = vmatprep.subr.mxu0 0.0
      %1186 = vmatpush1.msra.mxu0 0.0
      %1187 = vmatprep.subr.mxu0 0.0
      %1188 = vmatpush1.msra.mxu0 0.0
      %1189 = vmatprep.subr.mxu0 0.0
      %1190 = vmatpush1.msra.mxu0 0.0
      %1191 = vmatprep.subr.mxu0 0.0
      %1192 = vmatpush1.msra.mxu0 0.0
      %1193 = vmatprep.subr.mxu0 0.0
      %1194 = vmatpush1.msra.mxu0 0.0
      %1195 = vmatprep.subr.mxu0 0.0
      %1196 = vmatpush1.msra.mxu0 0.0
      %1197 = vmatprep.subr.mxu0 0.0
      %1198 = vmatpush1.msra.mxu0 0.0
      %1199 = vmatprep.subr.mxu0 0.0
      %1200 = vmatpush1.msra.mxu0 0.0
      %1201 = vmatprep.subr.mxu0 0.0
      %1202 = vmatpush1.msra.mxu0 0.0
      %1203 = vmatprep.subr.mxu0 0.0
      %1204 = vmatpush1.msra.mxu0 0.0
      %1205 = vmatprep.subr.mxu0 0.0
      %1206 = vmatpush1.msra.mxu0 0.0
      %1207 = vmatprep.subr.mxu0 0.0
      %1208 = vmatpush1.msra.mxu0 0.0
      %1209 = vmatprep.subr.mxu0 0.0
      %1210 = vmatpush1.msra.mxu0 0.0
      %1211 = vmatprep.subr.mxu0 0.0
      %1212 = vmatpush1.msra.mxu0 0.0
      %1213 = vmatprep.subr.mxu0 0.0
      %1214 = vmatpush1.msra.mxu0 0.0
      %1215 = vmatprep.subr.mxu0 0.0
      %1216 = vmatpush1.msra.mxu0 0.0
      %1217 = vmatprep.subr.mxu0 0.0
      %1218 = vmatpush1.msra.mxu0 0.0
      %1219 = vmatprep.subr.mxu0 0.0
      %1220 = vmatpush1.msra.mxu0 0.0
      %1221 = vmatprep.subr.mxu0 0.0
      %1222 = vmatpush1.msra.mxu0 0.0
      %1223 = vmatprep.subr.mxu0 0.0
      %1224 = vmatpush1.msra.mxu0 0.0
      %1225 = vmatprep.subr.mxu0 0.0
      %1226 = vmatpush1.msra.mxu0 0.0
      %1227 = vmatprep.subr.mxu0 0.0
      %1228 = vmatpush1.msra.mxu0 0.0
      %1229 = vmatprep.mubr.f32.mxu0 0.0
      %1230 = vmatmul.mubr.f32.gmra.mrb[0].mxu0 %v1011
      %v1231 = vpop.f32.mrb[0].mxu0
      %v1232 = vadd.f32 0.0, %v1231
      %v1233 = vpop.f32.mrb[0].mxu0
      %1234 = vdwg.mxu0
      %v1235 = vadd.f32 %v980, %v1090
      %v1236 = vadd.f32 %v981, %v1092
      %v1237 = vadd.f32 %v982, %v1161
      %v1238 = vadd.f32 %v983, %v1163
      %v1239 = vadd.f32 %v984, %v1232
      %v1240 = vld [vmem:[%s246] sm:$0xff]
      %v1241 = vld [vmem:[%s246 + $0x8] sm:$0xff]
      %v1242 = vld [vmem:[%s246 + $0x10] sm:$0xf]
      %s1243 = scalar_lea.vmem %s2, 32
      %v1244 = vld [vmem:[%s1243] sm:$0xff]
      %v1248 = vcombine.high %v1240, %v1240
      %v1249 = vcombine.high %v1241, %v1241
      %1250 = vrot.lane.b32.xlu0 %v1240, 103
      %v1251 = vpop.permute.xlu0 %1250
      %1252 = vrot.lane.b32.xlu0 %v1248, 103
      %v1253 = vpop.permute.xlu0 %1252
      %1254 = vrot.lane.b32.xlu0 %v1241, 103
      %v1255 = vpop.permute.xlu0 %1254
      %1256 = vrot.lane.b32.xlu0 %v1249, 103
      %v1257 = vpop.permute.xlu0 %1256
      %1258 = vrot.lane.b32.xlu0 %v1242, 103
      %v1259 = vpop.permute.xlu0 %1258
      %vm1260 = vcmask 842752
      %v1261 = vsel %vm1260, %v1251, %v1253
      %v1262 = vsel %vm1260, %v1253, %v1255
      %v1263 = vsel %vm1260, %v1255, %v1257
      %v1264 = vsel %vm1260, %v1257, %v1259
      %v1266 = vsel %vm278, %v1244, 0
      %v1268 = vsel %vm282, %v1261, 0
      %v1270 = vsel %vm282, %v1262, 0
      %v1272 = vsel %vm282, %v1263, 0
      %v1274 = vsel %vm282, %v1264, 0
      %v1276 = vsel %vm282, %v1259, 0
      %1278 = vmatprep.subr.mxu0 %v1270
      %1279 = vmatpush1.msra.mxu0 %v1268
      %1280 = vmatprep.subr.mxu0 0.0
      %1281 = vmatpush1.msra.mxu0 0.0
      %1282 = vmatprep.subr.mxu0 0.0
      %1283 = vmatpush1.msra.mxu0 0.0
      %1284 = vmatprep.subr.mxu0 0.0
      %1285 = vmatpush1.msra.mxu0 0.0
      %1286 = vmatprep.subr.mxu0 0.0
      %1287 = vmatpush1.msra.mxu0 0.0
      %1288 = vmatprep.subr.mxu0 0.0
      %1289 = vmatpush1.msra.mxu0 0.0
      %1290 = vmatprep.subr.mxu0 0.0
      %1291 = vmatpush1.msra.mxu0 0.0
      %1292 = vmatprep.subr.mxu0 0.0
      %1293 = vmatpush1.msra.mxu0 0.0
      %1294 = vmatprep.subr.mxu0 0.0
      %1295 = vmatpush1.msra.mxu0 0.0
      %1296 = vmatprep.subr.mxu0 0.0
      %1297 = vmatpush1.msra.mxu0 0.0
      %1298 = vmatprep.subr.mxu0 0.0
      %1299 = vmatpush1.msra.mxu0 0.0
      %1300 = vmatprep.subr.mxu0 0.0
      %1301 = vmatpush1.msra.mxu0 0.0
      %1302 = vmatprep.subr.mxu0 0.0
      %1303 = vmatpush1.msra.mxu0 0.0
      %1304 = vmatprep.subr.mxu0 0.0
      %1305 = vmatpush1.msra.mxu0 0.0
      %1306 = vmatprep.subr.mxu0 0.0
      %1307 = vmatpush1.msra.mxu0 0.0
      %1308 = vmatprep.subr.mxu0 0.0
      %1309 = vmatpush1.msra.mxu0 0.0
      %1310 = vmatprep.subr.mxu0 0.0
      %1311 = vmatpush1.msra.mxu0 0.0
      %1312 = vmatprep.subr.mxu0 0.0
      %1313 = vmatpush1.msra.mxu0 0.0
      %1314 = vmatprep.subr.mxu0 0.0
      %1315 = vmatpush1.msra.mxu0 0.0
      %1316 = vmatprep.subr.mxu0 0.0
      %1317 = vmatpush1.msra.mxu0 0.0
      %1318 = vmatprep.subr.mxu0 0.0
      %1319 = vmatpush1.msra.mxu0 0.0
      %1320 = vmatprep.subr.mxu0 0.0
      %1321 = vmatpush1.msra.mxu0 0.0
      %1322 = vmatprep.subr.mxu0 0.0
      %1323 = vmatpush1.msra.mxu0 0.0
      %1324 = vmatprep.subr.mxu0 0.0
      %1325 = vmatpush1.msra.mxu0 0.0
      %1326 = vmatprep.subr.mxu0 0.0
      %1327 = vmatpush1.msra.mxu0 0.0
      %1328 = vmatprep.subr.mxu0 0.0
      %1329 = vmatpush1.msra.mxu0 0.0
      %1330 = vmatprep.subr.mxu0 0.0
      %1331 = vmatpush1.msra.mxu0 0.0
      %1332 = vmatprep.subr.mxu0 0.0
      %1333 = vmatpush1.msra.mxu0 0.0
      %1334 = vmatprep.subr.mxu0 0.0
      %1335 = vmatpush1.msra.mxu0 0.0
      %1336 = vmatprep.subr.mxu0 0.0
      %1337 = vmatpush1.msra.mxu0 0.0
      %1338 = vmatprep.subr.mxu0 0.0
      %1339 = vmatpush1.msra.mxu0 0.0
      %1340 = vmatprep.subr.mxu0 0.0
      %1341 = vmatpush1.msra.mxu0 0.0
      %1342 = vmatprep.mubr.f32.mxu0 0.0
      %1343 = vmatmul.mubr.f32.gmra.mrb[0].mxu0 %v1266
      %v1344 = vpop.f32.mrb[0].mxu0
      %v1345 = vadd.f32 0.0, %v1344
      %v1346 = vpop.f32.mrb[0].mxu0
      %v1347 = vadd.f32 0.0, %v1346
      %1348 = vdwg.mxu0
      %1349 = vmatprep.subr.mxu0 %v1274
      %1350 = vmatpush1.msra.mxu0 %v1272
      %1351 = vmatprep.subr.mxu0 0.0
      %1352 = vmatpush1.msra.mxu0 0.0
      %1353 = vmatprep.subr.mxu0 0.0
      %1354 = vmatpush1.msra.mxu0 0.0
      %1355 = vmatprep.subr.mxu0 0.0
      %1356 = vmatpush1.msra.mxu0 0.0
      %1357 = vmatprep.subr.mxu0 0.0
      %1358 = vmatpush1.msra.mxu0 0.0
      %1359 = vmatprep.subr.mxu0 0.0
      %1360 = vmatpush1.msra.mxu0 0.0
      %1361 = vmatprep.subr.mxu0 0.0
      %1362 = vmatpush1.msra.mxu0 0.0
      %1363 = vmatprep.subr.mxu0 0.0
      %1364 = vmatpush1.msra.mxu0 0.0
      %1365 = vmatprep.subr.mxu0 0.0
      %1366 = vmatpush1.msra.mxu0 0.0
      %1367 = vmatprep.subr.mxu0 0.0
      %1368 = vmatpush1.msra.mxu0 0.0
      %1369 = vmatprep.subr.mxu0 0.0
      %1370 = vmatpush1.msra.mxu0 0.0
      %1371 = vmatprep.subr.mxu0 0.0
      %1372 = vmatpush1.msra.mxu0 0.0
      %1373 = vmatprep.subr.mxu0 0.0
      %1374 = vmatpush1.msra.mxu0 0.0
      %1375 = vmatprep.subr.mxu0 0.0
      %1376 = vmatpush1.msra.mxu0 0.0
      %1377 = vmatprep.subr.mxu0 0.0
      %1378 = vmatpush1.msra.mxu0 0.0
      %1379 = vmatprep.subr.mxu0 0.0
      %1380 = vmatpush1.msra.mxu0 0.0
      %1381 = vmatprep.subr.mxu0 0.0
      %1382 = vmatpush1.msra.mxu0 0.0
      %1383 = vmatprep.subr.mxu0 0.0
      %1384 = vmatpush1.msra.mxu0 0.0
      %1385 = vmatprep.subr.mxu0 0.0
      %1386 = vmatpush1.msra.mxu0 0.0
      %1387 = vmatprep.subr.mxu0 0.0
      %1388 = vmatpush1.msra.mxu0 0.0
      %1389 = vmatprep.subr.mxu0 0.0
      %1390 = vmatpush1.msra.mxu0 0.0
      %1391 = vmatprep.subr.mxu0 0.0
      %1392 = vmatpush1.msra.mxu0 0.0
      %1393 = vmatprep.subr.mxu0 0.0
      %1394 = vmatpush1.msra.mxu0 0.0
      %1395 = vmatprep.subr.mxu0 0.0
      %1396 = vmatpush1.msra.mxu0 0.0
      %1397 = vmatprep.subr.mxu0 0.0
      %1398 = vmatpush1.msra.mxu0 0.0
      %1399 = vmatprep.subr.mxu0 0.0
      %1400 = vmatpush1.msra.mxu0 0.0
      %1401 = vmatprep.subr.mxu0 0.0
      %1402 = vmatpush1.msra.mxu0 0.0
      %1403 = vmatprep.subr.mxu0 0.0
      %1404 = vmatpush1.msra.mxu0 0.0
      %1405 = vmatprep.subr.mxu0 0.0
      %1406 = vmatpush1.msra.mxu0 0.0
      %1407 = vmatprep.subr.mxu0 0.0
      %1408 = vmatpush1.msra.mxu0 0.0
      %1409 = vmatprep.subr.mxu0 0.0
      %1410 = vmatpush1.msra.mxu0 0.0
      %1411 = vmatprep.subr.mxu0 0.0
      %1412 = vmatpush1.msra.mxu0 0.0
      %1413 = vmatprep.mubr.f32.mxu0 0.0
      %1414 = vmatmul.mubr.f32.gmra.mrb[0].mxu0 %v1266
      %v1415 = vpop.f32.mrb[0].mxu0
      %v1416 = vadd.f32 0.0, %v1415
      %v1417 = vpop.f32.mrb[0].mxu0
      %v1418 = vadd.f32 0.0, %v1417
      %1419 = vdwg.mxu0
      %1420 = vmatprep.subr.mxu0 0.0
      %1421 = vmatpush1.msra.mxu0 %v1276
      %1422 = vmatprep.subr.mxu0 0.0
      %1423 = vmatpush1.msra.mxu0 0.0
      %1424 = vmatprep.subr.mxu0 0.0
      %1425 = vmatpush1.msra.mxu0 0.0
      %1426 = vmatprep.subr.mxu0 0.0
      %1427 = vmatpush1.msra.mxu0 0.0
      %1428 = vmatprep.subr.mxu0 0.0
      %1429 = vmatpush1.msra.mxu0 0.0
      %1430 = vmatprep.subr.mxu0 0.0
      %1431 = vmatpush1.msra.mxu0 0.0
      %1432 = vmatprep.subr.mxu0 0.0
      %1433 = vmatpush1.msra.mxu0 0.0
      %1434 = vmatprep.subr.mxu0 0.0
      %1435 = vmatpush1.msra.mxu0 0.0
      %1436 = vmatprep.subr.mxu0 0.0
      %1437 = vmatpush1.msra.mxu0 0.0
      %1438 = vmatprep.subr.mxu0 0.0
      %1439 = vmatpush1.msra.mxu0 0.0
      %1440 = vmatprep.subr.mxu0 0.0
      %1441 = vmatpush1.msra.mxu0 0.0
      %1442 = vmatprep.subr.mxu0 0.0
      %1443 = vmatpush1.msra.mxu0 0.0
      %1444 = vmatprep.subr.mxu0 0.0
      %1445 = vmatpush1.msra.mxu0 0.0
      %1446 = vmatprep.subr.mxu0 0.0
      %1447 = vmatpush1.msra.mxu0 0.0
      %1448 = vmatprep.subr.mxu0 0.0
      %1449 = vmatpush1.msra.mxu0 0.0
      %1450 = vmatprep.subr.mxu0 0.0
      %1451 = vmatpush1.msra.mxu0 0.0
      %1452 = vmatprep.subr.mxu0 0.0
      %1453 = vmatpush1.msra.mxu0 0.0
      %1454 = vmatprep.subr.mxu0 0.0
      %1455 = vmatpush1.msra.mxu0 0.0
      %1456 = vmatprep.subr.mxu0 0.0
      %1457 = vmatpush1.msra.mxu0 0.0
      %1458 = vmatprep.subr.mxu0 0.0
      %1459 = vmatpush1.msra.mxu0 0.0
      %1460 = vmatprep.subr.mxu0 0.0
      %1461 = vmatpush1.msra.mxu0 0.0
      %1462 = vmatprep.subr.mxu0 0.0
      %1463 = vmatpush1.msra.mxu0 0.0
      %1464 = vmatprep.subr.mxu0 0.0
      %1465 = vmatpush1.msra.mxu0 0.0
      %1466 = vmatprep.subr.mxu0 0.0
      %1467 = vmatpush1.msra.mxu0 0.0
      %1468 = vmatprep.subr.mxu0 0.0
      %1469 = vmatpush1.msra.mxu0 0.0
      %1470 = vmatprep.subr.mxu0 0.0
      %1471 = vmatpush1.msra.mxu0 0.0
      %1472 = vmatprep.subr.mxu0 0.0
      %1473 = vmatpush1.msra.mxu0 0.0
      %1474 = vmatprep.subr.mxu0 0.0
      %1475 = vmatpush1.msra.mxu0 0.0
      %1476 = vmatprep.subr.mxu0 0.0
      %1477 = vmatpush1.msra.mxu0 0.0
      %1478 = vmatprep.subr.mxu0 0.0
      %1479 = vmatpush1.msra.mxu0 0.0
      %1480 = vmatprep.subr.mxu0 0.0
      %1481 = vmatpush1.msra.mxu0 0.0
      %1482 = vmatprep.subr.mxu0 0.0
      %1483 = vmatpush1.msra.mxu0 0.0
      %1484 = vmatprep.mubr.f32.mxu0 0.0
      %1485 = vmatmul.mubr.f32.gmra.mrb[0].mxu0 %v1266
      %v1486 = vpop.f32.mrb[0].mxu0
      %v1487 = vadd.f32 0.0, %v1486
      %v1488 = vpop.f32.mrb[0].mxu0
      %1489 = vdwg.mxu0
      %v1490 = vadd.f32 %v1235, %v1345
      %v1491 = vadd.f32 %v1236, %v1347
      %v1492 = vadd.f32 %v1237, %v1416
      %v1493 = vadd.f32 %v1238, %v1418
      %v1494 = vadd.f32 %v1239, %v1487
      %v1495 = vld [vmem:[%s246] sm:$0xff]
      %v1496 = vld [vmem:[%s246 + $0x8] sm:$0xff]
      %v1497 = vld [vmem:[%s246 + $0x10] sm:$0xf]
      %s1498 = scalar_lea.vmem %s2, 40
      %v1499 = vld [vmem:[%s1498] sm:$0xff]
      %v1503 = vcombine.high %v1495, %v1495
      %v1504 = vcombine.high %v1496, %v1496
      %1505 = vrot.lane.b32.xlu0 %v1495, 102
      %v1506 = vpop.permute.xlu0 %1505
      %1507 = vrot.lane.b32.xlu0 %v1503, 102
      %v1508 = vpop.permute.xlu0 %1507
      %1509 = vrot.lane.b32.xlu0 %v1496, 102
      %v1510 = vpop.permute.xlu0 %1509
      %1511 = vrot.lane.b32.xlu0 %v1504, 102
      %v1512 = vpop.permute.xlu0 %1511
      %1513 = vrot.lane.b32.xlu0 %v1497, 102
      %v1514 = vpop.permute.xlu0 %1513
      %vm1515 = vcmask 834560
      %v1516 = vsel %vm1515, %v1506, %v1508
      %v1517 = vsel %vm1515, %v1508, %v1510
      %v1518 = vsel %vm1515, %v1510, %v1512
      %v1519 = vsel %vm1515, %v1512, %v1514
      %v1521 = vsel %vm278, %v1499, 0
      %v1523 = vsel %vm282, %v1516, 0
      %v1525 = vsel %vm282, %v1517, 0
      %v1527 = vsel %vm282, %v1518, 0
      %v1529 = vsel %vm282, %v1519, 0
      %v1531 = vsel %vm282, %v1514, 0
      %1533 = vmatprep.subr.mxu0 %v1525
      %1534 = vmatpush1.msra.mxu0 %v1523
      %1535 = vmatprep.subr.mxu0 0.0
      %1536 = vmatpush1.msra.mxu0 0.0
      %1537 = vmatprep.subr.mxu0 0.0
      %1538 = vmatpush1.msra.mxu0 0.0
      %1539 = vmatprep.subr.mxu0 0.0
      %1540 = vmatpush1.msra.mxu0 0.0
      %1541 = vmatprep.subr.mxu0 0.0
      %1542 = vmatpush1.msra.mxu0 0.0
      %1543 = vmatprep.subr.mxu0 0.0
      %1544 = vmatpush1.msra.mxu0 0.0
      %1545 = vmatprep.subr.mxu0 0.0
      %1546 = vmatpush1.msra.mxu0 0.0
      %1547 = vmatprep.subr.mxu0 0.0
      %1548 = vmatpush1.msra.mxu0 0.0
      %1549 = vmatprep.subr.mxu0 0.0
      %1550 = vmatpush1.msra.mxu0 0.0
      %1551 = vmatprep.subr.mxu0 0.0
      %1552 = vmatpush1.msra.mxu0 0.0
      %1553 = vmatprep.subr.mxu0 0.0
      %1554 = vmatpush1.msra.mxu0 0.0
      %1555 = vmatprep.subr.mxu0 0.0
      %1556 = vmatpush1.msra.mxu0 0.0
      %1557 = vmatprep.subr.mxu0 0.0
      %1558 = vmatpush1.msra.mxu0 0.0
      %1559 = vmatprep.subr.mxu0 0.0
      %1560 = vmatpush1.msra.mxu0 0.0
      %1561 = vmatprep.subr.mxu0 0.0
      %1562 = vmatpush1.msra.mxu0 0.0
      %1563 = vmatprep.subr.mxu0 0.0
      %1564 = vmatpush1.msra.mxu0 0.0
      %1565 = vmatprep.subr.mxu0 0.0
      %1566 = vmatpush1.msra.mxu0 0.0
      %1567 = vmatprep.subr.mxu0 0.0
      %1568 = vmatpush1.msra.mxu0 0.0
      %1569 = vmatprep.subr.mxu0 0.0
      %1570 = vmatpush1.msra.mxu0 0.0
      %1571 = vmatprep.subr.mxu0 0.0
      %1572 = vmatpush1.msra.mxu0 0.0
      %1573 = vmatprep.subr.mxu0 0.0
      %1574 = vmatpush1.msra.mxu0 0.0
      %1575 = vmatprep.subr.mxu0 0.0
      %1576 = vmatpush1.msra.mxu0 0.0
      %1577 = vmatprep.subr.mxu0 0.0
      %1578 = vmatpush1.msra.mxu0 0.0
      %1579 = vmatprep.subr.mxu0 0.0
      %1580 = vmatpush1.msra.mxu0 0.0
      %1581 = vmatprep.subr.mxu0 0.0
      %1582 = vmatpush1.msra.mxu0 0.0
      %1583 = vmatprep.subr.mxu0 0.0
      %1584 = vmatpush1.msra.mxu0 0.0
      %1585 = vmatprep.subr.mxu0 0.0
      %1586 = vmatpush1.msra.mxu0 0.0
      %1587 = vmatprep.subr.mxu0 0.0
      %1588 = vmatpush1.msra.mxu0 0.0
      %1589 = vmatprep.subr.mxu0 0.0
      %1590 = vmatpush1.msra.mxu0 0.0
      %1591 = vmatprep.subr.mxu0 0.0
      %1592 = vmatpush1.msra.mxu0 0.0
      %1593 = vmatprep.subr.mxu0 0.0
      %1594 = vmatpush1.msra.mxu0 0.0
      %1595 = vmatprep.subr.mxu0 0.0
      %1596 = vmatpush1.msra.mxu0 0.0
      %1597 = vmatprep.mubr.f32.mxu0 0.0
      %1598 = vmatmul.mubr.f32.gmra.mrb[0].mxu0 %v1521
      %v1599 = vpop.f32.mrb[0].mxu0
      %v1600 = vadd.f32 0.0, %v1599
      %v1601 = vpop.f32.mrb[0].mxu0
      %v1602 = vadd.f32 0.0, %v1601
      %1603 = vdwg.mxu0
      %1604 = vmatprep.subr.mxu0 %v1529
      %1605 = vmatpush1.msra.mxu0 %v1527
      %1606 = vmatprep.subr.mxu0 0.0
      %1607 = vmatpush1.msra.mxu0 0.0
      %1608 = vmatprep.subr.mxu0 0.0
      %1609 = vmatpush1.msra.mxu0 0.0
      %1610 = vmatprep.subr.mxu0 0.0
      %1611 = vmatpush1.msra.mxu0 0.0
      %1612 = vmatprep.subr.mxu0 0.0
      %1613 = vmatpush1.msra.mxu0 0.0
      %1614 = vmatprep.subr.mxu0 0.0
      %1615 = vmatpush1.msra.mxu0 0.0
      %1616 = vmatprep.subr.mxu0 0.0
      %1617 = vmatpush1.msra.mxu0 0.0
      %1618 = vmatprep.subr.mxu0 0.0
      %1619 = vmatpush1.msra.mxu0 0.0
      %1620 = vmatprep.subr.mxu0 0.0
      %1621 = vmatpush1.msra.mxu0 0.0
      %1622 = vmatprep.subr.mxu0 0.0
      %1623 = vmatpush1.msra.mxu0 0.0
      %1624 = vmatprep.subr.mxu0 0.0
      %1625 = vmatpush1.msra.mxu0 0.0
      %1626 = vmatprep.subr.mxu0 0.0
      %1627 = vmatpush1.msra.mxu0 0.0
      %1628 = vmatprep.subr.mxu0 0.0
      %1629 = vmatpush1.msra.mxu0 0.0
      %1630 = vmatprep.subr.mxu0 0.0
      %1631 = vmatpush1.msra.mxu0 0.0
      %1632 = vmatprep.subr.mxu0 0.0
      %1633 = vmatpush1.msra.mxu0 0.0
      %1634 = vmatprep.subr.mxu0 0.0
      %1635 = vmatpush1.msra.mxu0 0.0
      %1636 = vmatprep.subr.mxu0 0.0
      %1637 = vmatpush1.msra.mxu0 0.0
      %1638 = vmatprep.subr.mxu0 0.0
      %1639 = vmatpush1.msra.mxu0 0.0
      %1640 = vmatprep.subr.mxu0 0.0
      %1641 = vmatpush1.msra.mxu0 0.0
      %1642 = vmatprep.subr.mxu0 0.0
      %1643 = vmatpush1.msra.mxu0 0.0
      %1644 = vmatprep.subr.mxu0 0.0
      %1645 = vmatpush1.msra.mxu0 0.0
      %1646 = vmatprep.subr.mxu0 0.0
      %1647 = vmatpush1.msra.mxu0 0.0
      %1648 = vmatprep.subr.mxu0 0.0
      %1649 = vmatpush1.msra.mxu0 0.0
      %1650 = vmatprep.subr.mxu0 0.0
      %1651 = vmatpush1.msra.mxu0 0.0
      %1652 = vmatprep.subr.mxu0 0.0
      %1653 = vmatpush1.msra.mxu0 0.0
      %1654 = vmatprep.subr.mxu0 0.0
      %1655 = vmatpush1.msra.mxu0 0.0
      %1656 = vmatprep.subr.mxu0 0.0
      %1657 = vmatpush1.msra.mxu0 0.0
      %1658 = vmatprep.subr.mxu0 0.0
      %1659 = vmatpush1.msra.mxu0 0.0
      %1660 = vmatprep.subr.mxu0 0.0
      %1661 = vmatpush1.msra.mxu0 0.0
      %1662 = vmatprep.subr.mxu0 0.0
      %1663 = vmatpush1.msra.mxu0 0.0
      %1664 = vmatprep.subr.mxu0 0.0
      %1665 = vmatpush1.msra.mxu0 0.0
      %1666 = vmatprep.subr.mxu0 0.0
      %1667 = vmatpush1.msra.mxu0 0.0
      %1668 = vmatprep.mubr.f32.mxu0 0.0
      %1669 = vmatmul.mubr.f32.gmra.mrb[0].mxu0 %v1521
      %v1670 = vpop.f32.mrb[0].mxu0
      %v1671 = vadd.f32 0.0, %v1670
      %v1672 = vpop.f32.mrb[0].mxu0
      %v1673 = vadd.f32 0.0, %v1672
      %1674 = vdwg.mxu0
      %1675 = vmatprep.subr.mxu0 0.0
      %1676 = vmatpush1.msra.mxu0 %v1531
      %1677 = vmatprep.subr.mxu0 0.0
      %1678 = vmatpush1.msra.mxu0 0.0
      %1679 = vmatprep.subr.mxu0 0.0
      %1680 = vmatpush1.msra.mxu0 0.0
      %1681 = vmatprep.subr.mxu0 0.0
      %1682 = vmatpush1.msra.mxu0 0.0
      %1683 = vmatprep.subr.mxu0 0.0
      %1684 = vmatpush1.msra.mxu0 0.0
      %1685 = vmatprep.subr.mxu0 0.0
      %1686 = vmatpush1.msra.mxu0 0.0
      %1687 = vmatprep.subr.mxu0 0.0
      %1688 = vmatpush1.msra.mxu0 0.0
      %1689 = vmatprep.subr.mxu0 0.0
      %1690 = vmatpush1.msra.mxu0 0.0
      %1691 = vmatprep.subr.mxu0 0.0
      %1692 = vmatpush1.msra.mxu0 0.0
      %1693 = vmatprep.subr.mxu0 0.0
      %1694 = vmatpush1.msra.mxu0 0.0
      %1695 = vmatprep.subr.mxu0 0.0
      %1696 = vmatpush1.msra.mxu0 0.0
      %1697 = vmatprep.subr.mxu0 0.0
      %1698 = vmatpush1.msra.mxu0 0.0
      %1699 = vmatprep.subr.mxu0 0.0
      %1700 = vmatpush1.msra.mxu0 0.0
      %1701 = vmatprep.subr.mxu0 0.0
      %1702 = vmatpush1.msra.mxu0 0.0
      %1703 = vmatprep.subr.mxu0 0.0
      %1704 = vmatpush1.msra.mxu0 0.0
      %1705 = vmatprep.subr.mxu0 0.0
      %1706 = vmatpush1.msra.mxu0 0.0
      %1707 = vmatprep.subr.mxu0 0.0
      %1708 = vmatpush1.msra.mxu0 0.0
      %1709 = vmatprep.subr.mxu0 0.0
      %1710 = vmatpush1.msra.mxu0 0.0
      %1711 = vmatprep.subr.mxu0 0.0
      %1712 = vmatpush1.msra.mxu0 0.0
      %1713 = vmatprep.subr.mxu0 0.0
      %1714 = vmatpush1.msra.mxu0 0.0
      %1715 = vmatprep.subr.mxu0 0.0
      %1716 = vmatpush1.msra.mxu0 0.0
      %1717 = vmatprep.subr.mxu0 0.0
      %1718 = vmatpush1.msra.mxu0 0.0
      %1719 = vmatprep.subr.mxu0 0.0
      %1720 = vmatpush1.msra.mxu0 0.0
      %1721 = vmatprep.subr.mxu0 0.0
      %1722 = vmatpush1.msra.mxu0 0.0
      %1723 = vmatprep.subr.mxu0 0.0
      %1724 = vmatpush1.msra.mxu0 0.0
      %1725 = vmatprep.subr.mxu0 0.0
      %1726 = vmatpush1.msra.mxu0 0.0
      %1727 = vmatprep.subr.mxu0 0.0
      %1728 = vmatpush1.msra.mxu0 0.0
      %1729 = vmatprep.subr.mxu0 0.0
      %1730 = vmatpush1.msra.mxu0 0.0
      %1731 = vmatprep.subr.mxu0 0.0
      %1732 = vmatpush1.msra.mxu0 0.0
      %1733 = vmatprep.subr.mxu0 0.0
      %1734 = vmatpush1.msra.mxu0 0.0
      %1735 = vmatprep.subr.mxu0 0.0
      %1736 = vmatpush1.msra.mxu0 0.0
      %1737 = vmatprep.subr.mxu0 0.0
      %1738 = vmatpush1.msra.mxu0 0.0
      %1739 = vmatprep.mubr.f32.mxu0 0.0
      %1740 = vmatmul.mubr.f32.gmra.mrb[0].mxu0 %v1521
      %v1741 = vpop.f32.mrb[0].mxu0
      %v1742 = vadd.f32 0.0, %v1741
      %v1743 = vpop.f32.mrb[0].mxu0
      %1744 = vdwg.mxu0
      %v1745 = vadd.f32 %v1490, %v1600
      %v1746 = vadd.f32 %v1491, %v1602
      %v1747 = vadd.f32 %v1492, %v1671
      %v1748 = vadd.f32 %v1493, %v1673
      %v1749 = vadd.f32 %v1494, %v1742
      %v1750 = vld [vmem:[%s246] sm:$0xff]
      %v1751 = vld [vmem:[%s246 + $0x8] sm:$0xff]
      %v1752 = vld [vmem:[%s246 + $0x10] sm:$0xf]
      %s1753 = scalar_lea.vmem %s2, 48
      %v1754 = vld [vmem:[%s1753] sm:$0xff]
      %v1758 = vcombine.high %v1750, %v1750
      %v1759 = vcombine.high %v1751, %v1751
      %1760 = vrot.lane.b32.xlu0 %v1750, 80
      %v1761 = vpop.permute.xlu0 %1760
      %1762 = vrot.lane.b32.xlu0 %v1758, 80
      %v1763 = vpop.permute.xlu0 %1762
      %1764 = vrot.lane.b32.xlu0 %v1751, 80
      %v1765 = vpop.permute.xlu0 %1764
      %1766 = vrot.lane.b32.xlu0 %v1759, 80
      %v1767 = vpop.permute.xlu0 %1766
      %1768 = vrot.lane.b32.xlu0 %v1752, 80
      %v1769 = vpop.permute.xlu0 %1768
      %vm1770 = vcmask 654336
      %v1771 = vsel %vm1770, %v1761, %v1763
      %v1772 = vsel %vm1770, %v1763, %v1765
      %v1773 = vsel %vm1770, %v1765, %v1767
      %v1774 = vsel %vm1770, %v1767, %v1769
      %v1776 = vsel %vm278, %v1754, 0
      %v1778 = vsel %vm282, %v1771, 0
      %v1780 = vsel %vm282, %v1772, 0
      %v1782 = vsel %vm282, %v1773, 0
      %v1784 = vsel %vm282, %v1774, 0
      %v1786 = vsel %vm282, %v1769, 0
      %1788 = vmatprep.subr.mxu0 %v1780
      %1789 = vmatpush1.msra.mxu0 %v1778
      %1790 = vmatprep.subr.mxu0 0.0
      %1791 = vmatpush1.msra.mxu0 0.0
      %1792 = vmatprep.subr.mxu0 0.0
      %1793 = vmatpush1.msra.mxu0 0.0
      %1794 = vmatprep.subr.mxu0 0.0
      %1795 = vmatpush1.msra.mxu0 0.0
      %1796 = vmatprep.subr.mxu0 0.0
      %1797 = vmatpush1.msra.mxu0 0.0
      %1798 = vmatprep.subr.mxu0 0.0
      %1799 = vmatpush1.msra.mxu0 0.0
      %1800 = vmatprep.subr.mxu0 0.0
      %1801 = vmatpush1.msra.mxu0 0.0
      %1802 = vmatprep.subr.mxu0 0.0
      %1803 = vmatpush1.msra.mxu0 0.0
      %1804 = vmatprep.subr.mxu0 0.0
      %1805 = vmatpush1.msra.mxu0 0.0
      %1806 = vmatprep.subr.mxu0 0.0
      %1807 = vmatpush1.msra.mxu0 0.0
      %1808 = vmatprep.subr.mxu0 0.0
      %1809 = vmatpush1.msra.mxu0 0.0
      %1810 = vmatprep.subr.mxu0 0.0
      %1811 = vmatpush1.msra.mxu0 0.0
      %1812 = vmatprep.subr.mxu0 0.0
      %1813 = vmatpush1.msra.mxu0 0.0
      %1814 = vmatprep.subr.mxu0 0.0
      %1815 = vmatpush1.msra.mxu0 0.0
      %1816 = vmatprep.subr.mxu0 0.0
      %1817 = vmatpush1.msra.mxu0 0.0
      %1818 = vmatprep.subr.mxu0 0.0
      %1819 = vmatpush1.msra.mxu0 0.0
      %1820 = vmatprep.subr.mxu0 0.0
      %1821 = vmatpush1.msra.mxu0 0.0
      %1822 = vmatprep.subr.mxu0 0.0
      %1823 = vmatpush1.msra.mxu0 0.0
      %1824 = vmatprep.subr.mxu0 0.0
      %1825 = vmatpush1.msra.mxu0 0.0
      %1826 = vmatprep.subr.mxu0 0.0
      %1827 = vmatpush1.msra.mxu0 0.0
      %1828 = vmatprep.subr.mxu0 0.0
      %1829 = vmatpush1.msra.mxu0 0.0
      %1830 = vmatprep.subr.mxu0 0.0
      %1831 = vmatpush1.msra.mxu0 0.0
      %1832 = vmatprep.subr.mxu0 0.0
      %1833 = vmatpush1.msra.mxu0 0.0
      %1834 = vmatprep.subr.mxu0 0.0
      %1835 = vmatpush1.msra.mxu0 0.0
      %1836 = vmatprep.subr.mxu0 0.0
      %1837 = vmatpush1.msra.mxu0 0.0
      %1838 = vmatprep.subr.mxu0 0.0
      %1839 = vmatpush1.msra.mxu0 0.0
      %1840 = vmatprep.subr.mxu0 0.0
      %1841 = vmatpush1.msra.mxu0 0.0
      %1842 = vmatprep.subr.mxu0 0.0
      %1843 = vmatpush1.msra.mxu0 0.0
      %1844 = vmatprep.subr.mxu0 0.0
      %1845 = vmatpush1.msra.mxu0 0.0
      %1846 = vmatprep.subr.mxu0 0.0
      %1847 = vmatpush1.msra.mxu0 0.0
      %1848 = vmatprep.subr.mxu0 0.0
      %1849 = vmatpush1.msra.mxu0 0.0
      %1850 = vmatprep.subr.mxu0 0.0
      %1851 = vmatpush1.msra.mxu0 0.0
      %1852 = vmatprep.mubr.f32.mxu0 0.0
      %1853 = vmatmul.mubr.f32.gmra.mrb[0].mxu0 %v1776
      %v1854 = vpop.f32.mrb[0].mxu0
      %v1855 = vadd.f32 0.0, %v1854
      %v1856 = vpop.f32.mrb[0].mxu0
      %v1857 = vadd.f32 0.0, %v1856
      %1858 = vdwg.mxu0
      %1859 = vmatprep.subr.mxu0 %v1784
      %1860 = vmatpush1.msra.mxu0 %v1782
      %1861 = vmatprep.subr.mxu0 0.0
      %1862 = vmatpush1.msra.mxu0 0.0
      %1863 = vmatprep.subr.mxu0 0.0
      %1864 = vmatpush1.msra.mxu0 0.0
      %1865 = vmatprep.subr.mxu0 0.0
      %1866 = vmatpush1.msra.mxu0 0.0
      %1867 = vmatprep.subr.mxu0 0.0
      %1868 = vmatpush1.msra.mxu0 0.0
      %1869 = vmatprep.subr.mxu0 0.0
      %1870 = vmatpush1.msra.mxu0 0.0
      %1871 = vmatprep.subr.mxu0 0.0
      %1872 = vmatpush1.msra.mxu0 0.0
      %1873 = vmatprep.subr.mxu0 0.0
      %1874 = vmatpush1.msra.mxu0 0.0
      %1875 = vmatprep.subr.mxu0 0.0
      %1876 = vmatpush1.msra.mxu0 0.0
      %1877 = vmatprep.subr.mxu0 0.0
      %1878 = vmatpush1.msra.mxu0 0.0
      %1879 = vmatprep.subr.mxu0 0.0
      %1880 = vmatpush1.msra.mxu0 0.0
      %1881 = vmatprep.subr.mxu0 0.0
      %1882 = vmatpush1.msra.mxu0 0.0
      %1883 = vmatprep.subr.mxu0 0.0
      %1884 = vmatpush1.msra.mxu0 0.0
      %1885 = vmatprep.subr.mxu0 0.0
      %1886 = vmatpush1.msra.mxu0 0.0
      %1887 = vmatprep.subr.mxu0 0.0
      %1888 = vmatpush1.msra.mxu0 0.0
      %1889 = vmatprep.subr.mxu0 0.0
      %1890 = vmatpush1.msra.mxu0 0.0
      %1891 = vmatprep.subr.mxu0 0.0
      %1892 = vmatpush1.msra.mxu0 0.0
      %1893 = vmatprep.subr.mxu0 0.0
      %1894 = vmatpush1.msra.mxu0 0.0
      %1895 = vmatprep.subr.mxu0 0.0
      %1896 = vmatpush1.msra.mxu0 0.0
      %1897 = vmatprep.subr.mxu0 0.0
      %1898 = vmatpush1.msra.mxu0 0.0
      %1899 = vmatprep.subr.mxu0 0.0
      %1900 = vmatpush1.msra.mxu0 0.0
      %1901 = vmatprep.subr.mxu0 0.0
      %1902 = vmatpush1.msra.mxu0 0.0
      %1903 = vmatprep.subr.mxu0 0.0
      %1904 = vmatpush1.msra.mxu0 0.0
      %1905 = vmatprep.subr.mxu0 0.0
      %1906 = vmatpush1.msra.mxu0 0.0
      %1907 = vmatprep.subr.mxu0 0.0
      %1908 = vmatpush1.msra.mxu0 0.0
      %1909 = vmatprep.subr.mxu0 0.0
      %1910 = vmatpush1.msra.mxu0 0.0
      %1911 = vmatprep.subr.mxu0 0.0
      %1912 = vmatpush1.msra.mxu0 0.0
      %1913 = vmatprep.subr.mxu0 0.0
      %1914 = vmatpush1.msra.mxu0 0.0
      %1915 = vmatprep.subr.mxu0 0.0
      %1916 = vmatpush1.msra.mxu0 0.0
      %1917 = vmatprep.subr.mxu0 0.0
      %1918 = vmatpush1.msra.mxu0 0.0
      %1919 = vmatprep.subr.mxu0 0.0
      %1920 = vmatpush1.msra.mxu0 0.0
      %1921 = vmatprep.subr.mxu0 0.0
      %1922 = vmatpush1.msra.mxu0 0.0
      %1923 = vmatprep.mubr.f32.mxu0 0.0
      %1924 = vmatmul.mubr.f32.gmra.mrb[0].mxu0 %v1776
      %v1925 = vpop.f32.mrb[0].mxu0
      %v1926 = vadd.f32 0.0, %v1925
      %v1927 = vpop.f32.mrb[0].mxu0
      %v1928 = vadd.f32 0.0, %v1927
      %1929 = vdwg.mxu0
      %1930 = vmatprep.subr.mxu0 0.0
      %1931 = vmatpush1.msra.mxu0 %v1786
      %1932 = vmatprep.subr.mxu0 0.0
      %1933 = vmatpush1.msra.mxu0 0.0
      %1934 = vmatprep.subr.mxu0 0.0
      %1935 = vmatpush1.msra.mxu0 0.0
      %1936 = vmatprep.subr.mxu0 0.0
      %1937 = vmatpush1.msra.mxu0 0.0
      %1938 = vmatprep.subr.mxu0 0.0
      %1939 = vmatpush1.msra.mxu0 0.0
      %1940 = vmatprep.subr.mxu0 0.0
      %1941 = vmatpush1.msra.mxu0 0.0
      %1942 = vmatprep.subr.mxu0 0.0
      %1943 = vmatpush1.msra.mxu0 0.0
      %1944 = vmatprep.subr.mxu0 0.0
      %1945 = vmatpush1.msra.mxu0 0.0
      %1946 = vmatprep.subr.mxu0 0.0
      %1947 = vmatpush1.msra.mxu0 0.0
      %1948 = vmatprep.subr.mxu0 0.0
      %1949 = vmatpush1.msra.mxu0 0.0
      %1950 = vmatprep.subr.mxu0 0.0
      %1951 = vmatpush1.msra.mxu0 0.0
      %1952 = vmatprep.subr.mxu0 0.0
      %1953 = vmatpush1.msra.mxu0 0.0
      %1954 = vmatprep.subr.mxu0 0.0
      %1955 = vmatpush1.msra.mxu0 0.0
      %1956 = vmatprep.subr.mxu0 0.0
      %1957 = vmatpush1.msra.mxu0 0.0
      %1958 = vmatprep.subr.mxu0 0.0
      %1959 = vmatpush1.msra.mxu0 0.0
      %1960 = vmatprep.subr.mxu0 0.0
      %1961 = vmatpush1.msra.mxu0 0.0
      %1962 = vmatprep.subr.mxu0 0.0
      %1963 = vmatpush1.msra.mxu0 0.0
      %1964 = vmatprep.subr.mxu0 0.0
      %1965 = vmatpush1.msra.mxu0 0.0
      %1966 = vmatprep.subr.mxu0 0.0
      %1967 = vmatpush1.msra.mxu0 0.0
      %1968 = vmatprep.subr.mxu0 0.0
      %1969 = vmatpush1.msra.mxu0 0.0
      %1970 = vmatprep.subr.mxu0 0.0
      %1971 = vmatpush1.msra.mxu0 0.0
      %1972 = vmatprep.subr.mxu0 0.0
      %1973 = vmatpush1.msra.mxu0 0.0
      %1974 = vmatprep.subr.mxu0 0.0
      %1975 = vmatpush1.msra.mxu0 0.0
      %1976 = vmatprep.subr.mxu0 0.0
      %1977 = vmatpush1.msra.mxu0 0.0
      %1978 = vmatprep.subr.mxu0 0.0
      %1979 = vmatpush1.msra.mxu0 0.0
      %1980 = vmatprep.subr.mxu0 0.0
      %1981 = vmatpush1.msra.mxu0 0.0
      %1982 = vmatprep.subr.mxu0 0.0
      %1983 = vmatpush1.msra.mxu0 0.0
      %1984 = vmatprep.subr.mxu0 0.0
      %1985 = vmatpush1.msra.mxu0 0.0
      %1986 = vmatprep.subr.mxu0 0.0
      %1987 = vmatpush1.msra.mxu0 0.0
      %1988 = vmatprep.subr.mxu0 0.0
      %1989 = vmatpush1.msra.mxu0 0.0
      %1990 = vmatprep.subr.mxu0 0.0
      %1991 = vmatpush1.msra.mxu0 0.0
      %1992 = vmatprep.subr.mxu0 0.0
      %1993 = vmatpush1.msra.mxu0 0.0
      %1994 = vmatprep.mubr.f32.mxu0 0.0
      %1995 = vmatmul.mubr.f32.gmra.mrb[0].mxu0 %v1776
      %v1996 = vpop.f32.mrb[0].mxu0
      %v1997 = vadd.f32 0.0, %v1996
      %v1998 = vpop.f32.mrb[0].mxu0
      %1999 = vdwg.mxu0
      %v2000 = vadd.f32 %v1745, %v1855
      %v2001 = vadd.f32 %v1746, %v1857
      %v2002 = vadd.f32 %v1747, %v1926
      %v2003 = vadd.f32 %v1748, %v1928
      %v2004 = vadd.f32 %v1749, %v1997
      %v2005 = vld [vmem:[%s246] sm:$0xff]
      %v2006 = vld [vmem:[%s246 + $0x8] sm:$0xff]
      %v2007 = vld [vmem:[%s246 + $0x10] sm:$0xf]
      %s2008 = scalar_lea.vmem %s2, 56
      %v2009 = vld [vmem:[%s2008] sm:$0xff]
      %v2013 = vcombine.high %v2005, %v2005
      %v2014 = vcombine.high %v2006, %v2006
      %2015 = vrot.lane.b32.xlu0 %v2005, 79
      %v2016 = vpop.permute.xlu0 %2015
      %2017 = vrot.lane.b32.xlu0 %v2013, 79
      %v2018 = vpop.permute.xlu0 %2017
      %2019 = vrot.lane.b32.xlu0 %v2006, 79
      %v2020 = vpop.permute.xlu0 %2019
      %2021 = vrot.lane.b32.xlu0 %v2014, 79
      %v2022 = vpop.permute.xlu0 %2021
      %2023 = vrot.lane.b32.xlu0 %v2007, 79
      %v2024 = vpop.permute.xlu0 %2023
      %vm2025 = vcmask 646144
      %v2026 = vsel %vm2025, %v2016, %v2018
      %v2027 = vsel %vm2025, %v2018, %v2020
      %v2028 = vsel %vm2025, %v2020, %v2022
      %v2029 = vsel %vm2025, %v2022, %v2024
      %v2031 = vsel %vm278, %v2009, 0
      %v2033 = vsel %vm282, %v2026, 0
      %v2035 = vsel %vm282, %v2027, 0
      %v2037 = vsel %vm282, %v2028, 0
      %v2039 = vsel %vm282, %v2029, 0
      %v2041 = vsel %vm282, %v2024, 0
      %2043 = vmatprep.subr.mxu0 %v2035
      %2044 = vmatpush1.msra.mxu0 %v2033
      %2045 = vmatprep.subr.mxu0 0.0
      %2046 = vmatpush1.msra.mxu0 0.0
      %2047 = vmatprep.subr.mxu0 0.0
      %2048 = vmatpush1.msra.mxu0 0.0
      %2049 = vmatprep.subr.mxu0 0.0
      %2050 = vmatpush1.msra.mxu0 0.0
      %2051 = vmatprep.subr.mxu0 0.0
      %2052 = vmatpush1.msra.mxu0 0.0
      %2053 = vmatprep.subr.mxu0 0.0
      %2054 = vmatpush1.msra.mxu0 0.0
      %2055 = vmatprep.subr.mxu0 0.0
      %2056 = vmatpush1.msra.mxu0 0.0
      %2057 = vmatprep.subr.mxu0 0.0
      %2058 = vmatpush1.msra.mxu0 0.0
      %2059 = vmatprep.subr.mxu0 0.0
      %2060 = vmatpush1.msra.mxu0 0.0
      %2061 = vmatprep.subr.mxu0 0.0
      %2062 = vmatpush1.msra.mxu0 0.0
      %2063 = vmatprep.subr.mxu0 0.0
      %2064 = vmatpush1.msra.mxu0 0.0
      %2065 = vmatprep.subr.mxu0 0.0
      %2066 = vmatpush1.msra.mxu0 0.0
      %2067 = vmatprep.subr.mxu0 0.0
      %2068 = vmatpush1.msra.mxu0 0.0
      %2069 = vmatprep.subr.mxu0 0.0
      %2070 = vmatpush1.msra.mxu0 0.0
      %2071 = vmatprep.subr.mxu0 0.0
      %2072 = vmatpush1.msra.mxu0 0.0
      %2073 = vmatprep.subr.mxu0 0.0
      %2074 = vmatpush1.msra.mxu0 0.0
      %2075 = vmatprep.subr.mxu0 0.0
      %2076 = vmatpush1.msra.mxu0 0.0
      %2077 = vmatprep.subr.mxu0 0.0
      %2078 = vmatpush1.msra.mxu0 0.0
      %2079 = vmatprep.subr.mxu0 0.0
      %2080 = vmatpush1.msra.mxu0 0.0
      %2081 = vmatprep.subr.mxu0 0.0
      %2082 = vmatpush1.msra.mxu0 0.0
      %2083 = vmatprep.subr.mxu0 0.0
      %2084 = vmatpush1.msra.mxu0 0.0
      %2085 = vmatprep.subr.mxu0 0.0
      %2086 = vmatpush1.msra.mxu0 0.0
      %2087 = vmatprep.subr.mxu0 0.0
      %2088 = vmatpush1.msra.mxu0 0.0
      %2089 = vmatprep.subr.mxu0 0.0
      %2090 = vmatpush1.msra.mxu0 0.0
      %2091 = vmatprep.subr.mxu0 0.0
      %2092 = vmatpush1.msra.mxu0 0.0
      %2093 = vmatprep.subr.mxu0 0.0
      %2094 = vmatpush1.msra.mxu0 0.0
      %2095 = vmatprep.subr.mxu0 0.0
      %2096 = vmatpush1.msra.mxu0 0.0
      %2097 = vmatprep.subr.mxu0 0.0
      %2098 = vmatpush1.msra.mxu0 0.0
      %2099 = vmatprep.subr.mxu0 0.0
      %2100 = vmatpush1.msra.mxu0 0.0
      %2101 = vmatprep.subr.mxu0 0.0
      %2102 = vmatpush1.msra.mxu0 0.0
      %2103 = vmatprep.subr.mxu0 0.0
      %2104 = vmatpush1.msra.mxu0 0.0
      %2105 = vmatprep.subr.mxu0 0.0
      %2106 = vmatpush1.msra.mxu0 0.0
      %2107 = vmatprep.mubr.f32.mxu0 0.0
      %2108 = vmatmul.mubr.f32.gmra.mrb[0].mxu0 %v2031
      %v2109 = vpop.f32.mrb[0].mxu0
      %v2110 = vadd.f32 0.0, %v2109
      %v2111 = vpop.f32.mrb[0].mxu0
      %v2112 = vadd.f32 0.0, %v2111
      %2113 = vdwg.mxu0
      %2114 = vmatprep.subr.mxu0 %v2039
      %2115 = vmatpush1.msra.mxu0 %v2037
      %2116 = vmatprep.subr.mxu0 0.0
      %2117 = vmatpush1.msra.mxu0 0.0
      %2118 = vmatprep.subr.mxu0 0.0
      %2119 = vmatpush1.msra.mxu0 0.0
      %2120 = vmatprep.subr.mxu0 0.0
      %2121 = vmatpush1.msra.mxu0 0.0
      %2122 = vmatprep.subr.mxu0 0.0
      %2123 = vmatpush1.msra.mxu0 0.0
      %2124 = vmatprep.subr.mxu0 0.0
      %2125 = vmatpush1.msra.mxu0 0.0
      %2126 = vmatprep.subr.mxu0 0.0
      %2127 = vmatpush1.msra.mxu0 0.0
      %2128 = vmatprep.subr.mxu0 0.0
      %2129 = vmatpush1.msra.mxu0 0.0
      %2130 = vmatprep.subr.mxu0 0.0
      %2131 = vmatpush1.msra.mxu0 0.0
      %2132 = vmatprep.subr.mxu0 0.0
      %2133 = vmatpush1.msra.mxu0 0.0
      %2134 = vmatprep.subr.mxu0 0.0
      %2135 = vmatpush1.msra.mxu0 0.0
      %2136 = vmatprep.subr.mxu0 0.0
      %2137 = vmatpush1.msra.mxu0 0.0
      %2138 = vmatprep.subr.mxu0 0.0
      %2139 = vmatpush1.msra.mxu0 0.0
      %2140 = vmatprep.subr.mxu0 0.0
      %2141 = vmatpush1.msra.mxu0 0.0
      %2142 = vmatprep.subr.mxu0 0.0
      %2143 = vmatpush1.msra.mxu0 0.0
      %2144 = vmatprep.subr.mxu0 0.0
      %2145 = vmatpush1.msra.mxu0 0.0
      %2146 = vmatprep.subr.mxu0 0.0
      %2147 = vmatpush1.msra.mxu0 0.0
      %2148 = vmatprep.subr.mxu0 0.0
      %2149 = vmatpush1.msra.mxu0 0.0
      %2150 = vmatprep.subr.mxu0 0.0
      %2151 = vmatpush1.msra.mxu0 0.0
      %2152 = vmatprep.subr.mxu0 0.0
      %2153 = vmatpush1.msra.mxu0 0.0
      %2154 = vmatprep.subr.mxu0 0.0
      %2155 = vmatpush1.msra.mxu0 0.0
      %2156 = vmatprep.subr.mxu0 0.0
      %2157 = vmatpush1.msra.mxu0 0.0
      %2158 = vmatprep.subr.mxu0 0.0
      %2159 = vmatpush1.msra.mxu0 0.0
      %2160 = vmatprep.subr.mxu0 0.0
      %2161 = vmatpush1.msra.mxu0 0.0
      %2162 = vmatprep.subr.mxu0 0.0
      %2163 = vmatpush1.msra.mxu0 0.0
      %2164 = vmatprep.subr.mxu0 0.0
      %2165 = vmatpush1.msra.mxu0 0.0
      %2166 = vmatprep.subr.mxu0 0.0
      %2167 = vmatpush1.msra.mxu0 0.0
      %2168 = vmatprep.subr.mxu0 0.0
      %2169 = vmatpush1.msra.mxu0 0.0
      %2170 = vmatprep.subr.mxu0 0.0
      %2171 = vmatpush1.msra.mxu0 0.0
      %2172 = vmatprep.subr.mxu0 0.0
      %2173 = vmatpush1.msra.mxu0 0.0
      %2174 = vmatprep.subr.mxu0 0.0
      %2175 = vmatpush1.msra.mxu0 0.0
      %2176 = vmatprep.subr.mxu0 0.0
      %2177 = vmatpush1.msra.mxu0 0.0
      %2178 = vmatprep.mubr.f32.mxu0 0.0
      %2179 = vmatmul.mubr.f32.gmra.mrb[0].mxu0 %v2031
      %v2180 = vpop.f32.mrb[0].mxu0
      %v2181 = vadd.f32 0.0, %v2180
      %v2182 = vpop.f32.mrb[0].mxu0
      %v2183 = vadd.f32 0.0, %v2182
      %2184 = vdwg.mxu0
      %2185 = vmatprep.subr.mxu0 0.0
      %2186 = vmatpush1.msra.mxu0 %v2041
      %2187 = vmatprep.subr.mxu0 0.0
      %2188 = vmatpush1.msra.mxu0 0.0
      %2189 = vmatprep.subr.mxu0 0.0
      %2190 = vmatpush1.msra.mxu0 0.0
      %2191 = vmatprep.subr.mxu0 0.0
      %2192 = vmatpush1.msra.mxu0 0.0
      %2193 = vmatprep.subr.mxu0 0.0
      %2194 = vmatpush1.msra.mxu0 0.0
      %2195 = vmatprep.subr.mxu0 0.0
      %2196 = vmatpush1.msra.mxu0 0.0
      %2197 = vmatprep.subr.mxu0 0.0
      %2198 = vmatpush1.msra.mxu0 0.0
      %2199 = vmatprep.subr.mxu0 0.0
      %2200 = vmatpush1.msra.mxu0 0.0
      %2201 = vmatprep.subr.mxu0 0.0
      %2202 = vmatpush1.msra.mxu0 0.0
      %2203 = vmatprep.subr.mxu0 0.0
      %2204 = vmatpush1.msra.mxu0 0.0
      %2205 = vmatprep.subr.mxu0 0.0
      %2206 = vmatpush1.msra.mxu0 0.0
      %2207 = vmatprep.subr.mxu0 0.0
      %2208 = vmatpush1.msra.mxu0 0.0
      %2209 = vmatprep.subr.mxu0 0.0
      %2210 = vmatpush1.msra.mxu0 0.0
      %2211 = vmatprep.subr.mxu0 0.0
      %2212 = vmatpush1.msra.mxu0 0.0
      %2213 = vmatprep.subr.mxu0 0.0
      %2214 = vmatpush1.msra.mxu0 0.0
      %2215 = vmatprep.subr.mxu0 0.0
      %2216 = vmatpush1.msra.mxu0 0.0
      %2217 = vmatprep.subr.mxu0 0.0
      %2218 = vmatpush1.msra.mxu0 0.0
      %2219 = vmatprep.subr.mxu0 0.0
      %2220 = vmatpush1.msra.mxu0 0.0
      %2221 = vmatprep.subr.mxu0 0.0
      %2222 = vmatpush1.msra.mxu0 0.0
      %2223 = vmatprep.subr.mxu0 0.0
      %2224 = vmatpush1.msra.mxu0 0.0
      %2225 = vmatprep.subr.mxu0 0.0
      %2226 = vmatpush1.msra.mxu0 0.0
      %2227 = vmatprep.subr.mxu0 0.0
      %2228 = vmatpush1.msra.mxu0 0.0
      %2229 = vmatprep.subr.mxu0 0.0
      %2230 = vmatpush1.msra.mxu0 0.0
      %2231 = vmatprep.subr.mxu0 0.0
      %2232 = vmatpush1.msra.mxu0 0.0
      %2233 = vmatprep.subr.mxu0 0.0
      %2234 = vmatpush1.msra.mxu0 0.0
      %2235 = vmatprep.subr.mxu0 0.0
      %2236 = vmatpush1.msra.mxu0 0.0
      %2237 = vmatprep.subr.mxu0 0.0
      %2238 = vmatpush1.msra.mxu0 0.0
      %2239 = vmatprep.subr.mxu0 0.0
      %2240 = vmatpush1.msra.mxu0 0.0
      %2241 = vmatprep.subr.mxu0 0.0
      %2242 = vmatpush1.msra.mxu0 0.0
      %2243 = vmatprep.subr.mxu0 0.0
      %2244 = vmatpush1.msra.mxu0 0.0
      %2245 = vmatprep.subr.mxu0 0.0
      %2246 = vmatpush1.msra.mxu0 0.0
      %2247 = vmatprep.subr.mxu0 0.0
      %2248 = vmatpush1.msra.mxu0 0.0
      %2249 = vmatprep.mubr.f32.mxu0 0.0
      %2250 = vmatmul.mubr.f32.gmra.mrb[0].mxu0 %v2031
      %v2251 = vpop.f32.mrb[0].mxu0
      %v2252 = vadd.f32 0.0, %v2251
      %v2253 = vpop.f32.mrb[0].mxu0
      %2254 = vdwg.mxu0
      %v2255 = vadd.f32 %v2000, %v2110
      %v2256 = vadd.f32 %v2001, %v2112
      %v2257 = vadd.f32 %v2002, %v2181
      %v2258 = vadd.f32 %v2003, %v2183
      %v2259 = vadd.f32 %v2004, %v2252
      %v2260 = vld [vmem:[%s246] sm:$0xff]
      %v2261 = vld [vmem:[%s246 + $0x8] sm:$0xff]
      %v2262 = vld [vmem:[%s246 + $0x10] sm:$0xf]
      %s2263 = scalar_lea.vmem %s2, 64
      %v2264 = vld [vmem:[%s2263] sm:$0xff]
      %v2268 = vcombine.high %v2260, %v2260
      %v2269 = vcombine.high %v2261, %v2261
      %2270 = vrot.lane.b32.xlu0 %v2260, 78
      %v2271 = vpop.permute.xlu0 %2270
      %2272 = vrot.lane.b32.xlu0 %v2268, 78
      %v2273 = vpop.permute.xlu0 %2272
      %2274 = vrot.lane.b32.xlu0 %v2261, 78
      %v2275 = vpop.permute.xlu0 %2274
      %2276 = vrot.lane.b32.xlu0 %v2269, 78
      %v2277 = vpop.permute.xlu0 %2276
      %2278 = vrot.lane.b32.xlu0 %v2262, 78
      %v2279 = vpop.permute.xlu0 %2278
      %vm2280 = vcmask 637952
      %v2281 = vsel %vm2280, %v2271, %v2273
      %v2282 = vsel %vm2280, %v2273, %v2275
      %v2283 = vsel %vm2280, %v2275, %v2277
      %v2284 = vsel %vm2280, %v2277, %v2279
      %v2286 = vsel %vm278, %v2264, 0
      %v2288 = vsel %vm282, %v2281, 0
      %v2290 = vsel %vm282, %v2282, 0
      %v2292 = vsel %vm282, %v2283, 0
      %v2294 = vsel %vm282, %v2284, 0
      %v2296 = vsel %vm282, %v2279, 0
      %2298 = vmatprep.subr.mxu0 %v2290
      %2299 = vmatpush1.msra.mxu0 %v2288
      %2300 = vmatprep.subr.mxu0 0.0
      %2301 = vmatpush1.msra.mxu0 0.0
      %2302 = vmatprep.subr.mxu0 0.0
      %2303 = vmatpush1.msra.mxu0 0.0
      %2304 = vmatprep.subr.mxu0 0.0
      %2305 = vmatpush1.msra.mxu0 0.0
      %2306 = vmatprep.subr.mxu0 0.0
      %2307 = vmatpush1.msra.mxu0 0.0
      %2308 = vmatprep.subr.mxu0 0.0
      %2309 = vmatpush1.msra.mxu0 0.0
      %2310 = vmatprep.subr.mxu0 0.0
      %2311 = vmatpush1.msra.mxu0 0.0
      %2312 = vmatprep.subr.mxu0 0.0
      %2313 = vmatpush1.msra.mxu0 0.0
      %2314 = vmatprep.subr.mxu0 0.0
      %2315 = vmatpush1.msra.mxu0 0.0
      %2316 = vmatprep.subr.mxu0 0.0
      %2317 = vmatpush1.msra.mxu0 0.0
      %2318 = vmatprep.subr.mxu0 0.0
      %2319 = vmatpush1.msra.mxu0 0.0
      %2320 = vmatprep.subr.mxu0 0.0
      %2321 = vmatpush1.msra.mxu0 0.0
      %2322 = vmatprep.subr.mxu0 0.0
      %2323 = vmatpush1.msra.mxu0 0.0
      %2324 = vmatprep.subr.mxu0 0.0
      %2325 = vmatpush1.msra.mxu0 0.0
      %2326 = vmatprep.subr.mxu0 0.0
      %2327 = vmatpush1.msra.mxu0 0.0
      %2328 = vmatprep.subr.mxu0 0.0
      %2329 = vmatpush1.msra.mxu0 0.0
      %2330 = vmatprep.subr.mxu0 0.0
      %2331 = vmatpush1.msra.mxu0 0.0
      %2332 = vmatprep.subr.mxu0 0.0
      %2333 = vmatpush1.msra.mxu0 0.0
      %2334 = vmatprep.subr.mxu0 0.0
      %2335 = vmatpush1.msra.mxu0 0.0
      %2336 = vmatprep.subr.mxu0 0.0
      %2337 = vmatpush1.msra.mxu0 0.0
      %2338 = vmatprep.subr.mxu0 0.0
      %2339 = vmatpush1.msra.mxu0 0.0
      %2340 = vmatprep.subr.mxu0 0.0
      %2341 = vmatpush1.msra.mxu0 0.0
      %2342 = vmatprep.subr.mxu0 0.0
      %2343 = vmatpush1.msra.mxu0 0.0
      %2344 = vmatprep.subr.mxu0 0.0
      %2345 = vmatpush1.msra.mxu0 0.0
      %2346 = vmatprep.subr.mxu0 0.0
      %2347 = vmatpush1.msra.mxu0 0.0
      %2348 = vmatprep.subr.mxu0 0.0
      %2349 = vmatpush1.msra.mxu0 0.0
      %2350 = vmatprep.subr.mxu0 0.0
      %2351 = vmatpush1.msra.mxu0 0.0
      %2352 = vmatprep.subr.mxu0 0.0
      %2353 = vmatpush1.msra.mxu0 0.0
      %2354 = vmatprep.subr.mxu0 0.0
      %2355 = vmatpush1.msra.mxu0 0.0
      %2356 = vmatprep.subr.mxu0 0.0
      %2357 = vmatpush1.msra.mxu0 0.0
      %2358 = vmatprep.subr.mxu0 0.0
      %2359 = vmatpush1.msra.mxu0 0.0
      %2360 = vmatprep.subr.mxu0 0.0
      %2361 = vmatpush1.msra.mxu0 0.0
      %2362 = vmatprep.mubr.f32.mxu0 0.0
      %2363 = vmatmul.mubr.f32.gmra.mrb[0].mxu0 %v2286
      %v2364 = vpop.f32.mrb[0].mxu0
      %v2365 = vadd.f32 0.0, %v2364
      %v2366 = vpop.f32.mrb[0].mxu0
      %v2367 = vadd.f32 0.0, %v2366
      %2368 = vdwg.mxu0
      %2369 = vmatprep.subr.mxu0 %v2294
      %2370 = vmatpush1.msra.mxu0 %v2292
      %2371 = vmatprep.subr.mxu0 0.0
      %2372 = vmatpush1.msra.mxu0 0.0
      %2373 = vmatprep.subr.mxu0 0.0
      %2374 = vmatpush1.msra.mxu0 0.0
      %2375 = vmatprep.subr.mxu0 0.0
      %2376 = vmatpush1.msra.mxu0 0.0
      %2377 = vmatprep.subr.mxu0 0.0
      %2378 = vmatpush1.msra.mxu0 0.0
      %2379 = vmatprep.subr.mxu0 0.0
      %2380 = vmatpush1.msra.mxu0 0.0
      %2381 = vmatprep.subr.mxu0 0.0
      %2382 = vmatpush1.msra.mxu0 0.0
      %2383 = vmatprep.subr.mxu0 0.0
      %2384 = vmatpush1.msra.mxu0 0.0
      %2385 = vmatprep.subr.mxu0 0.0
      %2386 = vmatpush1.msra.mxu0 0.0
      %2387 = vmatprep.subr.mxu0 0.0
      %2388 = vmatpush1.msra.mxu0 0.0
      %2389 = vmatprep.subr.mxu0 0.0
      %2390 = vmatpush1.msra.mxu0 0.0
      %2391 = vmatprep.subr.mxu0 0.0
      %2392 = vmatpush1.msra.mxu0 0.0
      %2393 = vmatprep.subr.mxu0 0.0
      %2394 = vmatpush1.msra.mxu0 0.0
      %2395 = vmatprep.subr.mxu0 0.0
      %2396 = vmatpush1.msra.mxu0 0.0
      %2397 = vmatprep.subr.mxu0 0.0
      %2398 = vmatpush1.msra.mxu0 0.0
      %2399 = vmatprep.subr.mxu0 0.0
      %2400 = vmatpush1.msra.mxu0 0.0
      %2401 = vmatprep.subr.mxu0 0.0
      %2402 = vmatpush1.msra.mxu0 0.0
      %2403 = vmatprep.subr.mxu0 0.0
      %2404 = vmatpush1.msra.mxu0 0.0
      %2405 = vmatprep.subr.mxu0 0.0
      %2406 = vmatpush1.msra.mxu0 0.0
      %2407 = vmatprep.subr.mxu0 0.0
      %2408 = vmatpush1.msra.mxu0 0.0
      %2409 = vmatprep.subr.mxu0 0.0
      %2410 = vmatpush1.msra.mxu0 0.0
      %2411 = vmatprep.subr.mxu0 0.0
      %2412 = vmatpush1.msra.mxu0 0.0
      %2413 = vmatprep.subr.mxu0 0.0
      %2414 = vmatpush1.msra.mxu0 0.0
      %2415 = vmatprep.subr.mxu0 0.0
      %2416 = vmatpush1.msra.mxu0 0.0
      %2417 = vmatprep.subr.mxu0 0.0
      %2418 = vmatpush1.msra.mxu0 0.0
      %2419 = vmatprep.subr.mxu0 0.0
      %2420 = vmatpush1.msra.mxu0 0.0
      %2421 = vmatprep.subr.mxu0 0.0
      %2422 = vmatpush1.msra.mxu0 0.0
      %2423 = vmatprep.subr.mxu0 0.0
      %2424 = vmatpush1.msra.mxu0 0.0
      %2425 = vmatprep.subr.mxu0 0.0
      %2426 = vmatpush1.msra.mxu0 0.0
      %2427 = vmatprep.subr.mxu0 0.0
      %2428 = vmatpush1.msra.mxu0 0.0
      %2429 = vmatprep.subr.mxu0 0.0
      %2430 = vmatpush1.msra.mxu0 0.0
      %2431 = vmatprep.subr.mxu0 0.0
      %2432 = vmatpush1.msra.mxu0 0.0
      %2433 = vmatprep.mubr.f32.mxu0 0.0
      %2434 = vmatmul.mubr.f32.gmra.mrb[0].mxu0 %v2286
      %v2435 = vpop.f32.mrb[0].mxu0
      %v2436 = vadd.f32 0.0, %v2435
      %v2437 = vpop.f32.mrb[0].mxu0
      %v2438 = vadd.f32 0.0, %v2437
      %2439 = vdwg.mxu0
      %2440 = vmatprep.subr.mxu0 0.0
      %2441 = vmatpush1.msra.mxu0 %v2296
      %2442 = vmatprep.subr.mxu0 0.0
      %2443 = vmatpush1.msra.mxu0 0.0
      %2444 = vmatprep.subr.mxu0 0.0
      %2445 = vmatpush1.msra.mxu0 0.0
      %2446 = vmatprep.subr.mxu0 0.0
      %2447 = vmatpush1.msra.mxu0 0.0
      %2448 = vmatprep.subr.mxu0 0.0
      %2449 = vmatpush1.msra.mxu0 0.0
      %2450 = vmatprep.subr.mxu0 0.0
      %2451 = vmatpush1.msra.mxu0 0.0
      %2452 = vmatprep.subr.mxu0 0.0
      %2453 = vmatpush1.msra.mxu0 0.0
      %2454 = vmatprep.subr.mxu0 0.0
      %2455 = vmatpush1.msra.mxu0 0.0
      %2456 = vmatprep.subr.mxu0 0.0
      %2457 = vmatpush1.msra.mxu0 0.0
      %2458 = vmatprep.subr.mxu0 0.0
      %2459 = vmatpush1.msra.mxu0 0.0
      %2460 = vmatprep.subr.mxu0 0.0
      %2461 = vmatpush1.msra.mxu0 0.0
      %2462 = vmatprep.subr.mxu0 0.0
      %2463 = vmatpush1.msra.mxu0 0.0
      %2464 = vmatprep.subr.mxu0 0.0
      %2465 = vmatpush1.msra.mxu0 0.0
      %2466 = vmatprep.subr.mxu0 0.0
      %2467 = vmatpush1.msra.mxu0 0.0
      %2468 = vmatprep.subr.mxu0 0.0
      %2469 = vmatpush1.msra.mxu0 0.0
      %2470 = vmatprep.subr.mxu0 0.0
      %2471 = vmatpush1.msra.mxu0 0.0
      %2472 = vmatprep.subr.mxu0 0.0
      %2473 = vmatpush1.msra.mxu0 0.0
      %2474 = vmatprep.subr.mxu0 0.0
      %2475 = vmatpush1.msra.mxu0 0.0
      %2476 = vmatprep.subr.mxu0 0.0
      %2477 = vmatpush1.msra.mxu0 0.0
      %2478 = vmatprep.subr.mxu0 0.0
      %2479 = vmatpush1.msra.mxu0 0.0
      %2480 = vmatprep.subr.mxu0 0.0
      %2481 = vmatpush1.msra.mxu0 0.0
      %2482 = vmatprep.subr.mxu0 0.0
      %2483 = vmatpush1.msra.mxu0 0.0
      %2484 = vmatprep.subr.mxu0 0.0
      %2485 = vmatpush1.msra.mxu0 0.0
      %2486 = vmatprep.subr.mxu0 0.0
      %2487 = vmatpush1.msra.mxu0 0.0
      %2488 = vmatprep.subr.mxu0 0.0
      %2489 = vmatpush1.msra.mxu0 0.0
      %2490 = vmatprep.subr.mxu0 0.0
      %2491 = vmatpush1.msra.mxu0 0.0
      %2492 = vmatprep.subr.mxu0 0.0
      %2493 = vmatpush1.msra.mxu0 0.0
      %2494 = vmatprep.subr.mxu0 0.0
      %2495 = vmatpush1.msra.mxu0 0.0
      %2496 = vmatprep.subr.mxu0 0.0
      %2497 = vmatpush1.msra.mxu0 0.0
      %2498 = vmatprep.subr.mxu0 0.0
      %2499 = vmatpush1.msra.mxu0 0.0
      %2500 = vmatprep.subr.mxu0 0.0
      %2501 = vmatpush1.msra.mxu0 0.0
      %2502 = vmatprep.subr.mxu0 0.0
      %2503 = vmatpush1.msra.mxu0 0.0
      %2504 = vmatprep.mubr.f32.mxu0 0.0
      %2505 = vmatmul.mubr.f32.gmra.mrb[0].mxu0 %v2286
      %v2506 = vpop.f32.mrb[0].mxu0
      %v2507 = vadd.f32 0.0, %v2506
      %v2508 = vpop.f32.mrb[0].mxu0
      %2509 = vdwg.mxu0
      %v2510 = vadd.f32 %v2255, %v2365
      %v2511 = vadd.f32 %v2256, %v2367
      %v2512 = vadd.f32 %v2257, %v2436
      %v2513 = vadd.f32 %v2258, %v2438
      %v2514 = vadd.f32 %v2259, %v2507
      %v2515 = vld [vmem:[%s3] sm:$0xff]
      %v2516 = vld [vmem:[%s1] sm:$0x1f]
      %2518 = vset.pattern.permute.xlu0 0
      %2519 = vperm.xlu0 %2518, %v2515
      %v2520 = vpop.permute.xlu0 %2519
      %v2522 = vadd.f32 %v2510, %v2520
      %v2523 = vadd.f32 %v2511, %v2520
      %v2524 = vadd.f32 %v2512, %v2520
      %v2525 = vadd.f32 %v2513, %v2520
      %v2526 = vadd.f32 %v2514, %v2520
      %v2527 = vmax.f32 %v2522, 0.0
      %v2528 = vmax.f32 %v2523, 0.0
      %v2529 = vmax.f32 %v2524, 0.0
      %v2530 = vmax.f32 %v2525, 0.0
      %v2531 = vmax.f32 %v2526, 0.0
      %v2533 = vlaneseq
      %v2534 = vshrl.u32 %v2533, 7
      %v2535 = vsub.s32 0, %v2534
      %v2536 = vrot.slane %v2516, %v2535
      %v2537 = vlaneseq
      %v2538 = vshrl.u32 %v2537, 7
      %v2539 = vsub.s32 1, %v2538
      %v2540 = vrot.slane %v2516, %v2539
      %v2541 = vlaneseq
      %v2542 = vshrl.u32 %v2541, 7
      %v2543 = vsub.s32 2, %v2542
      %v2544 = vrot.slane %v2516, %v2543
      %v2545 = vlaneseq
      %v2546 = vshrl.u32 %v2545, 7
      %v2547 = vsub.s32 3, %v2546
      %v2548 = vrot.slane %v2516, %v2547
      %v2549 = vlaneseq
      %v2550 = vshrl.u32 %v2549, 7
      %v2551 = vsub.s32 4, %v2550
      %v2552 = vrot.slane %v2516, %v2551
      %v2558 = vmul.f32 %v2536, %v2527
      %v2559 = vmul.f32 %v2540, %v2528
      %v2560 = vmul.f32 %v2544, %v2529
      %v2561 = vmul.f32 %v2548, %v2530
      %v2562 = vmul.f32 %v2552, %v2531
      %2563 = vst [vmem:[#allocation2] sm:$0xff] %v2558
      %2564 = vst [vmem:[#allocation2 + $0x8] sm:$0xff] %v2559
      %2565 = vst [vmem:[#allocation2 + $0x10] sm:$0xff] %v2560
      %2566 = vst [vmem:[#allocation2 + $0x18] sm:$0xff] %v2561
      %vm2567 = vcmask 326656
      %2568 = vst.msk [vmem:[#allocation2 + $0x20] sm:$0xff] %vm2567, %v2562
      %v2569 = vld [vmem:[#allocation2] sm:$0xff]
      %v2570 = vld [vmem:[#allocation2 + $0x8] sm:$0xff]
      %v2571 = vld [vmem:[#allocation2 + $0x10] sm:$0xff]
      %v2572 = vld [vmem:[#allocation2 + $0x18] sm:$0xff]
      %v2573 = vld [vmem:[%s4] sm:$0x7]
      %s2574 = scalar_lea.vmem %s4, 4
      %v2575 = vld [vmem:[%s2574] sm:$0x7]
      %2580 = vrot.lane.b32.xlu0 %v2569, 127
      %v2581 = vpop.permute.xlu0 %2580
      %2582 = vrot.lane.b32.xlu0 %v2570, 127
      %v2583 = vpop.permute.xlu0 %2582
      %2584 = vrot.lane.b32.xlu0 %v2571, 127
      %v2585 = vpop.permute.xlu0 %2584
      %2586 = vrot.lane.b32.xlu0 %v2572, 127
      %v2587 = vpop.permute.xlu0 %2586
      %v2588 = vsel %vm273, %v2581, %v2583
      %v2589 = vsel %vm273, %v2583, %v2585
      %v2590 = vsel %vm273, %v2585, %v2587
      %vm2595 = vcmask 64512
      %v2597 = vsel %vm2595, %v2575, 0
      %2599 = vmatprep.subr.mxu0 %v2589
      %2600 = vmatpush1.msra.mxu0 %v2588
      %2601 = vmatprep.subr.mxu0 0.0
      %2602 = vmatpush1.msra.mxu0 0.0
      %2603 = vmatprep.subr.mxu0 0.0
      %2604 = vmatpush1.msra.mxu0 0.0
      %2605 = vmatprep.subr.mxu0 0.0
      %2606 = vmatpush1.msra.mxu0 0.0
      %2607 = vmatprep.subr.mxu0 0.0
      %2608 = vmatpush1.msra.mxu0 0.0
      %2609 = vmatprep.subr.mxu0 0.0
      %2610 = vmatpush1.msra.mxu0 0.0
      %2611 = vmatprep.subr.mxu0 0.0
      %2612 = vmatpush1.msra.mxu0 0.0
      %2613 = vmatprep.subr.mxu0 0.0
      %2614 = vmatpush1.msra.mxu0 0.0
      %2615 = vmatprep.subr.mxu0 0.0
      %2616 = vmatpush1.msra.mxu0 0.0
      %2617 = vmatprep.subr.mxu0 0.0
      %2618 = vmatpush1.msra.mxu0 0.0
      %2619 = vmatprep.subr.mxu0 0.0
      %2620 = vmatpush1.msra.mxu0 0.0
      %2621 = vmatprep.subr.mxu0 0.0
      %2622 = vmatpush1.msra.mxu0 0.0
      %2623 = vmatprep.subr.mxu0 0.0
      %2624 = vmatpush1.msra.mxu0 0.0
      %2625 = vmatprep.subr.mxu0 0.0
      %2626 = vmatpush1.msra.mxu0 0.0
      %2627 = vmatprep.subr.mxu0 0.0
      %2628 = vmatpush1.msra.mxu0 0.0
      %2629 = vmatprep.subr.mxu0 0.0
      %2630 = vmatpush1.msra.mxu0 0.0
      %2631 = vmatprep.subr.mxu0 0.0
      %2632 = vmatpush1.msra.mxu0 0.0
      %2633 = vmatprep.subr.mxu0 0.0
      %2634 = vmatpush1.msra.mxu0 0.0
      %2635 = vmatprep.subr.mxu0 0.0
      %2636 = vmatpush1.msra.mxu0 0.0
      %2637 = vmatprep.subr.mxu0 0.0
      %2638 = vmatpush1.msra.mxu0 0.0
      %2639 = vmatprep.subr.mxu0 0.0
      %2640 = vmatpush1.msra.mxu0 0.0
      %2641 = vmatprep.subr.mxu0 0.0
      %2642 = vmatpush1.msra.mxu0 0.0
      %2643 = vmatprep.subr.mxu0 0.0
      %2644 = vmatpush1.msra.mxu0 0.0
      %2645 = vmatprep.subr.mxu0 0.0
      %2646 = vmatpush1.msra.mxu0 0.0
      %2647 = vmatprep.subr.mxu0 0.0
      %2648 = vmatpush1.msra.mxu0 0.0
      %2649 = vmatprep.subr.mxu0 0.0
      %2650 = vmatpush1.msra.mxu0 0.0
      %2651 = vmatprep.subr.mxu0 0.0
      %2652 = vmatpush1.msra.mxu0 0.0
      %2653 = vmatprep.subr.mxu0 0.0
      %2654 = vmatpush1.msra.mxu0 0.0
      %2655 = vmatprep.subr.mxu0 0.0
      %2656 = vmatpush1.msra.mxu0 0.0
      %2657 = vmatprep.subr.mxu0 0.0
      %2658 = vmatpush1.msra.mxu0 0.0
      %2659 = vmatprep.subr.mxu0 0.0
      %2660 = vmatpush1.msra.mxu0 0.0
      %2661 = vmatprep.subr.mxu0 0.0
      %2662 = vmatpush1.msra.mxu0 0.0
      %2663 = vmatprep.mubr.f32.mxu0 0.0
      %2664 = vmatmul.mubr.f32.gmra.mrb[0].mxu0 %v2597
      %v2665 = vpop.f32.mrb[0].mxu0
      %v2666 = vadd.f32 0.0, %v2665
      %v2667 = vpop.f32.mrb[0].mxu0
      %v2668 = vadd.f32 0.0, %v2667
      %2669 = vdwg.mxu0
      %2670 = vmatprep.subr.mxu0 %v2587
      %2671 = vmatpush1.msra.mxu0 %v2590
      %2672 = vmatprep.subr.mxu0 0.0
      %2673 = vmatpush1.msra.mxu0 0.0
      %2674 = vmatprep.subr.mxu0 0.0
      %2675 = vmatpush1.msra.mxu0 0.0
      %2676 = vmatprep.subr.mxu0 0.0
      %2677 = vmatpush1.msra.mxu0 0.0
      %2678 = vmatprep.subr.mxu0 0.0
      %2679 = vmatpush1.msra.mxu0 0.0
      %2680 = vmatprep.subr.mxu0 0.0
      %2681 = vmatpush1.msra.mxu0 0.0
      %2682 = vmatprep.subr.mxu0 0.0
      %2683 = vmatpush1.msra.mxu0 0.0
      %2684 = vmatprep.subr.mxu0 0.0
      %2685 = vmatpush1.msra.mxu0 0.0
      %2686 = vmatprep.subr.mxu0 0.0
      %2687 = vmatpush1.msra.mxu0 0.0
      %2688 = vmatprep.subr.mxu0 0.0
      %2689 = vmatpush1.msra.mxu0 0.0
      %2690 = vmatprep.subr.mxu0 0.0
      %2691 = vmatpush1.msra.mxu0 0.0
      %2692 = vmatprep.subr.mxu0 0.0
      %2693 = vmatpush1.msra.mxu0 0.0
      %2694 = vmatprep.subr.mxu0 0.0
      %2695 = vmatpush1.msra.mxu0 0.0
      %2696 = vmatprep.subr.mxu0 0.0
      %2697 = vmatpush1.msra.mxu0 0.0
      %2698 = vmatprep.subr.mxu0 0.0
      %2699 = vmatpush1.msra.mxu0 0.0
      %2700 = vmatprep.subr.mxu0 0.0
      %2701 = vmatpush1.msra.mxu0 0.0
      %2702 = vmatprep.subr.mxu0 0.0
      %2703 = vmatpush1.msra.mxu0 0.0
      %2704 = vmatprep.subr.mxu0 0.0
      %2705 = vmatpush1.msra.mxu0 0.0
      %2706 = vmatprep.subr.mxu0 0.0
      %2707 = vmatpush1.msra.mxu0 0.0
      %2708 = vmatprep.subr.mxu0 0.0
      %2709 = vmatpush1.msra.mxu0 0.0
      %2710 = vmatprep.subr.mxu0 0.0
      %2711 = vmatpush1.msra.mxu0 0.0
      %2712 = vmatprep.subr.mxu0 0.0
      %2713 = vmatpush1.msra.mxu0 0.0
      %2714 = vmatprep.subr.mxu0 0.0
      %2715 = vmatpush1.msra.mxu0 0.0
      %2716 = vmatprep.subr.mxu0 0.0
      %2717 = vmatpush1.msra.mxu0 0.0
      %2718 = vmatprep.subr.mxu0 0.0
      %2719 = vmatpush1.msra.mxu0 0.0
      %2720 = vmatprep.subr.mxu0 0.0
      %2721 = vmatpush1.msra.mxu0 0.0
      %2722 = vmatprep.subr.mxu0 0.0
      %2723 = vmatpush1.msra.mxu0 0.0
      %2724 = vmatprep.subr.mxu0 0.0
      %2725 = vmatpush1.msra.mxu0 0.0
      %2726 = vmatprep.subr.mxu0 0.0
      %2727 = vmatpush1.msra.mxu0 0.0
      %2728 = vmatprep.subr.mxu0 0.0
      %2729 = vmatpush1.msra.mxu0 0.0
      %2730 = vmatprep.subr.mxu0 0.0
      %2731 = vmatpush1.msra.mxu0 0.0
      %2732 = vmatprep.subr.mxu0 0.0
      %2733 = vmatpush1.msra.mxu0 0.0
      %2734 = vmatprep.mubr.f32.mxu0 0.0
      %2735 = vmatmul.mubr.f32.gmra.mrb[0].mxu0 %v2597
      %v2736 = vpop.f32.mrb[0].mxu0
      %v2737 = vadd.f32 0.0, %v2736
      %v2738 = vpop.f32.mrb[0].mxu0
      %v2739 = vadd.f32 0.0, %v2738
      %2740 = vdwg.mxu0
      %v2742 = vsel %vm2595, %v2573, 0
      %2744 = vmatprep.subr.mxu0 %v2570
      %2745 = vmatpush1.msra.mxu0 %v2569
      %2746 = vmatprep.subr.mxu0 0.0
      %2747 = vmatpush1.msra.mxu0 0.0
      %2748 = vmatprep.subr.mxu0 0.0
      %2749 = vmatpush1.msra.mxu0 0.0
      %2750 = vmatprep.subr.mxu0 0.0
      %2751 = vmatpush1.msra.mxu0 0.0
      %2752 = vmatprep.subr.mxu0 0.0
      %2753 = vmatpush1.msra.mxu0 0.0
      %2754 = vmatprep.subr.mxu0 0.0
      %2755 = vmatpush1.msra.mxu0 0.0
      %2756 = vmatprep.subr.mxu0 0.0
      %2757 = vmatpush1.msra.mxu0 0.0
      %2758 = vmatprep.subr.mxu0 0.0
      %2759 = vmatpush1.msra.mxu0 0.0
      %2760 = vmatprep.subr.mxu0 0.0
      %2761 = vmatpush1.msra.mxu0 0.0
      %2762 = vmatprep.subr.mxu0 0.0
      %2763 = vmatpush1.msra.mxu0 0.0
      %2764 = vmatprep.subr.mxu0 0.0
      %2765 = vmatpush1.msra.mxu0 0.0
      %2766 = vmatprep.subr.mxu0 0.0
      %2767 = vmatpush1.msra.mxu0 0.0
      %2768 = vmatprep.subr.mxu0 0.0
      %2769 = vmatpush1.msra.mxu0 0.0
      %2770 = vmatprep.subr.mxu0 0.0
      %2771 = vmatpush1.msra.mxu0 0.0
      %2772 = vmatprep.subr.mxu0 0.0
      %2773 = vmatpush1.msra.mxu0 0.0
      %2774 = vmatprep.subr.mxu0 0.0
      %2775 = vmatpush1.msra.mxu0 0.0
      %2776 = vmatprep.subr.mxu0 0.0
      %2777 = vmatpush1.msra.mxu0 0.0
      %2778 = vmatprep.subr.mxu0 0.0
      %2779 = vmatpush1.msra.mxu0 0.0
      %2780 = vmatprep.subr.mxu0 0.0
      %2781 = vmatpush1.msra.mxu0 0.0
      %2782 = vmatprep.subr.mxu0 0.0
      %2783 = vmatpush1.msra.mxu0 0.0
      %2784 = vmatprep.subr.mxu0 0.0
      %2785 = vmatpush1.msra.mxu0 0.0
      %2786 = vmatprep.subr.mxu0 0.0
      %2787 = vmatpush1.msra.mxu0 0.0
      %2788 = vmatprep.subr.mxu0 0.0
      %2789 = vmatpush1.msra.mxu0 0.0
      %2790 = vmatprep.subr.mxu0 0.0
      %2791 = vmatpush1.msra.mxu0 0.0
      %2792 = vmatprep.subr.mxu0 0.0
      %2793 = vmatpush1.msra.mxu0 0.0
      %2794 = vmatprep.subr.mxu0 0.0
      %2795 = vmatpush1.msra.mxu0 0.0
      %2796 = vmatprep.subr.mxu0 0.0
      %2797 = vmatpush1.msra.mxu0 0.0
      %2798 = vmatprep.subr.mxu0 0.0
      %2799 = vmatpush1.msra.mxu0 0.0
      %2800 = vmatprep.subr.mxu0 0.0
      %2801 = vmatpush1.msra.mxu0 0.0
      %2802 = vmatprep.subr.mxu0 0.0
      %2803 = vmatpush1.msra.mxu0 0.0
      %2804 = vmatprep.subr.mxu0 0.0
      %2805 = vmatpush1.msra.mxu0 0.0
      %2806 = vmatprep.subr.mxu0 0.0
      %2807 = vmatpush1.msra.mxu0 0.0
      %2808 = vmatprep.mubr.f32.mxu0 0.0
      %2809 = vmatmul.mubr.f32.gmra.mrb[0].mxu0 %v2742
      %v2810 = vpop.f32.mrb[0].mxu0
      %v2811 = vadd.f32 %v2666, %v2810
      %v2812 = vpop.f32.mrb[0].mxu0
      %v2813 = vadd.f32 %v2668, %v2812
      %2814 = vdwg.mxu0
      %2815 = vmatprep.subr.mxu0 %v2572
      %2816 = vmatpush1.msra.mxu0 %v2571
      %2817 = vmatprep.subr.mxu0 0.0
      %2818 = vmatpush1.msra.mxu0 0.0
      %2819 = vmatprep.subr.mxu0 0.0
      %2820 = vmatpush1.msra.mxu0 0.0
      %2821 = vmatprep.subr.mxu0 0.0
      %2822 = vmatpush1.msra.mxu0 0.0
      %2823 = vmatprep.subr.mxu0 0.0
      %2824 = vmatpush1.msra.mxu0 0.0
      %2825 = vmatprep.subr.mxu0 0.0
      %2826 = vmatpush1.msra.mxu0 0.0
      %2827 = vmatprep.subr.mxu0 0.0
      %2828 = vmatpush1.msra.mxu0 0.0
      %2829 = vmatprep.subr.mxu0 0.0
      %2830 = vmatpush1.msra.mxu0 0.0
      %2831 = vmatprep.subr.mxu0 0.0
      %2832 = vmatpush1.msra.mxu0 0.0
      %2833 = vmatprep.subr.mxu0 0.0
      %2834 = vmatpush1.msra.mxu0 0.0
      %2835 = vmatprep.subr.mxu0 0.0
      %2836 = vmatpush1.msra.mxu0 0.0
      %2837 = vmatprep.subr.mxu0 0.0
      %2838 = vmatpush1.msra.mxu0 0.0
      %2839 = vmatprep.subr.mxu0 0.0
      %2840 = vmatpush1.msra.mxu0 0.0
      %2841 = vmatprep.subr.mxu0 0.0
      %2842 = vmatpush1.msra.mxu0 0.0
      %2843 = vmatprep.subr.mxu0 0.0
      %2844 = vmatpush1.msra.mxu0 0.0
      %2845 = vmatprep.subr.mxu0 0.0
      %2846 = vmatpush1.msra.mxu0 0.0
      %2847 = vmatprep.subr.mxu0 0.0
      %2848 = vmatpush1.msra.mxu0 0.0
      %2849 = vmatprep.subr.mxu0 0.0
      %2850 = vmatpush1.msra.mxu0 0.0
      %2851 = vmatprep.subr.mxu0 0.0
      %2852 = vmatpush1.msra.mxu0 0.0
      %2853 = vmatprep.subr.mxu0 0.0
      %2854 = vmatpush1.msra.mxu0 0.0
      %2855 = vmatprep.subr.mxu0 0.0
      %2856 = vmatpush1.msra.mxu0 0.0
      %2857 = vmatprep.subr.mxu0 0.0
      %2858 = vmatpush1.msra.mxu0 0.0
      %2859 = vmatprep.subr.mxu0 0.0
      %2860 = vmatpush1.msra.mxu0 0.0
      %2861 = vmatprep.subr.mxu0 0.0
      %2862 = vmatpush1.msra.mxu0 0.0
      %2863 = vmatprep.subr.mxu0 0.0
      %2864 = vmatpush1.msra.mxu0 0.0
      %2865 = vmatprep.subr.mxu0 0.0
      %2866 = vmatpush1.msra.mxu0 0.0
      %2867 = vmatprep.subr.mxu0 0.0
      %2868 = vmatpush1.msra.mxu0 0.0
      %2869 = vmatprep.subr.mxu0 0.0
      %2870 = vmatpush1.msra.mxu0 0.0
      %2871 = vmatprep.subr.mxu0 0.0
      %2872 = vmatpush1.msra.mxu0 0.0
      %2873 = vmatprep.subr.mxu0 0.0
      %2874 = vmatpush1.msra.mxu0 0.0
      %2875 = vmatprep.subr.mxu0 0.0
      %2876 = vmatpush1.msra.mxu0 0.0
      %2877 = vmatprep.subr.mxu0 0.0
      %2878 = vmatpush1.msra.mxu0 0.0
      %2879 = vmatprep.mubr.f32.mxu0 0.0
      %2880 = vmatmul.mubr.f32.gmra.mrb[0].mxu0 %v2742
      %v2881 = vpop.f32.mrb[0].mxu0
      %v2882 = vadd.f32 %v2737, %v2881
      %v2883 = vpop.f32.mrb[0].mxu0
      %v2884 = vadd.f32 %v2739, %v2883
      %2885 = vdwg.mxu0
      %s2886 = scalar_lea.vmem %s4, 8
      %v2887 = vld [vmem:[%s2886] sm:$0x7]
      %2888 = vrot.lane.b32.xlu0 %v2569, 126
      %v2889 = vpop.permute.xlu0 %2888
      %2890 = vrot.lane.b32.xlu0 %v2570, 126
      %v2891 = vpop.permute.xlu0 %2890
      %2892 = vrot.lane.b32.xlu0 %v2571, 126
      %v2893 = vpop.permute.xlu0 %2892
      %2894 = vrot.lane.b32.xlu0 %v2572, 126
      %v2895 = vpop.permute.xlu0 %2894
      %v2896 = vsel %vm750, %v2889, %v2891
      %v2897 = vsel %vm750, %v2891, %v2893
      %v2898 = vsel %vm750, %v2893, %v2895
      %v2904 = vsel %vm2595, %v2887, 0
      %2906 = vmatprep.subr.mxu0 %v2897
      %2907 = vmatpush1.msra.mxu0 %v2896
      %2908 = vmatprep.subr.mxu0 0.0
      %2909 = vmatpush1.msra.mxu0 0.0
      %2910 = vmatprep.subr.mxu0 0.0
      %2911 = vmatpush1.msra.mxu0 0.0
      %2912 = vmatprep.subr.mxu0 0.0
      %2913 = vmatpush1.msra.mxu0 0.0
      %2914 = vmatprep.subr.mxu0 0.0
      %2915 = vmatpush1.msra.mxu0 0.0
      %2916 = vmatprep.subr.mxu0 0.0
      %2917 = vmatpush1.msra.mxu0 0.0
      %2918 = vmatprep.subr.mxu0 0.0
      %2919 = vmatpush1.msra.mxu0 0.0
      %2920 = vmatprep.subr.mxu0 0.0
      %2921 = vmatpush1.msra.mxu0 0.0
      %2922 = vmatprep.subr.mxu0 0.0
      %2923 = vmatpush1.msra.mxu0 0.0
      %2924 = vmatprep.subr.mxu0 0.0
      %2925 = vmatpush1.msra.mxu0 0.0
      %2926 = vmatprep.subr.mxu0 0.0
      %2927 = vmatpush1.msra.mxu0 0.0
      %2928 = vmatprep.subr.mxu0 0.0
      %2929 = vmatpush1.msra.mxu0 0.0
      %2930 = vmatprep.subr.mxu0 0.0
      %2931 = vmatpush1.msra.mxu0 0.0
      %2932 = vmatprep.subr.mxu0 0.0
      %2933 = vmatpush1.msra.mxu0 0.0
      %2934 = vmatprep.subr.mxu0 0.0
      %2935 = vmatpush1.msra.mxu0 0.0
      %2936 = vmatprep.subr.mxu0 0.0
      %2937 = vmatpush1.msra.mxu0 0.0
      %2938 = vmatprep.subr.mxu0 0.0
      %2939 = vmatpush1.msra.mxu0 0.0
      %2940 = vmatprep.subr.mxu0 0.0
      %2941 = vmatpush1.msra.mxu0 0.0
      %2942 = vmatprep.subr.mxu0 0.0
      %2943 = vmatpush1.msra.mxu0 0.0
      %2944 = vmatprep.subr.mxu0 0.0
      %2945 = vmatpush1.msra.mxu0 0.0
      %2946 = vmatprep.subr.mxu0 0.0
      %2947 = vmatpush1.msra.mxu0 0.0
      %2948 = vmatprep.subr.mxu0 0.0
      %2949 = vmatpush1.msra.mxu0 0.0
      %2950 = vmatprep.subr.mxu0 0.0
      %2951 = vmatpush1.msra.mxu0 0.0
      %2952 = vmatprep.subr.mxu0 0.0
      %2953 = vmatpush1.msra.mxu0 0.0
      %2954 = vmatprep.subr.mxu0 0.0
      %2955 = vmatpush1.msra.mxu0 0.0
      %2956 = vmatprep.subr.mxu0 0.0
      %2957 = vmatpush1.msra.mxu0 0.0
      %2958 = vmatprep.subr.mxu0 0.0
      %2959 = vmatpush1.msra.mxu0 0.0
      %2960 = vmatprep.subr.mxu0 0.0
      %2961 = vmatpush1.msra.mxu0 0.0
      %2962 = vmatprep.subr.mxu0 0.0
      %2963 = vmatpush1.msra.mxu0 0.0
      %2964 = vmatprep.subr.mxu0 0.0
      %2965 = vmatpush1.msra.mxu0 0.0
      %2966 = vmatprep.subr.mxu0 0.0
      %2967 = vmatpush1.msra.mxu0 0.0
      %2968 = vmatprep.subr.mxu0 0.0
      %2969 = vmatpush1.msra.mxu0 0.0
      %2970 = vmatprep.mubr.f32.mxu0 0.0
      %2971 = vmatmul.mubr.f32.gmra.mrb[0].mxu0 %v2904
      %v2972 = vpop.f32.mrb[0].mxu0
      %v2973 = vadd.f32 0.0, %v2972
      %v2974 = vpop.f32.mrb[0].mxu0
      %v2975 = vadd.f32 0.0, %v2974
      %2976 = vdwg.mxu0
      %2977 = vmatprep.subr.mxu0 %v2895
      %2978 = vmatpush1.msra.mxu0 %v2898
      %2979 = vmatprep.subr.mxu0 0.0
      %2980 = vmatpush1.msra.mxu0 0.0
      %2981 = vmatprep.subr.mxu0 0.0
      %2982 = vmatpush1.msra.mxu0 0.0
      %2983 = vmatprep.subr.mxu0 0.0
      %2984 = vmatpush1.msra.mxu0 0.0
      %2985 = vmatprep.subr.mxu0 0.0
      %2986 = vmatpush1.msra.mxu0 0.0
      %2987 = vmatprep.subr.mxu0 0.0
      %2988 = vmatpush1.msra.mxu0 0.0
      %2989 = vmatprep.subr.mxu0 0.0
      %2990 = vmatpush1.msra.mxu0 0.0
      %2991 = vmatprep.subr.mxu0 0.0
      %2992 = vmatpush1.msra.mxu0 0.0
      %2993 = vmatprep.subr.mxu0 0.0
      %2994 = vmatpush1.msra.mxu0 0.0
      %2995 = vmatprep.subr.mxu0 0.0
      %2996 = vmatpush1.msra.mxu0 0.0
      %2997 = vmatprep.subr.mxu0 0.0
      %2998 = vmatpush1.msra.mxu0 0.0
      %2999 = vmatprep.subr.mxu0 0.0
      %3000 = vmatpush1.msra.mxu0 0.0
      %3001 = vmatprep.subr.mxu0 0.0
      %3002 = vmatpush1.msra.mxu0 0.0
      %3003 = vmatprep.subr.mxu0 0.0
      %3004 = vmatpush1.msra.mxu0 0.0
      %3005 = vmatprep.subr.mxu0 0.0
      %3006 = vmatpush1.msra.mxu0 0.0
      %3007 = vmatprep.subr.mxu0 0.0
      %3008 = vmatpush1.msra.mxu0 0.0
      %3009 = vmatprep.subr.mxu0 0.0
      %3010 = vmatpush1.msra.mxu0 0.0
      %3011 = vmatprep.subr.mxu0 0.0
      %3012 = vmatpush1.msra.mxu0 0.0
      %3013 = vmatprep.subr.mxu0 0.0
      %3014 = vmatpush1.msra.mxu0 0.0
      %3015 = vmatprep.subr.mxu0 0.0
      %3016 = vmatpush1.msra.mxu0 0.0
      %3017 = vmatprep.subr.mxu0 0.0
      %3018 = vmatpush1.msra.mxu0 0.0
      %3019 = vmatprep.subr.mxu0 0.0
      %3020 = vmatpush1.msra.mxu0 0.0
      %3021 = vmatprep.subr.mxu0 0.0
      %3022 = vmatpush1.msra.mxu0 0.0
      %3023 = vmatprep.subr.mxu0 0.0
      %3024 = vmatpush1.msra.mxu0 0.0
      %3025 = vmatprep.subr.mxu0 0.0
      %3026 = vmatpush1.msra.mxu0 0.0
      %3027 = vmatprep.subr.mxu0 0.0
      %3028 = vmatpush1.msra.mxu0 0.0
      %3029 = vmatprep.subr.mxu0 0.0
      %3030 = vmatpush1.msra.mxu0 0.0
      %3031 = vmatprep.subr.mxu0 0.0
      %3032 = vmatpush1.msra.mxu0 0.0
      %3033 = vmatprep.subr.mxu0 0.0
      %3034 = vmatpush1.msra.mxu0 0.0
      %3035 = vmatprep.subr.mxu0 0.0
      %3036 = vmatpush1.msra.mxu0 0.0
      %3037 = vmatprep.subr.mxu0 0.0
      %3038 = vmatpush1.msra.mxu0 0.0
      %3039 = vmatprep.subr.mxu0 0.0
      %3040 = vmatpush1.msra.mxu0 0.0
      %3041 = vmatprep.mubr.f32.mxu0 0.0
      %3042 = vmatmul.mubr.f32.gmra.mrb[0].mxu0 %v2904
      %v3043 = vpop.f32.mrb[0].mxu0
      %v3044 = vadd.f32 0.0, %v3043
      %v3045 = vpop.f32.mrb[0].mxu0
      %v3046 = vadd.f32 0.0, %v3045
      %3047 = vdwg.mxu0
      %v3048 = vadd.f32 %v2811, %v2973
      %v3049 = vadd.f32 %v2813, %v2975
      %v3050 = vadd.f32 %v2882, %v3044
      %v3051 = vadd.f32 %v2884, %v3046
      %s3052 = scalar_lea.vmem %s4, 12
      %v3053 = vld [vmem:[%s3052] sm:$0x7]
      %3054 = vrot.lane.b32.xlu0 %v2569, 104
      %v3055 = vpop.permute.xlu0 %3054
      %3056 = vrot.lane.b32.xlu0 %v2570, 104
      %v3057 = vpop.permute.xlu0 %3056
      %3058 = vrot.lane.b32.xlu0 %v2571, 104
      %v3059 = vpop.permute.xlu0 %3058
      %3060 = vrot.lane.b32.xlu0 %v2572, 104
      %v3061 = vpop.permute.xlu0 %3060
      %v3062 = vsel %vm1005, %v3055, %v3057
      %v3063 = vsel %vm1005, %v3057, %v3059
      %v3064 = vsel %vm1005, %v3059, %v3061
      %v3070 = vsel %vm2595, %v3053, 0
      %3072 = vmatprep.subr.mxu0 %v3063
      %3073 = vmatpush1.msra.mxu0 %v3062
      %3074 = vmatprep.subr.mxu0 0.0
      %3075 = vmatpush1.msra.mxu0 0.0
      %3076 = vmatprep.subr.mxu0 0.0
      %3077 = vmatpush1.msra.mxu0 0.0
      %3078 = vmatprep.subr.mxu0 0.0
      %3079 = vmatpush1.msra.mxu0 0.0
      %3080 = vmatprep.subr.mxu0 0.0
      %3081 = vmatpush1.msra.mxu0 0.0
      %3082 = vmatprep.subr.mxu0 0.0
      %3083 = vmatpush1.msra.mxu0 0.0
      %3084 = vmatprep.subr.mxu0 0.0
      %3085 = vmatpush1.msra.mxu0 0.0
      %3086 = vmatprep.subr.mxu0 0.0
      %3087 = vmatpush1.msra.mxu0 0.0
      %3088 = vmatprep.subr.mxu0 0.0
      %3089 = vmatpush1.msra.mxu0 0.0
      %3090 = vmatprep.subr.mxu0 0.0
      %3091 = vmatpush1.msra.mxu0 0.0
      %3092 = vmatprep.subr.mxu0 0.0
      %3093 = vmatpush1.msra.mxu0 0.0
      %3094 = vmatprep.subr.mxu0 0.0
      %3095 = vmatpush1.msra.mxu0 0.0
      %3096 = vmatprep.subr.mxu0 0.0
      %3097 = vmatpush1.msra.mxu0 0.0
      %3098 = vmatprep.subr.mxu0 0.0
      %3099 = vmatpush1.msra.mxu0 0.0
      %3100 = vmatprep.subr.mxu0 0.0
      %3101 = vmatpush1.msra.mxu0 0.0
      %3102 = vmatprep.subr.mxu0 0.0
      %3103 = vmatpush1.msra.mxu0 0.0
      %3104 = vmatprep.subr.mxu0 0.0
      %3105 = vmatpush1.msra.mxu0 0.0
      %3106 = vmatprep.subr.mxu0 0.0
      %3107 = vmatpush1.msra.mxu0 0.0
      %3108 = vmatprep.subr.mxu0 0.0
      %3109 = vmatpush1.msra.mxu0 0.0
      %3110 = vmatprep.subr.mxu0 0.0
      %3111 = vmatpush1.msra.mxu0 0.0
      %3112 = vmatprep.subr.mxu0 0.0
      %3113 = vmatpush1.msra.mxu0 0.0
      %3114 = vmatprep.subr.mxu0 0.0
      %3115 = vmatpush1.msra.mxu0 0.0
      %3116 = vmatprep.subr.mxu0 0.0
      %3117 = vmatpush1.msra.mxu0 0.0
      %3118 = vmatprep.subr.mxu0 0.0
      %3119 = vmatpush1.msra.mxu0 0.0
      %3120 = vmatprep.subr.mxu0 0.0
      %3121 = vmatpush1.msra.mxu0 0.0
      %3122 = vmatprep.subr.mxu0 0.0
      %3123 = vmatpush1.msra.mxu0 0.0
      %3124 = vmatprep.subr.mxu0 0.0
      %3125 = vmatpush1.msra.mxu0 0.0
      %3126 = vmatprep.subr.mxu0 0.0
      %3127 = vmatpush1.msra.mxu0 0.0
      %3128 = vmatprep.subr.mxu0 0.0
      %3129 = vmatpush1.msra.mxu0 0.0
      %3130 = vmatprep.subr.mxu0 0.0
      %3131 = vmatpush1.msra.mxu0 0.0
      %3132 = vmatprep.subr.mxu0 0.0
      %3133 = vmatpush1.msra.mxu0 0.0
      %3134 = vmatprep.subr.mxu0 0.0
      %3135 = vmatpush1.msra.mxu0 0.0
      %3136 = vmatprep.mubr.f32.mxu0 0.0
      %3137 = vmatmul.mubr.f32.gmra.mrb[0].mxu0 %v3070
      %v3138 = vpop.f32.mrb[0].mxu0
      %v3139 = vadd.f32 0.0, %v3138
      %v3140 = vpop.f32.mrb[0].mxu0
      %v3141 = vadd.f32 0.0, %v3140
      %3142 = vdwg.mxu0
      %3143 = vmatprep.subr.mxu0 %v3061
      %3144 = vmatpush1.msra.mxu0 %v3064
      %3145 = vmatprep.subr.mxu0 0.0
      %3146 = vmatpush1.msra.mxu0 0.0
      %3147 = vmatprep.subr.mxu0 0.0
      %3148 = vmatpush1.msra.mxu0 0.0
      %3149 = vmatprep.subr.mxu0 0.0
      %3150 = vmatpush1.msra.mxu0 0.0
      %3151 = vmatprep.subr.mxu0 0.0
      %3152 = vmatpush1.msra.mxu0 0.0
      %3153 = vmatprep.subr.mxu0 0.0
      %3154 = vmatpush1.msra.mxu0 0.0
      %3155 = vmatprep.subr.mxu0 0.0
      %3156 = vmatpush1.msra.mxu0 0.0
      %3157 = vmatprep.subr.mxu0 0.0
      %3158 = vmatpush1.msra.mxu0 0.0
      %3159 = vmatprep.subr.mxu0 0.0
      %3160 = vmatpush1.msra.mxu0 0.0
      %3161 = vmatprep.subr.mxu0 0.0
      %3162 = vmatpush1.msra.mxu0 0.0
      %3163 = vmatprep.subr.mxu0 0.0
      %3164 = vmatpush1.msra.mxu0 0.0
      %3165 = vmatprep.subr.mxu0 0.0
      %3166 = vmatpush1.msra.mxu0 0.0
      %3167 = vmatprep.subr.mxu0 0.0
      %3168 = vmatpush1.msra.mxu0 0.0
      %3169 = vmatprep.subr.mxu0 0.0
      %3170 = vmatpush1.msra.mxu0 0.0
      %3171 = vmatprep.subr.mxu0 0.0
      %3172 = vmatpush1.msra.mxu0 0.0
      %3173 = vmatprep.subr.mxu0 0.0
      %3174 = vmatpush1.msra.mxu0 0.0
      %3175 = vmatprep.subr.mxu0 0.0
      %3176 = vmatpush1.msra.mxu0 0.0
      %3177 = vmatprep.subr.mxu0 0.0
      %3178 = vmatpush1.msra.mxu0 0.0
      %3179 = vmatprep.subr.mxu0 0.0
      %3180 = vmatpush1.msra.mxu0 0.0
      %3181 = vmatprep.subr.mxu0 0.0
      %3182 = vmatpush1.msra.mxu0 0.0
      %3183 = vmatprep.subr.mxu0 0.0
      %3184 = vmatpush1.msra.mxu0 0.0
      %3185 = vmatprep.subr.mxu0 0.0
      %3186 = vmatpush1.msra.mxu0 0.0
      %3187 = vmatprep.subr.mxu0 0.0
      %3188 = vmatpush1.msra.mxu0 0.0
      %3189 = vmatprep.subr.mxu0 0.0
      %3190 = vmatpush1.msra.mxu0 0.0
      %3191 = vmatprep.subr.mxu0 0.0
      %3192 = vmatpush1.msra.mxu0 0.0
      %3193 = vmatprep.subr.mxu0 0.0
      %3194 = vmatpush1.msra.mxu0 0.0
      %3195 = vmatprep.subr.mxu0 0.0
      %3196 = vmatpush1.msra.mxu0 0.0
      %3197 = vmatprep.subr.mxu0 0.0
      %3198 = vmatpush1.msra.mxu0 0.0
      %3199 = vmatprep.subr.mxu0 0.0
      %3200 = vmatpush1.msra.mxu0 0.0
      %3201 = vmatprep.subr.mxu0 0.0
      %3202 = vmatpush1.msra.mxu0 0.0
      %3203 = vmatprep.subr.mxu0 0.0
      %3204 = vmatpush1.msra.mxu0 0.0
      %3205 = vmatprep.subr.mxu0 0.0
      %3206 = vmatpush1.msra.mxu0 0.0
      %3207 = vmatprep.mubr.f32.mxu0 0.0
      %3208 = vmatmul.mubr.f32.gmra.mrb[0].mxu0 %v3070
      %v3209 = vpop.f32.mrb[0].mxu0
      %v3210 = vadd.f32 0.0, %v3209
      %v3211 = vpop.f32.mrb[0].mxu0
      %v3212 = vadd.f32 0.0, %v3211
      %3213 = vdwg.mxu0
      %v3214 = vadd.f32 %v3048, %v3139
      %v3215 = vadd.f32 %v3049, %v3141
      %v3216 = vadd.f32 %v3050, %v3210
      %v3217 = vadd.f32 %v3051, %v3212
      %s3218 = scalar_lea.vmem %s4, 16
      %v3219 = vld [vmem:[%s3218] sm:$0x7]
      %3220 = vrot.lane.b32.xlu0 %v2569, 103
      %v3221 = vpop.permute.xlu0 %3220
      %3222 = vrot.lane.b32.xlu0 %v2570, 103
      %v3223 = vpop.permute.xlu0 %3222
      %3224 = vrot.lane.b32.xlu0 %v2571, 103
      %v3225 = vpop.permute.xlu0 %3224
      %3226 = vrot.lane.b32.xlu0 %v2572, 103
      %v3227 = vpop.permute.xlu0 %3226
      %v3228 = vsel %vm1260, %v3221, %v3223
      %v3229 = vsel %vm1260, %v3223, %v3225
      %v3230 = vsel %vm1260, %v3225, %v3227
      %v3236 = vsel %vm2595, %v3219, 0
      %3238 = vmatprep.subr.mxu0 %v3229
      %3239 = vmatpush1.msra.mxu0 %v3228
      %3240 = vmatprep.subr.mxu0 0.0
      %3241 = vmatpush1.msra.mxu0 0.0
      %3242 = vmatprep.subr.mxu0 0.0
      %3243 = vmatpush1.msra.mxu0 0.0
      %3244 = vmatprep.subr.mxu0 0.0
      %3245 = vmatpush1.msra.mxu0 0.0
      %3246 = vmatprep.subr.mxu0 0.0
      %3247 = vmatpush1.msra.mxu0 0.0
      %3248 = vmatprep.subr.mxu0 0.0
      %3249 = vmatpush1.msra.mxu0 0.0
      %3250 = vmatprep.subr.mxu0 0.0
      %3251 = vmatpush1.msra.mxu0 0.0
      %3252 = vmatprep.subr.mxu0 0.0
      %3253 = vmatpush1.msra.mxu0 0.0
      %3254 = vmatprep.subr.mxu0 0.0
      %3255 = vmatpush1.msra.mxu0 0.0
      %3256 = vmatprep.subr.mxu0 0.0
      %3257 = vmatpush1.msra.mxu0 0.0
      %3258 = vmatprep.subr.mxu0 0.0
      %3259 = vmatpush1.msra.mxu0 0.0
      %3260 = vmatprep.subr.mxu0 0.0
      %3261 = vmatpush1.msra.mxu0 0.0
      %3262 = vmatprep.subr.mxu0 0.0
      %3263 = vmatpush1.msra.mxu0 0.0
      %3264 = vmatprep.subr.mxu0 0.0
      %3265 = vmatpush1.msra.mxu0 0.0
      %3266 = vmatprep.subr.mxu0 0.0
      %3267 = vmatpush1.msra.mxu0 0.0
      %3268 = vmatprep.subr.mxu0 0.0
      %3269 = vmatpush1.msra.mxu0 0.0
      %3270 = vmatprep.subr.mxu0 0.0
      %3271 = vmatpush1.msra.mxu0 0.0
      %3272 = vmatprep.subr.mxu0 0.0
      %3273 = vmatpush1.msra.mxu0 0.0
      %3274 = vmatprep.subr.mxu0 0.0
      %3275 = vmatpush1.msra.mxu0 0.0
      %3276 = vmatprep.subr.mxu0 0.0
      %3277 = vmatpush1.msra.mxu0 0.0
      %3278 = vmatprep.subr.mxu0 0.0
      %3279 = vmatpush1.msra.mxu0 0.0
      %3280 = vmatprep.subr.mxu0 0.0
      %3281 = vmatpush1.msra.mxu0 0.0
      %3282 = vmatprep.subr.mxu0 0.0
      %3283 = vmatpush1.msra.mxu0 0.0
      %3284 = vmatprep.subr.mxu0 0.0
      %3285 = vmatpush1.msra.mxu0 0.0
      %3286 = vmatprep.subr.mxu0 0.0
      %3287 = vmatpush1.msra.mxu0 0.0
      %3288 = vmatprep.subr.mxu0 0.0
      %3289 = vmatpush1.msra.mxu0 0.0
      %3290 = vmatprep.subr.mxu0 0.0
      %3291 = vmatpush1.msra.mxu0 0.0
      %3292 = vmatprep.subr.mxu0 0.0
      %3293 = vmatpush1.msra.mxu0 0.0
      %3294 = vmatprep.subr.mxu0 0.0
      %3295 = vmatpush1.msra.mxu0 0.0
      %3296 = vmatprep.subr.mxu0 0.0
      %3297 = vmatpush1.msra.mxu0 0.0
      %3298 = vmatprep.subr.mxu0 0.0
      %3299 = vmatpush1.msra.mxu0 0.0
      %3300 = vmatprep.subr.mxu0 0.0
      %3301 = vmatpush1.msra.mxu0 0.0
      %3302 = vmatprep.mubr.f32.mxu0 0.0
      %3303 = vmatmul.mubr.f32.gmra.mrb[0].mxu0 %v3236
      %v3304 = vpop.f32.mrb[0].mxu0
      %v3305 = vadd.f32 0.0, %v3304
      %v3306 = vpop.f32.mrb[0].mxu0
      %v3307 = vadd.f32 0.0, %v3306
      %3308 = vdwg.mxu0
      %3309 = vmatprep.subr.mxu0 %v3227
      %3310 = vmatpush1.msra.mxu0 %v3230
      %3311 = vmatprep.subr.mxu0 0.0
      %3312 = vmatpush1.msra.mxu0 0.0
      %3313 = vmatprep.subr.mxu0 0.0
      %3314 = vmatpush1.msra.mxu0 0.0
      %3315 = vmatprep.subr.mxu0 0.0
      %3316 = vmatpush1.msra.mxu0 0.0
      %3317 = vmatprep.subr.mxu0 0.0
      %3318 = vmatpush1.msra.mxu0 0.0
      %3319 = vmatprep.subr.mxu0 0.0
      %3320 = vmatpush1.msra.mxu0 0.0
      %3321 = vmatprep.subr.mxu0 0.0
      %3322 = vmatpush1.msra.mxu0 0.0
      %3323 = vmatprep.subr.mxu0 0.0
      %3324 = vmatpush1.msra.mxu0 0.0
      %3325 = vmatprep.subr.mxu0 0.0
      %3326 = vmatpush1.msra.mxu0 0.0
      %3327 = vmatprep.subr.mxu0 0.0
      %3328 = vmatpush1.msra.mxu0 0.0
      %3329 = vmatprep.subr.mxu0 0.0
      %3330 = vmatpush1.msra.mxu0 0.0
      %3331 = vmatprep.subr.mxu0 0.0
      %3332 = vmatpush1.msra.mxu0 0.0
      %3333 = vmatprep.subr.mxu0 0.0
      %3334 = vmatpush1.msra.mxu0 0.0
      %3335 = vmatprep.subr.mxu0 0.0
      %3336 = vmatpush1.msra.mxu0 0.0
      %3337 = vmatprep.subr.mxu0 0.0
      %3338 = vmatpush1.msra.mxu0 0.0
      %3339 = vmatprep.subr.mxu0 0.0
      %3340 = vmatpush1.msra.mxu0 0.0
      %3341 = vmatprep.subr.mxu0 0.0
      %3342 = vmatpush1.msra.mxu0 0.0
      %3343 = vmatprep.subr.mxu0 0.0
      %3344 = vmatpush1.msra.mxu0 0.0
      %3345 = vmatprep.subr.mxu0 0.0
      %3346 = vmatpush1.msra.mxu0 0.0
      %3347 = vmatprep.subr.mxu0 0.0
      %3348 = vmatpush1.msra.mxu0 0.0
      %3349 = vmatprep.subr.mxu0 0.0
      %3350 = vmatpush1.msra.mxu0 0.0
      %3351 = vmatprep.subr.mxu0 0.0
      %3352 = vmatpush1.msra.mxu0 0.0
      %3353 = vmatprep.subr.mxu0 0.0
      %3354 = vmatpush1.msra.mxu0 0.0
      %3355 = vmatprep.subr.mxu0 0.0
      %3356 = vmatpush1.msra.mxu0 0.0
      %3357 = vmatprep.subr.mxu0 0.0
      %3358 = vmatpush1.msra.mxu0 0.0
      %3359 = vmatprep.subr.mxu0 0.0
      %3360 = vmatpush1.msra.mxu0 0.0
      %3361 = vmatprep.subr.mxu0 0.0
      %3362 = vmatpush1.msra.mxu0 0.0
      %3363 = vmatprep.subr.mxu0 0.0
      %3364 = vmatpush1.msra.mxu0 0.0
      %3365 = vmatprep.subr.mxu0 0.0
      %3366 = vmatpush1.msra.mxu0 0.0
      %3367 = vmatprep.subr.mxu0 0.0
      %3368 = vmatpush1.msra.mxu0 0.0
      %3369 = vmatprep.subr.mxu0 0.0
      %3370 = vmatpush1.msra.mxu0 0.0
      %3371 = vmatprep.subr.mxu0 0.0
      %3372 = vmatpush1.msra.mxu0 0.0
      %3373 = vmatprep.mubr.f32.mxu0 0.0
      %3374 = vmatmul.mubr.f32.gmra.mrb[0].mxu0 %v3236
      %v3375 = vpop.f32.mrb[0].mxu0
      %v3376 = vadd.f32 0.0, %v3375
      %v3377 = vpop.f32.mrb[0].mxu0
      %v3378 = vadd.f32 0.0, %v3377
      %3379 = vdwg.mxu0
      %v3380 = vadd.f32 %v3214, %v3305
      %v3381 = vadd.f32 %v3215, %v3307
      %v3382 = vadd.f32 %v3216, %v3376
      %v3383 = vadd.f32 %v3217, %v3378
      %s3384 = scalar_lea.vmem %s4, 20
      %v3385 = vld [vmem:[%s3384] sm:$0x7]
      %3386 = vrot.lane.b32.xlu0 %v2569, 102
      %v3387 = vpop.permute.xlu0 %3386
      %3388 = vrot.lane.b32.xlu0 %v2570, 102
      %v3389 = vpop.permute.xlu0 %3388
      %3390 = vrot.lane.b32.xlu0 %v2571, 102
      %v3391 = vpop.permute.xlu0 %3390
      %3392 = vrot.lane.b32.xlu0 %v2572, 102
      %v3393 = vpop.permute.xlu0 %3392
      %v3394 = vsel %vm1515, %v3387, %v3389
      %v3395 = vsel %vm1515, %v3389, %v3391
      %v3396 = vsel %vm1515, %v3391, %v3393
      %v3402 = vsel %vm2595, %v3385, 0
      %3404 = vmatprep.subr.mxu0 %v3395
      %3405 = vmatpush1.msra.mxu0 %v3394
      %3406 = vmatprep.subr.mxu0 0.0
      %3407 = vmatpush1.msra.mxu0 0.0
      %3408 = vmatprep.subr.mxu0 0.0
      %3409 = vmatpush1.msra.mxu0 0.0
      %3410 = vmatprep.subr.mxu0 0.0
      %3411 = vmatpush1.msra.mxu0 0.0
      %3412 = vmatprep.subr.mxu0 0.0
      %3413 = vmatpush1.msra.mxu0 0.0
      %3414 = vmatprep.subr.mxu0 0.0
      %3415 = vmatpush1.msra.mxu0 0.0
      %3416 = vmatprep.subr.mxu0 0.0
      %3417 = vmatpush1.msra.mxu0 0.0
      %3418 = vmatprep.subr.mxu0 0.0
      %3419 = vmatpush1.msra.mxu0 0.0
      %3420 = vmatprep.subr.mxu0 0.0
      %3421 = vmatpush1.msra.mxu0 0.0
      %3422 = vmatprep.subr.mxu0 0.0
      %3423 = vmatpush1.msra.mxu0 0.0
      %3424 = vmatprep.subr.mxu0 0.0
      %3425 = vmatpush1.msra.mxu0 0.0
      %3426 = vmatprep.subr.mxu0 0.0
      %3427 = vmatpush1.msra.mxu0 0.0
      %3428 = vmatprep.subr.mxu0 0.0
      %3429 = vmatpush1.msra.mxu0 0.0
      %3430 = vmatprep.subr.mxu0 0.0
      %3431 = vmatpush1.msra.mxu0 0.0
      %3432 = vmatprep.subr.mxu0 0.0
      %3433 = vmatpush1.msra.mxu0 0.0
      %3434 = vmatprep.subr.mxu0 0.0
      %3435 = vmatpush1.msra.mxu0 0.0
      %3436 = vmatprep.subr.mxu0 0.0
      %3437 = vmatpush1.msra.mxu0 0.0
      %3438 = vmatprep.subr.mxu0 0.0
      %3439 = vmatpush1.msra.mxu0 0.0
      %3440 = vmatprep.subr.mxu0 0.0
      %3441 = vmatpush1.msra.mxu0 0.0
      %3442 = vmatprep.subr.mxu0 0.0
      %3443 = vmatpush1.msra.mxu0 0.0
      %3444 = vmatprep.subr.mxu0 0.0
      %3445 = vmatpush1.msra.mxu0 0.0
      %3446 = vmatprep.subr.mxu0 0.0
      %3447 = vmatpush1.msra.mxu0 0.0
      %3448 = vmatprep.subr.mxu0 0.0
      %3449 = vmatpush1.msra.mxu0 0.0
      %3450 = vmatprep.subr.mxu0 0.0
      %3451 = vmatpush1.msra.mxu0 0.0
      %3452 = vmatprep.subr.mxu0 0.0
      %3453 = vmatpush1.msra.mxu0 0.0
      %3454 = vmatprep.subr.mxu0 0.0
      %3455 = vmatpush1.msra.mxu0 0.0
      %3456 = vmatprep.subr.mxu0 0.0
      %3457 = vmatpush1.msra.mxu0 0.0
      %3458 = vmatprep.subr.mxu0 0.0
      %3459 = vmatpush1.msra.mxu0 0.0
      %3460 = vmatprep.subr.mxu0 0.0
      %3461 = vmatpush1.msra.mxu0 0.0
      %3462 = vmatprep.subr.mxu0 0.0
      %3463 = vmatpush1.msra.mxu0 0.0
      %3464 = vmatprep.subr.mxu0 0.0
      %3465 = vmatpush1.msra.mxu0 0.0
      %3466 = vmatprep.subr.mxu0 0.0
      %3467 = vmatpush1.msra.mxu0 0.0
      %3468 = vmatprep.mubr.f32.mxu0 0.0
      %3469 = vmatmul.mubr.f32.gmra.mrb[0].mxu0 %v3402
      %v3470 = vpop.f32.mrb[0].mxu0
      %v3471 = vadd.f32 0.0, %v3470
      %v3472 = vpop.f32.mrb[0].mxu0
      %v3473 = vadd.f32 0.0, %v3472
      %3474 = vdwg.mxu0
      %3475 = vmatprep.subr.mxu0 %v3393
      %3476 = vmatpush1.msra.mxu0 %v3396
      %3477 = vmatprep.subr.mxu0 0.0
      %3478 = vmatpush1.msra.mxu0 0.0
      %3479 = vmatprep.subr.mxu0 0.0
      %3480 = vmatpush1.msra.mxu0 0.0
      %3481 = vmatprep.subr.mxu0 0.0
      %3482 = vmatpush1.msra.mxu0 0.0
      %3483 = vmatprep.subr.mxu0 0.0
      %3484 = vmatpush1.msra.mxu0 0.0
      %3485 = vmatprep.subr.mxu0 0.0
      %3486 = vmatpush1.msra.mxu0 0.0
      %3487 = vmatprep.subr.mxu0 0.0
      %3488 = vmatpush1.msra.mxu0 0.0
      %3489 = vmatprep.subr.mxu0 0.0
      %3490 = vmatpush1.msra.mxu0 0.0
      %3491 = vmatprep.subr.mxu0 0.0
      %3492 = vmatpush1.msra.mxu0 0.0
      %3493 = vmatprep.subr.mxu0 0.0
      %3494 = vmatpush1.msra.mxu0 0.0
      %3495 = vmatprep.subr.mxu0 0.0
      %3496 = vmatpush1.msra.mxu0 0.0
      %3497 = vmatprep.subr.mxu0 0.0
      %3498 = vmatpush1.msra.mxu0 0.0
      %3499 = vmatprep.subr.mxu0 0.0
      %3500 = vmatpush1.msra.mxu0 0.0
      %3501 = vmatprep.subr.mxu0 0.0
      %3502 = vmatpush1.msra.mxu0 0.0
      %3503 = vmatprep.subr.mxu0 0.0
      %3504 = vmatpush1.msra.mxu0 0.0
      %3505 = vmatprep.subr.mxu0 0.0
      %3506 = vmatpush1.msra.mxu0 0.0
      %3507 = vmatprep.subr.mxu0 0.0
      %3508 = vmatpush1.msra.mxu0 0.0
      %3509 = vmatprep.subr.mxu0 0.0
      %3510 = vmatpush1.msra.mxu0 0.0
      %3511 = vmatprep.subr.mxu0 0.0
      %3512 = vmatpush1.msra.mxu0 0.0
      %3513 = vmatprep.subr.mxu0 0.0
      %3514 = vmatpush1.msra.mxu0 0.0
      %3515 = vmatprep.subr.mxu0 0.0
      %3516 = vmatpush1.msra.mxu0 0.0
      %3517 = vmatprep.subr.mxu0 0.0
      %3518 = vmatpush1.msra.mxu0 0.0
      %3519 = vmatprep.subr.mxu0 0.0
      %3520 = vmatpush1.msra.mxu0 0.0
      %3521 = vmatprep.subr.mxu0 0.0
      %3522 = vmatpush1.msra.mxu0 0.0
      %3523 = vmatprep.subr.mxu0 0.0
      %3524 = vmatpush1.msra.mxu0 0.0
      %3525 = vmatprep.subr.mxu0 0.0
      %3526 = vmatpush1.msra.mxu0 0.0
      %3527 = vmatprep.subr.mxu0 0.0
      %3528 = vmatpush1.msra.mxu0 0.0
      %3529 = vmatprep.subr.mxu0 0.0
      %3530 = vmatpush1.msra.mxu0 0.0
      %3531 = vmatprep.subr.mxu0 0.0
      %3532 = vmatpush1.msra.mxu0 0.0
      %3533 = vmatprep.subr.mxu0 0.0
      %3534 = vmatpush1.msra.mxu0 0.0
      %3535 = vmatprep.subr.mxu0 0.0
      %3536 = vmatpush1.msra.mxu0 0.0
      %3537 = vmatprep.subr.mxu0 0.0
      %3538 = vmatpush1.msra.mxu0 0.0
      %3539 = vmatprep.mubr.f32.mxu0 0.0
      %3540 = vmatmul.mubr.f32.gmra.mrb[0].mxu0 %v3402
      %v3541 = vpop.f32.mrb[0].mxu0
      %v3542 = vadd.f32 0.0, %v3541
      %v3543 = vpop.f32.mrb[0].mxu0
      %v3544 = vadd.f32 0.0, %v3543
      %3545 = vdwg.mxu0
      %v3546 = vadd.f32 %v3380, %v3471
      %v3547 = vadd.f32 %v3381, %v3473
      %v3548 = vadd.f32 %v3382, %v3542
      %v3549 = vadd.f32 %v3383, %v3544
      %v3550 = vld [vmem:[#allocation2] sm:$0xff]
      %v3551 = vld [vmem:[#allocation2 + $0x8] sm:$0xff]
      %v3552 = vld [vmem:[#allocation2 + $0x10] sm:$0xff]
      %v3553 = vld [vmem:[#allocation2 + $0x18] sm:$0xff]
      %v3554 = vld [vmem:[#allocation2 + $0x20] sm:$0xff]
      %s3555 = scalar_lea.vmem %s4, 24
      %v3556 = vld [vmem:[%s3555] sm:$0x7]
      %3562 = vrot.lane.b32.xlu0 %v3550, 80
      %v3563 = vpop.permute.xlu0 %3562
      %3564 = vrot.lane.b32.xlu0 %v3551, 80
      %v3565 = vpop.permute.xlu0 %3564
      %3566 = vrot.lane.b32.xlu0 %v3552, 80
      %v3567 = vpop.permute.xlu0 %3566
      %3568 = vrot.lane.b32.xlu0 %v3553, 80
      %v3569 = vpop.permute.xlu0 %3568
      %3570 = vrot.lane.b32.xlu0 %v3554, 80
      %v3571 = vpop.permute.xlu0 %3570
      %v3572 = vsel %vm1770, %v3563, %v3565
      %v3573 = vsel %vm1770, %v3565, %v3567
      %v3574 = vsel %vm1770, %v3567, %v3569
      %v3575 = vsel %vm1770, %v3569, %v3571
      %v3581 = vsel %vm2595, %v3556, 0
      %3583 = vmatprep.subr.mxu0 %v3573
      %3584 = vmatpush1.msra.mxu0 %v3572
      %3585 = vmatprep.subr.mxu0 0.0
      %3586 = vmatpush1.msra.mxu0 0.0
      %3587 = vmatprep.subr.mxu0 0.0
      %3588 = vmatpush1.msra.mxu0 0.0
      %3589 = vmatprep.subr.mxu0 0.0
      %3590 = vmatpush1.msra.mxu0 0.0
      %3591 = vmatprep.subr.mxu0 0.0
      %3592 = vmatpush1.msra.mxu0 0.0
      %3593 = vmatprep.subr.mxu0 0.0
      %3594 = vmatpush1.msra.mxu0 0.0
      %3595 = vmatprep.subr.mxu0 0.0
      %3596 = vmatpush1.msra.mxu0 0.0
      %3597 = vmatprep.subr.mxu0 0.0
      %3598 = vmatpush1.msra.mxu0 0.0
      %3599 = vmatprep.subr.mxu0 0.0
      %3600 = vmatpush1.msra.mxu0 0.0
      %3601 = vmatprep.subr.mxu0 0.0
      %3602 = vmatpush1.msra.mxu0 0.0
      %3603 = vmatprep.subr.mxu0 0.0
      %3604 = vmatpush1.msra.mxu0 0.0
      %3605 = vmatprep.subr.mxu0 0.0
      %3606 = vmatpush1.msra.mxu0 0.0
      %3607 = vmatprep.subr.mxu0 0.0
      %3608 = vmatpush1.msra.mxu0 0.0
      %3609 = vmatprep.subr.mxu0 0.0
      %3610 = vmatpush1.msra.mxu0 0.0
      %3611 = vmatprep.subr.mxu0 0.0
      %3612 = vmatpush1.msra.mxu0 0.0
      %3613 = vmatprep.subr.mxu0 0.0
      %3614 = vmatpush1.msra.mxu0 0.0
      %3615 = vmatprep.subr.mxu0 0.0
      %3616 = vmatpush1.msra.mxu0 0.0
      %3617 = vmatprep.subr.mxu0 0.0
      %3618 = vmatpush1.msra.mxu0 0.0
      %3619 = vmatprep.subr.mxu0 0.0
      %3620 = vmatpush1.msra.mxu0 0.0
      %3621 = vmatprep.subr.mxu0 0.0
      %3622 = vmatpush1.msra.mxu0 0.0
      %3623 = vmatprep.subr.mxu0 0.0
      %3624 = vmatpush1.msra.mxu0 0.0
      %3625 = vmatprep.subr.mxu0 0.0
      %3626 = vmatpush1.msra.mxu0 0.0
      %3627 = vmatprep.subr.mxu0 0.0
      %3628 = vmatpush1.msra.mxu0 0.0
      %3629 = vmatprep.subr.mxu0 0.0
      %3630 = vmatpush1.msra.mxu0 0.0
      %3631 = vmatprep.subr.mxu0 0.0
      %3632 = vmatpush1.msra.mxu0 0.0
      %3633 = vmatprep.subr.mxu0 0.0
      %3634 = vmatpush1.msra.mxu0 0.0
      %3635 = vmatprep.subr.mxu0 0.0
      %3636 = vmatpush1.msra.mxu0 0.0
      %3637 = vmatprep.subr.mxu0 0.0
      %3638 = vmatpush1.msra.mxu0 0.0
      %3639 = vmatprep.subr.mxu0 0.0
      %3640 = vmatpush1.msra.mxu0 0.0
      %3641 = vmatprep.subr.mxu0 0.0
      %3642 = vmatpush1.msra.mxu0 0.0
      %3643 = vmatprep.subr.mxu0 0.0
      %3644 = vmatpush1.msra.mxu0 0.0
      %3645 = vmatprep.subr.mxu0 0.0
      %3646 = vmatpush1.msra.mxu0 0.0
      %3647 = vmatprep.mubr.f32.mxu0 0.0
      %3648 = vmatmul.mubr.f32.gmra.mrb[0].mxu0 %v3581
      %v3649 = vpop.f32.mrb[0].mxu0
      %v3650 = vadd.f32 0.0, %v3649
      %v3651 = vpop.f32.mrb[0].mxu0
      %v3652 = vadd.f32 0.0, %v3651
      %3653 = vdwg.mxu0
      %3654 = vmatprep.subr.mxu0 %v3575
      %3655 = vmatpush1.msra.mxu0 %v3574
      %3656 = vmatprep.subr.mxu0 0.0
      %3657 = vmatpush1.msra.mxu0 0.0
      %3658 = vmatprep.subr.mxu0 0.0
      %3659 = vmatpush1.msra.mxu0 0.0
      %3660 = vmatprep.subr.mxu0 0.0
      %3661 = vmatpush1.msra.mxu0 0.0
      %3662 = vmatprep.subr.mxu0 0.0
      %3663 = vmatpush1.msra.mxu0 0.0
      %3664 = vmatprep.subr.mxu0 0.0
      %3665 = vmatpush1.msra.mxu0 0.0
      %3666 = vmatprep.subr.mxu0 0.0
      %3667 = vmatpush1.msra.mxu0 0.0
      %3668 = vmatprep.subr.mxu0 0.0
      %3669 = vmatpush1.msra.mxu0 0.0
      %3670 = vmatprep.subr.mxu0 0.0
      %3671 = vmatpush1.msra.mxu0 0.0
      %3672 = vmatprep.subr.mxu0 0.0
      %3673 = vmatpush1.msra.mxu0 0.0
      %3674 = vmatprep.subr.mxu0 0.0
      %3675 = vmatpush1.msra.mxu0 0.0
      %3676 = vmatprep.subr.mxu0 0.0
      %3677 = vmatpush1.msra.mxu0 0.0
      %3678 = vmatprep.subr.mxu0 0.0
      %3679 = vmatpush1.msra.mxu0 0.0
      %3680 = vmatprep.subr.mxu0 0.0
      %3681 = vmatpush1.msra.mxu0 0.0
      %3682 = vmatprep.subr.mxu0 0.0
      %3683 = vmatpush1.msra.mxu0 0.0
      %3684 = vmatprep.subr.mxu0 0.0
      %3685 = vmatpush1.msra.mxu0 0.0
      %3686 = vmatprep.subr.mxu0 0.0
      %3687 = vmatpush1.msra.mxu0 0.0
      %3688 = vmatprep.subr.mxu0 0.0
      %3689 = vmatpush1.msra.mxu0 0.0
      %3690 = vmatprep.subr.mxu0 0.0
      %3691 = vmatpush1.msra.mxu0 0.0
      %3692 = vmatprep.subr.mxu0 0.0
      %3693 = vmatpush1.msra.mxu0 0.0
      %3694 = vmatprep.subr.mxu0 0.0
      %3695 = vmatpush1.msra.mxu0 0.0
      %3696 = vmatprep.subr.mxu0 0.0
      %3697 = vmatpush1.msra.mxu0 0.0
      %3698 = vmatprep.subr.mxu0 0.0
      %3699 = vmatpush1.msra.mxu0 0.0
      %3700 = vmatprep.subr.mxu0 0.0
      %3701 = vmatpush1.msra.mxu0 0.0
      %3702 = vmatprep.subr.mxu0 0.0
      %3703 = vmatpush1.msra.mxu0 0.0
      %3704 = vmatprep.subr.mxu0 0.0
      %3705 = vmatpush1.msra.mxu0 0.0
      %3706 = vmatprep.subr.mxu0 0.0
      %3707 = vmatpush1.msra.mxu0 0.0
      %3708 = vmatprep.subr.mxu0 0.0
      %3709 = vmatpush1.msra.mxu0 0.0
      %3710 = vmatprep.subr.mxu0 0.0
      %3711 = vmatpush1.msra.mxu0 0.0
      %3712 = vmatprep.subr.mxu0 0.0
      %3713 = vmatpush1.msra.mxu0 0.0
      %3714 = vmatprep.subr.mxu0 0.0
      %3715 = vmatpush1.msra.mxu0 0.0
      %3716 = vmatprep.subr.mxu0 0.0
      %3717 = vmatpush1.msra.mxu0 0.0
      %3718 = vmatprep.mubr.f32.mxu0 0.0
      %3719 = vmatmul.mubr.f32.gmra.mrb[0].mxu0 %v3581
      %v3720 = vpop.f32.mrb[0].mxu0
      %v3721 = vadd.f32 0.0, %v3720
      %v3722 = vpop.f32.mrb[0].mxu0
      %v3723 = vadd.f32 0.0, %v3722
      %3724 = vdwg.mxu0
      %v3725 = vadd.f32 %v3546, %v3650
      %v3726 = vadd.f32 %v3547, %v3652
      %v3727 = vadd.f32 %v3548, %v3721
      %v3728 = vadd.f32 %v3549, %v3723
      %s3729 = scalar_lea.vmem %s4, 28
      %v3730 = vld [vmem:[%s3729] sm:$0x7]
      %3731 = vrot.lane.b32.xlu0 %v3550, 79
      %v3732 = vpop.permute.xlu0 %3731
      %3733 = vrot.lane.b32.xlu0 %v3551, 79
      %v3734 = vpop.permute.xlu0 %3733
      %3735 = vrot.lane.b32.xlu0 %v3552, 79
      %v3736 = vpop.permute.xlu0 %3735
      %3737 = vrot.lane.b32.xlu0 %v3553, 79
      %v3738 = vpop.permute.xlu0 %3737
      %3739 = vrot.lane.b32.xlu0 %v3554, 79
      %v3740 = vpop.permute.xlu0 %3739
      %v3741 = vsel %vm2025, %v3732, %v3734
      %v3742 = vsel %vm2025, %v3734, %v3736
      %v3743 = vsel %vm2025, %v3736, %v3738
      %v3744 = vsel %vm2025, %v3738, %v3740
      %v3750 = vsel %vm2595, %v3730, 0
      %3752 = vmatprep.subr.mxu0 %v3742
      %3753 = vmatpush1.msra.mxu0 %v3741
      %3754 = vmatprep.subr.mxu0 0.0
      %3755 = vmatpush1.msra.mxu0 0.0
      %3756 = vmatprep.subr.mxu0 0.0
      %3757 = vmatpush1.msra.mxu0 0.0
      %3758 = vmatprep.subr.mxu0 0.0
      %3759 = vmatpush1.msra.mxu0 0.0
      %3760 = vmatprep.subr.mxu0 0.0
      %3761 = vmatpush1.msra.mxu0 0.0
      %3762 = vmatprep.subr.mxu0 0.0
      %3763 = vmatpush1.msra.mxu0 0.0
      %3764 = vmatprep.subr.mxu0 0.0
      %3765 = vmatpush1.msra.mxu0 0.0
      %3766 = vmatprep.subr.mxu0 0.0
      %3767 = vmatpush1.msra.mxu0 0.0
      %3768 = vmatprep.subr.mxu0 0.0
      %3769 = vmatpush1.msra.mxu0 0.0
      %3770 = vmatprep.subr.mxu0 0.0
      %3771 = vmatpush1.msra.mxu0 0.0
      %3772 = vmatprep.subr.mxu0 0.0
      %3773 = vmatpush1.msra.mxu0 0.0
      %3774 = vmatprep.subr.mxu0 0.0
      %3775 = vmatpush1.msra.mxu0 0.0
      %3776 = vmatprep.subr.mxu0 0.0
      %3777 = vmatpush1.msra.mxu0 0.0
      %3778 = vmatprep.subr.mxu0 0.0
      %3779 = vmatpush1.msra.mxu0 0.0
      %3780 = vmatprep.subr.mxu0 0.0
      %3781 = vmatpush1.msra.mxu0 0.0
      %3782 = vmatprep.subr.mxu0 0.0
      %3783 = vmatpush1.msra.mxu0 0.0
      %3784 = vmatprep.subr.mxu0 0.0
      %3785 = vmatpush1.msra.mxu0 0.0
      %3786 = vmatprep.subr.mxu0 0.0
      %3787 = vmatpush1.msra.mxu0 0.0
      %3788 = vmatprep.subr.mxu0 0.0
      %3789 = vmatpush1.msra.mxu0 0.0
      %3790 = vmatprep.subr.mxu0 0.0
      %3791 = vmatpush1.msra.mxu0 0.0
      %3792 = vmatprep.subr.mxu0 0.0
      %3793 = vmatpush1.msra.mxu0 0.0
      %3794 = vmatprep.subr.mxu0 0.0
      %3795 = vmatpush1.msra.mxu0 0.0
      %3796 = vmatprep.subr.mxu0 0.0
      %3797 = vmatpush1.msra.mxu0 0.0
      %3798 = vmatprep.subr.mxu0 0.0
      %3799 = vmatpush1.msra.mxu0 0.0
      %3800 = vmatprep.subr.mxu0 0.0
      %3801 = vmatpush1.msra.mxu0 0.0
      %3802 = vmatprep.subr.mxu0 0.0
      %3803 = vmatpush1.msra.mxu0 0.0
      %3804 = vmatprep.subr.mxu0 0.0
      %3805 = vmatpush1.msra.mxu0 0.0
      %3806 = vmatprep.subr.mxu0 0.0
      %3807 = vmatpush1.msra.mxu0 0.0
      %3808 = vmatprep.subr.mxu0 0.0
      %3809 = vmatpush1.msra.mxu0 0.0
      %3810 = vmatprep.subr.mxu0 0.0
      %3811 = vmatpush1.msra.mxu0 0.0
      %3812 = vmatprep.subr.mxu0 0.0
      %3813 = vmatpush1.msra.mxu0 0.0
      %3814 = vmatprep.subr.mxu0 0.0
      %3815 = vmatpush1.msra.mxu0 0.0
      %3816 = vmatprep.mubr.f32.mxu0 0.0
      %3817 = vmatmul.mubr.f32.gmra.mrb[0].mxu0 %v3750
      %v3818 = vpop.f32.mrb[0].mxu0
      %v3819 = vadd.f32 0.0, %v3818
      %v3820 = vpop.f32.mrb[0].mxu0
      %v3821 = vadd.f32 0.0, %v3820
      %3822 = vdwg.mxu0
      %3823 = vmatprep.subr.mxu0 %v3744
      %3824 = vmatpush1.msra.mxu0 %v3743
      %3825 = vmatprep.subr.mxu0 0.0
      %3826 = vmatpush1.msra.mxu0 0.0
      %3827 = vmatprep.subr.mxu0 0.0
      %3828 = vmatpush1.msra.mxu0 0.0
      %3829 = vmatprep.subr.mxu0 0.0
      %3830 = vmatpush1.msra.mxu0 0.0
      %3831 = vmatprep.subr.mxu0 0.0
      %3832 = vmatpush1.msra.mxu0 0.0
      %3833 = vmatprep.subr.mxu0 0.0
      %3834 = vmatpush1.msra.mxu0 0.0
      %3835 = vmatprep.subr.mxu0 0.0
      %3836 = vmatpush1.msra.mxu0 0.0
      %3837 = vmatprep.subr.mxu0 0.0
      %3838 = vmatpush1.msra.mxu0 0.0
      %3839 = vmatprep.subr.mxu0 0.0
      %3840 = vmatpush1.msra.mxu0 0.0
      %3841 = vmatprep.subr.mxu0 0.0
      %3842 = vmatpush1.msra.mxu0 0.0
      %3843 = vmatprep.subr.mxu0 0.0
      %3844 = vmatpush1.msra.mxu0 0.0
      %3845 = vmatprep.subr.mxu0 0.0
      %3846 = vmatpush1.msra.mxu0 0.0
      %3847 = vmatprep.subr.mxu0 0.0
      %3848 = vmatpush1.msra.mxu0 0.0
      %3849 = vmatprep.subr.mxu0 0.0
      %3850 = vmatpush1.msra.mxu0 0.0
      %3851 = vmatprep.subr.mxu0 0.0
      %3852 = vmatpush1.msra.mxu0 0.0
      %3853 = vmatprep.subr.mxu0 0.0
      %3854 = vmatpush1.msra.mxu0 0.0
      %3855 = vmatprep.subr.mxu0 0.0
      %3856 = vmatpush1.msra.mxu0 0.0
      %3857 = vmatprep.subr.mxu0 0.0
      %3858 = vmatpush1.msra.mxu0 0.0
      %3859 = vmatprep.subr.mxu0 0.0
      %3860 = vmatpush1.msra.mxu0 0.0
      %3861 = vmatprep.subr.mxu0 0.0
      %3862 = vmatpush1.msra.mxu0 0.0
      %3863 = vmatprep.subr.mxu0 0.0
      %3864 = vmatpush1.msra.mxu0 0.0
      %3865 = vmatprep.subr.mxu0 0.0
      %3866 = vmatpush1.msra.mxu0 0.0
      %3867 = vmatprep.subr.mxu0 0.0
      %3868 = vmatpush1.msra.mxu0 0.0
      %3869 = vmatprep.subr.mxu0 0.0
      %3870 = vmatpush1.msra.mxu0 0.0
      %3871 = vmatprep.subr.mxu0 0.0
      %3872 = vmatpush1.msra.mxu0 0.0
      %3873 = vmatprep.subr.mxu0 0.0
      %3874 = vmatpush1.msra.mxu0 0.0
      %3875 = vmatprep.subr.mxu0 0.0
      %3876 = vmatpush1.msra.mxu0 0.0
      %3877 = vmatprep.subr.mxu0 0.0
      %3878 = vmatpush1.msra.mxu0 0.0
      %3879 = vmatprep.subr.mxu0 0.0
      %3880 = vmatpush1.msra.mxu0 0.0
      %3881 = vmatprep.subr.mxu0 0.0
      %3882 = vmatpush1.msra.mxu0 0.0
      %3883 = vmatprep.subr.mxu0 0.0
      %3884 = vmatpush1.msra.mxu0 0.0
      %3885 = vmatprep.subr.mxu0 0.0
      %3886 = vmatpush1.msra.mxu0 0.0
      %3887 = vmatprep.mubr.f32.mxu0 0.0
      %3888 = vmatmul.mubr.f32.gmra.mrb[0].mxu0 %v3750
      %v3889 = vpop.f32.mrb[0].mxu0
      %v3890 = vadd.f32 0.0, %v3889
      %v3891 = vpop.f32.mrb[0].mxu0
      %v3892 = vadd.f32 0.0, %v3891
      %3893 = vdwg.mxu0
      %v3894 = vadd.f32 %v3725, %v3819
      %v3895 = vadd.f32 %v3726, %v3821
      %v3896 = vadd.f32 %v3727, %v3890
      %v3897 = vadd.f32 %v3728, %v3892
      %s3898 = scalar_lea.vmem %s4, 32
      %v3899 = vld [vmem:[%s3898] sm:$0x7]
      %3900 = vrot.lane.b32.xlu0 %v3550, 78
      %v3901 = vpop.permute.xlu0 %3900
      %3902 = vrot.lane.b32.xlu0 %v3551, 78
      %v3903 = vpop.permute.xlu0 %3902
      %3904 = vrot.lane.b32.xlu0 %v3552, 78
      %v3905 = vpop.permute.xlu0 %3904
      %3906 = vrot.lane.b32.xlu0 %v3553, 78
      %v3907 = vpop.permute.xlu0 %3906
      %3908 = vrot.lane.b32.xlu0 %v3554, 78
      %v3909 = vpop.permute.xlu0 %3908
      %v3910 = vsel %vm2280, %v3901, %v3903
      %v3911 = vsel %vm2280, %v3903, %v3905
      %v3912 = vsel %vm2280, %v3905, %v3907
      %v3913 = vsel %vm2280, %v3907, %v3909
      %v3919 = vsel %vm2595, %v3899, 0
      %3921 = vmatprep.subr.mxu0 %v3911
      %3922 = vmatpush1.msra.mxu0 %v3910
      %3923 = vmatprep.subr.mxu0 0.0
      %3924 = vmatpush1.msra.mxu0 0.0
      %3925 = vmatprep.subr.mxu0 0.0
      %3926 = vmatpush1.msra.mxu0 0.0
      %3927 = vmatprep.subr.mxu0 0.0
      %3928 = vmatpush1.msra.mxu0 0.0
      %3929 = vmatprep.subr.mxu0 0.0
      %3930 = vmatpush1.msra.mxu0 0.0
      %3931 = vmatprep.subr.mxu0 0.0
      %3932 = vmatpush1.msra.mxu0 0.0
      %3933 = vmatprep.subr.mxu0 0.0
      %3934 = vmatpush1.msra.mxu0 0.0
      %3935 = vmatprep.subr.mxu0 0.0
      %3936 = vmatpush1.msra.mxu0 0.0
      %3937 = vmatprep.subr.mxu0 0.0
      %3938 = vmatpush1.msra.mxu0 0.0
      %3939 = vmatprep.subr.mxu0 0.0
      %3940 = vmatpush1.msra.mxu0 0.0
      %3941 = vmatprep.subr.mxu0 0.0
      %3942 = vmatpush1.msra.mxu0 0.0
      %3943 = vmatprep.subr.mxu0 0.0
      %3944 = vmatpush1.msra.mxu0 0.0
      %3945 = vmatprep.subr.mxu0 0.0
      %3946 = vmatpush1.msra.mxu0 0.0
      %3947 = vmatprep.subr.mxu0 0.0
      %3948 = vmatpush1.msra.mxu0 0.0
      %3949 = vmatprep.subr.mxu0 0.0
      %3950 = vmatpush1.msra.mxu0 0.0
      %3951 = vmatprep.subr.mxu0 0.0
      %3952 = vmatpush1.msra.mxu0 0.0
      %3953 = vmatprep.subr.mxu0 0.0
      %3954 = vmatpush1.msra.mxu0 0.0
      %3955 = vmatprep.subr.mxu0 0.0
      %3956 = vmatpush1.msra.mxu0 0.0
      %3957 = vmatprep.subr.mxu0 0.0
      %3958 = vmatpush1.msra.mxu0 0.0
      %3959 = vmatprep.subr.mxu0 0.0
      %3960 = vmatpush1.msra.mxu0 0.0
      %3961 = vmatprep.subr.mxu0 0.0
      %3962 = vmatpush1.msra.mxu0 0.0
      %3963 = vmatprep.subr.mxu0 0.0
      %3964 = vmatpush1.msra.mxu0 0.0
      %3965 = vmatprep.subr.mxu0 0.0
      %3966 = vmatpush1.msra.mxu0 0.0
      %3967 = vmatprep.subr.mxu0 0.0
      %3968 = vmatpush1.msra.mxu0 0.0
      %3969 = vmatprep.subr.mxu0 0.0
      %3970 = vmatpush1.msra.mxu0 0.0
      %3971 = vmatprep.subr.mxu0 0.0
      %3972 = vmatpush1.msra.mxu0 0.0
      %3973 = vmatprep.subr.mxu0 0.0
      %3974 = vmatpush1.msra.mxu0 0.0
      %3975 = vmatprep.subr.mxu0 0.0
      %3976 = vmatpush1.msra.mxu0 0.0
      %3977 = vmatprep.subr.mxu0 0.0
      %3978 = vmatpush1.msra.mxu0 0.0
      %3979 = vmatprep.subr.mxu0 0.0
      %3980 = vmatpush1.msra.mxu0 0.0
      %3981 = vmatprep.subr.mxu0 0.0
      %3982 = vmatpush1.msra.mxu0 0.0
      %3983 = vmatprep.subr.mxu0 0.0
      %3984 = vmatpush1.msra.mxu0 0.0
      %3985 = vmatprep.mubr.f32.mxu0 0.0
      %3986 = vmatmul.mubr.f32.gmra.mrb[0].mxu0 %v3919
      %v3987 = vpop.f32.mrb[0].mxu0
      %v3988 = vadd.f32 0.0, %v3987
      %v3989 = vpop.f32.mrb[0].mxu0
      %v3990 = vadd.f32 0.0, %v3989
      %3991 = vdwg.mxu0
      %3992 = vmatprep.subr.mxu0 %v3913
      %3993 = vmatpush1.msra.mxu0 %v3912
      %3994 = vmatprep.subr.mxu0 0.0
      %3995 = vmatpush1.msra.mxu0 0.0
      %3996 = vmatprep.subr.mxu0 0.0
      %3997 = vmatpush1.msra.mxu0 0.0
      %3998 = vmatprep.subr.mxu0 0.0
      %3999 = vmatpush1.msra.mxu0 0.0
      %4000 = vmatprep.subr.mxu0 0.0
      %4001 = vmatpush1.msra.mxu0 0.0
      %4002 = vmatprep.subr.mxu0 0.0
      %4003 = vmatpush1.msra.mxu0 0.0
      %4004 = vmatprep.subr.mxu0 0.0
      %4005 = vmatpush1.msra.mxu0 0.0
      %4006 = vmatprep.subr.mxu0 0.0
      %4007 = vmatpush1.msra.mxu0 0.0
      %4008 = vmatprep.subr.mxu0 0.0
      %4009 = vmatpush1.msra.mxu0 0.0
      %4010 = vmatprep.subr.mxu0 0.0
      %4011 = vmatpush1.msra.mxu0 0.0
      %4012 = vmatprep.subr.mxu0 0.0
      %4013 = vmatpush1.msra.mxu0 0.0
      %4014 = vmatprep.subr.mxu0 0.0
      %4015 = vmatpush1.msra.mxu0 0.0
      %4016 = vmatprep.subr.mxu0 0.0
      %4017 = vmatpush1.msra.mxu0 0.0
      %4018 = vmatprep.subr.mxu0 0.0
      %4019 = vmatpush1.msra.mxu0 0.0
      %4020 = vmatprep.subr.mxu0 0.0
      %4021 = vmatpush1.msra.mxu0 0.0
      %4022 = vmatprep.subr.mxu0 0.0
      %4023 = vmatpush1.msra.mxu0 0.0
      %4024 = vmatprep.subr.mxu0 0.0
      %4025 = vmatpush1.msra.mxu0 0.0
      %4026 = vmatprep.subr.mxu0 0.0
      %4027 = vmatpush1.msra.mxu0 0.0
      %4028 = vmatprep.subr.mxu0 0.0
      %4029 = vmatpush1.msra.mxu0 0.0
      %4030 = vmatprep.subr.mxu0 0.0
      %4031 = vmatpush1.msra.mxu0 0.0
      %4032 = vmatprep.subr.mxu0 0.0
      %4033 = vmatpush1.msra.mxu0 0.0
      %4034 = vmatprep.subr.mxu0 0.0
      %4035 = vmatpush1.msra.mxu0 0.0
      %4036 = vmatprep.subr.mxu0 0.0
      %4037 = vmatpush1.msra.mxu0 0.0
      %4038 = vmatprep.subr.mxu0 0.0
      %4039 = vmatpush1.msra.mxu0 0.0
      %4040 = vmatprep.subr.mxu0 0.0
      %4041 = vmatpush1.msra.mxu0 0.0
      %4042 = vmatprep.subr.mxu0 0.0
      %4043 = vmatpush1.msra.mxu0 0.0
      %4044 = vmatprep.subr.mxu0 0.0
      %4045 = vmatpush1.msra.mxu0 0.0
      %4046 = vmatprep.subr.mxu0 0.0
      %4047 = vmatpush1.msra.mxu0 0.0
      %4048 = vmatprep.subr.mxu0 0.0
      %4049 = vmatpush1.msra.mxu0 0.0
      %4050 = vmatprep.subr.mxu0 0.0
      %4051 = vmatpush1.msra.mxu0 0.0
      %4052 = vmatprep.subr.mxu0 0.0
      %4053 = vmatpush1.msra.mxu0 0.0
      %4054 = vmatprep.subr.mxu0 0.0
      %4055 = vmatpush1.msra.mxu0 0.0
      %4056 = vmatprep.mubr.f32.mxu0 0.0
      %4057 = vmatmul.mubr.f32.gmra.mrb[0].mxu0 %v3919
      %v4058 = vpop.f32.mrb[0].mxu0
      %v4059 = vadd.f32 0.0, %v4058
      %v4060 = vpop.f32.mrb[0].mxu0
      %v4061 = vadd.f32 0.0, %v4060
      %4062 = vdwg.mxu0
      %v4063 = vadd.f32 %v3894, %v3988
      %v4064 = vadd.f32 %v3895, %v3990
      %v4065 = vadd.f32 %v3896, %v4059
      %v4066 = vadd.f32 %v3897, %v4061
      %v4067 = vld [vmem:[%s5] sm:$0x7]
      %4069 = vset.pattern.permute.xlu0 0
      %4070 = vperm.xlu0 %4069, %v4067
      %v4071 = vpop.permute.xlu0 %4070
      %v4073 = vadd.f32 %v4063, %v4071
      %v4074 = vadd.f32 %v4064, %v4071
      %v4075 = vadd.f32 %v4065, %v4071
      %v4076 = vadd.f32 %v4066, %v4071
      %v4077 = vmax.f32 %v4073, 0.0
      %v4078 = vmax.f32 %v4074, 0.0
      %v4079 = vmax.f32 %v4075, 0.0
      %v4080 = vmax.f32 %v4076, 0.0
      %v4085 = vcombine.low %v4077, %v4078
      %v4086 = vcombine.low %v4079, %v4080
      %4089 = vst [vmem:[%s251] sm:$0x77] %v4085
      %vm4090 = vcmask 1042432
      %vm4091 = vcmask 784388
      %vm4092 = vmor %vm4091, %vm4090
      %4093 = vst.msk [vmem:[%s251 + $0x8] sm:$0x77] %vm4092, %v4086
      %p4094 = scmp.lt.s32.totalorder %s17, 1
      %s4095 = scalar_select %p4094, %s17, 1
      %s4096 = smul.addr %s4095, 4
      %s4097 = smul.addr %s4096, 4
      %s4098 = scalar_lea.vmem %s6, %s4097
      // Predicated region
      $region45: #{decoder_forward.1} parent=43 // pred_check
        %p4099 = pneg %p166
      $region46: #{decoder_forward.1} parent=43 // pred_check_branch
        %4101 = sbr.rel (%p4099) target = $region48
      $region47: #{decoder_forward.1} parent=43 // pred_region
        _
      $region48: #{decoder_forward.1} parent=43 // pred_fallthru
        _
    $region44: #{decoder_forward.1} parent=5 // pred_fallthru
      _
    %p4102 = scmp.le.s32.totalorder 2, %s12
    // Predicated region
    $region49: #{decoder_forward.1} parent=5 // pred_check
      %p4103 = pneg %p4102
    $region50: #{decoder_forward.1} parent=5 // pred_check_branch
      %4105 = sbr.rel (%p4103) target = $region52
    $region51: #{decoder_forward.1} parent=5 // pred_region
      %s4106 = ssub.s32 %s12, 2
      // Predicated region
      $region53: #{decoder_forward.1} parent=51 // pred_check
        %p4107 = pneg %p172
      $region54: #{decoder_forward.1} parent=51 // pred_check_branch
        %4109 = sbr.rel (%p4107) target = $region56
      $region55: #{decoder_forward.1} parent=51 // pred_region
        %p4110 = scmp.lt.s32.totalorder %s18, 1
        %s4111 = scalar_select %p4110, %s18, 1
        %s4112 = smul.addr %s4111, 4
        %s4113 = smul.addr %s4112, 4
        %s4114 = scalar_lea.vmem %s6, %s4113
      $region56: #{decoder_forward.1} parent=51 // pred_fallthru
        _
    $region52: #{decoder_forward.1} parent=5 // pred_fallthru
      _
  $region6: #{decoder_forward.1} parent=0 // loop_footer
    %s16 = sadd.s32 1, %s12
  $region7: #{decoder_forward.1} parent=0 // loop_footer_branch
    %11 = sbr.rel target = $region3
  $region8: #{decoder_forward.1} parent=0 // loop_exit
    _

</llo_original>
